<compile_context>
chip_gen: v6e
topology: v6e:2x2x1
jax: 0.10.0
libtpu: 0.0.40
codegen_flags: <defaults>
</compile_context>

<pallas_src>
import functools

import jax
import jax.numpy as jnp
from jax import lax
from jax.experimental import pallas as pl
from jax.experimental.pallas import tpu as pltpu


# ------------------------------ Fused kernel --------------------------------

def _evit_two_stage_kernel(
        x_ref, agg_ref,
        wq1_ref, wkv1_ref, wp1_ref, bp1_ref, wsr1_ref, bsr1_ref, g1_ref, b1_ref,
        wq2_ref, wkv2_ref, wp2_ref, bp2_ref, wsr2_ref, bsr2_ref, g2_ref, b2_ref,
        o_ref, stage_ref,
        *, bb, n_tok, n_pool, c_real, num_heads, scale, mxu_dtype):
    # One grid step == `bb` batch elements folded into the M dimension.
    Cp = x_ref.shape[-1]                       # lane-padded channel count (128)
    Dh = c_real // num_heads
    inv_sqrt2 = 0.7071067811865476
    inv_c = 1.0 / c_real

    x = x_ref[...]                             # (bb*N, Cp) f32, pad lanes = 0
    agg = agg_ref[...]                         # (bb*Np, bb*N) 0/1 block-diag pooling

    def sr_ln_gelu(tok, wsr, bsr, g, b):
        # Depthwise strided Conv2d (kernel=stride=sr, groups=C) ==
        #   per-row spatially-tiled channel scale  +  0/1 pooling matmul.
        pooled = jnp.dot(agg, (tok * wsr).astype(mxu_dtype),
                         preferred_element_type=jnp.float32) + bsr
        # LayerNorm over the c_real live channels (pad lanes of `pooled` are 0,
        # so sum / sum-of-squares over all Cp lanes divided by c_real is exact).
        mean = jnp.sum(pooled, axis=-1, keepdims=True) * inv_c
        var = jnp.sum(pooled * pooled, axis=-1, keepdims=True) * inv_c - mean * mean
        y = (pooled - mean) * lax.rsqrt(var + 1e-5) * g + b   # gamma/beta pad = 0
        # exact GELU (erf form, nn.GELU default); pad lanes stay 0.
        return 0.5 * y * (1.0 + lax.erf(y * inv_sqrt2))

    def attention(x_q, x_kv, wq, wkv, base):
        # q / fused k|v projections (qkv_bias=False) + per-head attention.
        # Per-head outputs are staged into stage_ref at lane offset h*Dh so the
        # caller can run ONE K=Cp output-projection matmul per stage.
        q = jnp.dot(x_q.astype(mxu_dtype), wq,
                    preferred_element_type=jnp.float32) * scale
        kv = jnp.dot(x_kv.astype(mxu_dtype), wkv,
                     preferred_element_type=jnp.float32)       # (bb*Np, 2*Cp)
        stage_ref[...] = base
        for bsub in range(bb):                 # static unroll over folded batches
            qr = slice(bsub * n_tok, (bsub + 1) * n_tok)
            kr = slice(bsub * n_pool, (bsub + 1) * n_pool)
            for h in range(num_heads):         # static unroll; all math is 2-D
                lo = h * Dh
                qh = q[qr, lo:lo + Dh]                        # (N, Dh), pre-scaled
                kh = kv[kr, lo:lo + Dh]                       # (Np, Dh)
                vh = kv[kr, Cp + lo:Cp + lo + Dh]             # (Np, Dh)
                s = lax.dot_general(qh.astype(mxu_dtype), kh.astype(mxu_dtype),
                                    (((1,), (1,)), ((), ())),
                                    preferred_element_type=jnp.float32)  # (N, Np)
                s = s - jnp.max(s, axis=-1, keepdims=True)
                p = jnp.exp(s)
                p = p / jnp.sum(p, axis=-1, keepdims=True)    # exact softmax divide
                oh = jnp.dot(p.astype(mxu_dtype), vh.astype(mxu_dtype),
                             preferred_element_type=jnp.float32)         # (N, Dh)
                stage_ref[qr, lo:lo + Dh] = stage_ref[qr, lo:lo + Dh] + oh
        return stage_ref[...]

    # ---- stage 1 ----
    x1_sr = sr_ln_gelu(x, wsr1_ref[...], bsr1_ref[...], g1_ref[...], b1_ref[...])
    a1 = attention(x, x1_sr, wq1_ref[...], wkv1_ref[...], jnp.zeros_like(x))
    x1 = jnp.dot(a1.astype(mxu_dtype), wp1_ref[...],
                 preferred_element_type=jnp.float32) + bp1_ref[...]

    # ---- stage 2 ----  scratch initialised with x1 so the residual and the
    # output projection fuse into a single (x1 + attn2) @ wp2 matmul.
    x2_sr = sr_ln_gelu(x1, wsr2_ref[...], bsr2_ref[...], g2_ref[...], b2_ref[...])
    a2 = attention(x1, x2_sr, wq2_ref[...], wkv2_ref[...], x1)
    o_ref[...] = jnp.dot(a2.astype(mxu_dtype), wp2_ref[...],
                         preferred_element_type=jnp.float32) + bp2_ref[...]


# ------------------------------ Wrapper --------------------------------------

def evit_attention_forward(x, p, H, W, *, num_heads, sr_ratio,
                           batch_block=1, mxu_dtype=jnp.bfloat16):
    B, N, C = x.shape
    assert N == H * W and C % num_heads == 0 and B % batch_block == 0
    bb = batch_block
    Dh = C // num_heads
    scale = Dh ** -0.5
    sr = sr_ratio
    Hs, Ws = H // sr, W // sr
    Np = Hs * Ws

    LANE = 128
    Cp = ((C + LANE - 1) // LANE) * LANE       # pad channels to the lane width
    padc = Cp - C

    pad_mat = lambda w: jnp.pad(w, ((0, padc), (0, padc)))
    pad_row = lambda v: jnp.pad(v, ((0, 0), (0, padc)))

    # --- one-time weight-side preprocessing (tiny, no activation traffic) ---
    rows = jnp.arange(N)
    h_idx, w_idx = rows // W, rows % W
    tap = (h_idx % sr) * sr + (w_idx % sr)     # conv-tap id per source row
    win = (h_idx // sr) * Ws + (w_idx // sr)   # destination window id
    # block-diagonal 0/1 pooling matrix over the bb folded batches
    win_fold = jnp.tile(win, bb) + jnp.repeat(jnp.arange(bb) * Np, N)
    agg = (win_fold[None, :] == jnp.arange(bb * Np)[:, None]).astype(mxu_dtype)

    def tiled_dwconv(w):                       # (sr*sr, C) -> (bb*N, Cp)
        return jnp.tile(jnp.pad(w, ((0, 0), (0, padc)))[tap], (bb, 1))

    wq1 = pad_mat(p["wq1"]).astype(mxu_dtype)
    wq2 = pad_mat(p["wq2"]).astype(mxu_dtype)
    wkv1 = jnp.concatenate([pad_mat(p["wk1"]), pad_mat(p["wv1"])], 1).astype(mxu_dtype)
    wkv2 = jnp.concatenate([pad_mat(p["wk2"]), pad_mat(p["wv2"])], 1).astype(mxu_dtype)
    wp1 = pad_mat(p["wp1"]).astype(mxu_dtype)
    wp2 = pad_mat(p["wp2"]).astype(mxu_dtype)
    bp1, bp2 = pad_row(p["bp1"]), pad_row(p["bp2"])
    wsr1, wsr2 = tiled_dwconv(p["sr1_w"]), tiled_dwconv(p["sr2_w"])
    bsr1, bsr2 = pad_row(p["sr1_b"]), pad_row(p["sr2_b"])
    g1, b1 = pad_row(p["ln1_g"]), pad_row(p["ln1_b"])   # gamma pad = 0 keeps pad lanes 0
    g2, b2 = pad_row(p["ln2_g"]), pad_row(p["ln2_b"])

    # fold batch into rows; activations stay f32 (cast to bf16 only at MXU sites)
    x_pad = jnp.pad(x, ((0, 0), (0, 0), (0, padc))).reshape(B * N, Cp)

    kern = functools.partial(
        _evit_two_stage_kernel, bb=bb, n_tok=N, n_pool=Np, c_real=C,
        num_heads=num_heads, scale=scale, mxu_dtype=mxu_dtype)

    def res(arr):          # weight-resident spec (same block for every grid step)
        nd = arr.ndim
        return pl.BlockSpec(arr.shape, lambda i, _n=nd: (0,) * _n)

    operands = (x_pad, agg,
                wq1, wkv1, wp1, bp1, wsr1, bsr1, g1, b1,
                wq2, wkv2, wp2, bp2, wsr2, bsr2, g2, b2)

    # advisory cost estimate so XLA can schedule surrounding HLO around us
    flops_stage = (2 * B * Np * N * C          # dw-conv pooling
                   + 2 * B * N * C * C         # q projection
                   + 4 * B * Np * C * C        # fused k|v projection
                   + 4 * B * N * Np * C        # scores + PV
                   + 2 * B * N * C * C)        # output projection
    cost = pl.CostEstimate(
        flops=2 * flops_stage,
        transcendentals=2 * (B * N * Np + B * Np * C),
        bytes_accessed=int(sum(a.size * a.dtype.itemsize for a in operands)
                           + B * N * Cp * 4))

    out = pl.pallas_call(
        kern,
        out_shape=jax.ShapeDtypeStruct((B * N, Cp), jnp.float32),
        grid=(B // bb,),
        in_specs=[pl.BlockSpec((bb * N, Cp), lambda i: (i, 0))]
                 + [res(a) for a in operands[1:]],
        out_specs=pl.BlockSpec((bb * N, Cp), lambda i: (i, 0)),   # lane-dense store
        scratch_shapes=[pltpu.VMEM((bb * N, Cp), jnp.float32)],   # staged head outputs
        compiler_params=pltpu.CompilerParams(
            dimension_semantics=("parallel",),   # batches shard across v7x's 2 TCs
            vmem_limit_bytes=32 * 1024 * 1024,
        ),
        cost_estimate=cost,
    )(*operands)

    return out.reshape(B, N, Cp)[:, :, :C]


# ------------------------------ Pure-JAX reference --------------------------

def evit_attention_reference(x, p, H, W, *, num_heads, sr_ratio):
    B, N, C = x.shape
    Dh = C // num_heads
    scale = Dh ** -0.5

    def sr_block(t, cw, cb, g, bt):
        sr = sr_ratio
        Hs, Ws = H // sr, W // sr
        img = t.reshape(B, H, W, C)
        win = img.reshape(B, Hs, sr, Ws, sr, C).transpose(0, 1, 3, 2, 4, 5)
        win = win.reshape(B, Hs * Ws, sr * sr, C)
        y = jnp.einsum("bnkc,kc->bnc", win, cw) + cb
        mean = y.mean(-1, keepdims=True)
        var = ((y - mean) ** 2).mean(-1, keepdims=True)
        y = (y - mean) * lax.rsqrt(var + 1e-5) * g + bt
        return jax.nn.gelu(y, approximate=False)

    def mha(q_in, kv_in, wq, wk, wv):
        q = (q_in @ wq).reshape(B, -1, num_heads, Dh).transpose(0, 2, 1, 3)
        k = (kv_in @ wk).reshape(B, -1, num_heads, Dh).transpose(0, 2, 1, 3)
        v = (kv_in @ wv).reshape(B, -1, num_heads, Dh).transpose(0, 2, 1, 3)
        a = jax.nn.softmax(q @ jnp.swapaxes(k, -1, -2) * scale, axis=-1)
        return (a @ v).transpose(0, 2, 1, 3).reshape(B, N, C)

    x1_sr = sr_block(x, p["sr1_w"], p["sr1_b"], p["ln1_g"], p["ln1_b"])
    x1 = mha(x, x1_sr, p["wq1"], p["wk1"], p["wv1"]) @ p["wp1"] + p["bp1"]
    x2_sr = sr_block(x1, p["sr2_w"], p["sr2_b"], p["ln2_g"], p["ln2_b"])
    x2 = mha(x1, x2_sr, p["wq2"], p["wk2"], p["wv2"])
    x2 = x1 + x2
    return x2 @ p["wp2"] + p["bp2"]


# ------------------------------ Parameter init -------------------------------

def init_params(key, C, sr):
    ks = jax.random.split(key, 14)

    def w(k, shape, s):
        return jax.random.normal(k, shape, jnp.float32) * s

    return {
        "wq1": w(ks[0], (C, C), 0.08), "wk1": w(ks[1], (C, C), 0.08),
        "wv1": w(ks[2], (C, C), 0.08), "wq2": w(ks[3], (C, C), 0.08),
        "wk2": w(ks[4], (C, C), 0.08), "wv2": w(ks[5], (C, C), 0.08),
        "wp1": w(ks[6], (C, C), 0.08), "bp1": w(ks[7], (1, C), 0.05),
        "wp2": w(ks[8], (C, C), 0.08), "bp2": w(ks[9], (1, C), 0.05),
        # depthwise conv weights stored as (sr*sr, C) == torch (C,1,sr,sr) flattened
        "sr1_w": w(ks[10], (sr * sr, C), 0.25), "sr1_b": w(ks[11], (1, C), 0.05),
        "sr2_w": w(ks[12], (sr * sr, C), 0.25), "sr2_b": w(ks[13], (1, C), 0.05),
        "ln1_g": jnp.ones((1, C), jnp.float32), "ln1_b": jnp.zeros((1, C), jnp.float32),
        "ln2_g": jnp.ones((1, C), jnp.float32), "ln2_b": jnp.zeros((1, C), jnp.float32),
    }


# ----------------------------------- Main ------------------------------------

if __name__ == "__main__":
    B, H, W, C = 2, 8, 8, 32
    num_heads, sr_ratio = 4, 2
    N = H * W

    key = jax.random.PRNGKey(0)
    kx, kp = jax.random.split(key)
    x = jax.random.normal(kx, (B, N, C), jnp.float32)
    params = init_params(kp, C, sr_ratio)

    ref = evit_attention_reference(x, params, H, W,
                                   num_heads=num_heads, sr_ratio=sr_ratio)

    # v7x-style layout: one batch per "parallel" grid step, exact f32 MXU
    # operands -> tight tolerance (structural correctness check).
    out_f32 = evit_attention_forward(x, params, H, W, num_heads=num_heads,
                                     sr_ratio=sr_ratio, batch_block=1,
                                     mxu_dtype=jnp.float32)
    out_f32 = jax.block_until_ready(out_f32)
    assert out_f32.shape == (B, N, C)
    assert jnp.allclose(out_f32, ref, atol=2e-3, rtol=2e-3), "f32 mismatch vs reference"

    # v5e/v6e-style layout: batch folded into M (single grid step, M=128 rows),
    # bf16 MXU operands with f32 accumulation -> looser tolerance (~1% rel).
    out_bf16 = evit_attention_forward(x, params, H, W, num_heads=num_heads,
                                      sr_ratio=sr_ratio, batch_block=B,
                                      mxu_dtype=jnp.bfloat16)
    out_bf16 = jax.block_until_ready(out_bf16)
    assert out_bf16.shape == (B, N, C)
    assert jnp.allclose(out_bf16, ref, atol=3e-2, rtol=3e-2), "bf16 mismatch vs reference"

    print("KERNEL_OK")
</pallas_src>

<mosaic_0001>
module attributes {stable_mosaic.version = 11 : i64} {
  func.func @_evit_two_stage_kernel(%arg0: i32, %arg1: memref<64x128xf32, #tpu.memory_space<vmem>>, %arg2: memref<16x64xf32, #tpu.memory_space<vmem>>, %arg3: memref<128x128xf32, #tpu.memory_space<vmem>>, %arg4: memref<128x256xf32, #tpu.memory_space<vmem>>, %arg5: memref<128x128xf32, #tpu.memory_space<vmem>>, %arg6: memref<1x128xf32, #tpu.memory_space<vmem>>, %arg7: memref<64x128xf32, #tpu.memory_space<vmem>>, %arg8: memref<1x128xf32, #tpu.memory_space<vmem>>, %arg9: memref<1x128xf32, #tpu.memory_space<vmem>>, %arg10: memref<1x128xf32, #tpu.memory_space<vmem>>, %arg11: memref<128x128xf32, #tpu.memory_space<vmem>>, %arg12: memref<128x256xf32, #tpu.memory_space<vmem>>, %arg13: memref<128x128xf32, #tpu.memory_space<vmem>>, %arg14: memref<1x128xf32, #tpu.memory_space<vmem>>, %arg15: memref<64x128xf32, #tpu.memory_space<vmem>>, %arg16: memref<1x128xf32, #tpu.memory_space<vmem>>, %arg17: memref<1x128xf32, #tpu.memory_space<vmem>>, %arg18: memref<1x128xf32, #tpu.memory_space<vmem>>, %arg19: memref<64x128xf32, #tpu.memory_space<vmem>>, %arg20: memref<64x128xf32, #tpu.memory_space<vmem>>) attributes {dimension_semantics = [#tpu.dimension_semantics<parallel>], iteration_bounds = array<i64: 2>, scalar_prefetch = 0 : i64, scratch_operands = 1 : i64, tpu.core_type = #tpu.core_type<tc>, window_params = [{transform_indices = @transform_0, window_bounds = array<i64: 64, 128>}, {pipeline_mode = #tpu.pipeline_mode<synchronous>, transform_indices = @transform_1, window_bounds = array<i64: 16, 64>}, {pipeline_mode = #tpu.pipeline_mode<synchronous>, transform_indices = @transform_2, window_bounds = array<i64: 128, 128>}, {pipeline_mode = #tpu.pipeline_mode<synchronous>, transform_indices = @transform_3, window_bounds = array<i64: 128, 256>}, {pipeline_mode = #tpu.pipeline_mode<synchronous>, transform_indices = @transform_4, window_bounds = array<i64: 128, 128>}, {pipeline_mode = #tpu.pipeline_mode<synchronous>, transform_indices = @transform_5, window_bounds = array<i64: 1, 128>}, {pipeline_mode = #tpu.pipeline_mode<synchronous>, transform_indices = @transform_6, window_bounds = array<i64: 64, 128>}, {pipeline_mode = #tpu.pipeline_mode<synchronous>, transform_indices = @transform_7, window_bounds = array<i64: 1, 128>}, {pipeline_mode = #tpu.pipeline_mode<synchronous>, transform_indices = @transform_8, window_bounds = array<i64: 1, 128>}, {pipeline_mode = #tpu.pipeline_mode<synchronous>, transform_indices = @transform_9, window_bounds = array<i64: 1, 128>}, {pipeline_mode = #tpu.pipeline_mode<synchronous>, transform_indices = @transform_10, window_bounds = array<i64: 128, 128>}, {pipeline_mode = #tpu.pipeline_mode<synchronous>, transform_indices = @transform_11, window_bounds = array<i64: 128, 256>}, {pipeline_mode = #tpu.pipeline_mode<synchronous>, transform_indices = @transform_12, window_bounds = array<i64: 128, 128>}, {pipeline_mode = #tpu.pipeline_mode<synchronous>, transform_indices = @transform_13, window_bounds = array<i64: 1, 128>}, {pipeline_mode = #tpu.pipeline_mode<synchronous>, transform_indices = @transform_14, window_bounds = array<i64: 64, 128>}, {pipeline_mode = #tpu.pipeline_mode<synchronous>, transform_indices = @transform_15, window_bounds = array<i64: 1, 128>}, {pipeline_mode = #tpu.pipeline_mode<synchronous>, transform_indices = @transform_16, window_bounds = array<i64: 1, 128>}, {pipeline_mode = #tpu.pipeline_mode<synchronous>, transform_indices = @transform_17, window_bounds = array<i64: 1, 128>}, {transform_indices = @transform_18, window_bounds = array<i64: 64, 128>}]} {
    %c0 = arith.constant 0 : index
    %c0_0 = arith.constant 0 : index
    %0 = vector.load %arg1[%c0, %c0_0] : memref<64x128xf32, #tpu.memory_space<vmem>>, vector<64x128xf32>
    %c0_1 = arith.constant 0 : index
    %c0_2 = arith.constant 0 : index
    %1 = vector.load %arg2[%c0_1, %c0_2] : memref<16x64xf32, #tpu.memory_space<vmem>>, vector<16x64xf32>
    %c0_3 = arith.constant 0 : index
    %c0_4 = arith.constant 0 : index
    %2 = vector.load %arg7[%c0_3, %c0_4] : memref<64x128xf32, #tpu.memory_space<vmem>>, vector<64x128xf32>
    %c0_5 = arith.constant 0 : index
    %c0_6 = arith.constant 0 : index
    %3 = vector.load %arg8[%c0_5, %c0_6] : memref<1x128xf32, #tpu.memory_space<vmem>>, vector<1x128xf32>
    %c0_7 = arith.constant 0 : index
    %c0_8 = arith.constant 0 : index
    %4 = vector.load %arg9[%c0_7, %c0_8] : memref<1x128xf32, #tpu.memory_space<vmem>>, vector<1x128xf32>
    %c0_9 = arith.constant 0 : index
    %c0_10 = arith.constant 0 : index
    %5 = vector.load %arg10[%c0_9, %c0_10] : memref<1x128xf32, #tpu.memory_space<vmem>>, vector<1x128xf32>
    %6 = arith.mulf %0, %2 : vector<64x128xf32>
    %cst = arith.constant dense<0.000000e+00> : vector<16x128xf32>
    %7 = tpu.matmul %1, %6, %cst {dimension_numbers = #tpu.dot_dimension_numbers<[1], [0], [0], [1], [0, 0, 1, 1], [], []>} : vector<16x64xf32>, vector<64x128xf32>, vector<16x128xf32> -> vector<16x128xf32>
    %8 = vector.broadcast %3 : vector<1x128xf32> to vector<16x128xf32>
    %9 = arith.addf %7, %8 : vector<16x128xf32>
    %cst_11 = arith.constant dense<0.000000e+00> : vector<16xf32>
    %10 = vector.multi_reduction <add>, %9, %cst_11 [1] : vector<16x128xf32> to vector<16xf32>
    %11 = vector.shape_cast %10 : vector<16xf32> to vector<16x1xf32>
    %cst_12 = arith.constant 3.125000e-02 : f32
    %12 = vector.broadcast %cst_12 : f32 to vector<16x1xf32>
    %13 = arith.mulf %11, %12 : vector<16x1xf32>
    %14 = arith.mulf %9, %9 : vector<16x128xf32>
    %cst_13 = arith.constant dense<0.000000e+00> : vector<16xf32>
    %15 = vector.multi_reduction <add>, %14, %cst_13 [1] : vector<16x128xf32> to vector<16xf32>
    %16 = vector.shape_cast %15 : vector<16xf32> to vector<16x1xf32>
    %cst_14 = arith.constant 3.125000e-02 : f32
    %17 = vector.broadcast %cst_14 : f32 to vector<16x1xf32>
    %18 = arith.mulf %16, %17 : vector<16x1xf32>
    %19 = arith.mulf %13, %13 : vector<16x1xf32>
    %20 = arith.subf %18, %19 : vector<16x1xf32>
    %21 = vector.broadcast %13 : vector<16x1xf32> to vector<16x128xf32>
    %22 = arith.subf %9, %21 : vector<16x128xf32>
    %cst_15 = arith.constant 9.99999974E-6 : f32
    %23 = vector.broadcast %cst_15 : f32 to vector<16x1xf32>
    %24 = arith.addf %20, %23 : vector<16x1xf32>
    %25 = math.rsqrt %24 : vector<16x1xf32>
    %26 = vector.broadcast %25 : vector<16x1xf32> to vector<16x128xf32>
    %27 = arith.mulf %22, %26 : vector<16x128xf32>
    %28 = vector.broadcast %4 : vector<1x128xf32> to vector<16x128xf32>
    %29 = arith.mulf %27, %28 : vector<16x128xf32>
    %30 = vector.broadcast %5 : vector<1x128xf32> to vector<16x128xf32>
    %31 = arith.addf %29, %30 : vector<16x128xf32>
    %cst_16 = arith.constant 5.000000e-01 : f32
    %32 = vector.broadcast %cst_16 : f32 to vector<16x128xf32>
    %33 = arith.mulf %32, %31 : vector<16x128xf32>
    %cst_17 = arith.constant 0.707106769 : f32
    %34 = vector.broadcast %cst_17 : f32 to vector<16x128xf32>
    %35 = arith.mulf %31, %34 : vector<16x128xf32>
    %36 = math.erf %35 : vector<16x128xf32>
    %cst_18 = arith.constant 1.000000e+00 : f32
    %37 = vector.broadcast %cst_18 : f32 to vector<16x128xf32>
    %38 = arith.addf %37, %36 : vector<16x128xf32>
    %39 = arith.mulf %33, %38 : vector<16x128xf32>
    %c0_19 = arith.constant 0 : index
    %c0_20 = arith.constant 0 : index
    %40 = vector.load %arg3[%c0_19, %c0_20] : memref<128x128xf32, #tpu.memory_space<vmem>>, vector<128x128xf32>
    %c0_21 = arith.constant 0 : index
    %c0_22 = arith.constant 0 : index
    %41 = vector.load %arg4[%c0_21, %c0_22] : memref<128x256xf32, #tpu.memory_space<vmem>>, vector<128x256xf32>
    %cst_23 = arith.constant 0.000000e+00 : f32
    %42 = vector.broadcast %cst_23 : f32 to vector<64x128xf32>
    %cst_24 = arith.constant dense<0.000000e+00> : vector<64x128xf32>
    %43 = tpu.matmul %0, %40, %cst_24 {dimension_numbers = #tpu.dot_dimension_numbers<[1], [0], [0], [1], [0, 0, 1, 1], [], []>} : vector<64x128xf32>, vector<128x128xf32>, vector<64x128xf32> -> vector<64x128xf32>
    %cst_25 = arith.constant 0.353553385 : f32
    %44 = vector.broadcast %cst_25 : f32 to vector<64x128xf32>
    %45 = arith.mulf %43, %44 : vector<64x128xf32>
    %cst_26 = arith.constant dense<0.000000e+00> : vector<16x256xf32>
    %46 = tpu.matmul %39, %41, %cst_26 {dimension_numbers = #tpu.dot_dimension_numbers<[1], [0], [0], [1], [0, 0, 1, 1], [], []>} : vector<16x128xf32>, vector<128x256xf32>, vector<16x256xf32> -> vector<16x256xf32>
    %c0_27 = arith.constant 0 : index
    %c0_28 = arith.constant 0 : index
    %47 = vector.load %arg20[%c0_27, %c0_28] : memref<64x128xf32, #tpu.memory_space<vmem>>, vector<64x128xf32>
    tpu.vector_store %arg20[%c0_27, %c0_28], %42 {strides = array<i32>} : memref<64x128xf32, #tpu.memory_space<vmem>>, vector<64x128xf32>,
    %48 = vector.extract_strided_slice %45 {offsets = [0, 0], sizes = [64, 8], strides = [1, 1]} : vector<64x128xf32> to vector<64x8xf32>
    %49 = vector.extract_strided_slice %46 {offsets = [0, 0], sizes = [16, 8], strides = [1, 1]} : vector<16x256xf32> to vector<16x8xf32>
    %50 = vector.extract_strided_slice %46 {offsets = [0, 128], sizes = [16, 8], strides = [1, 1]} : vector<16x256xf32> to vector<16x8xf32>
    %cst_29 = arith.constant dense<0.000000e+00> : vector<64x16xf32>
    %51 = tpu.matmul %48, %49, %cst_29 {dimension_numbers = #tpu.dot_dimension_numbers<[1], [1], [0], [0], [0, 0, 1, 0], [], []>} : vector<64x8xf32>, vector<16x8xf32>, vector<64x16xf32> -> vector<64x16xf32>
    %cst_30 = arith.constant dense<0xFF800000> : vector<64xf32>
    %52 = vector.multi_reduction <maximumf>, %51, %cst_30 [1] : vector<64x16xf32> to vector<64xf32>
    %53 = vector.shape_cast %52 : vector<64xf32> to vector<64x1xf32>
    %54 = vector.broadcast %53 : vector<64x1xf32> to vector<64x16xf32>
    %55 = arith.subf %51, %54 : vector<64x16xf32>
    %56 = math.exp %55 : vector<64x16xf32>
    %cst_31 = arith.constant dense<0.000000e+00> : vector<64xf32>
    %57 = vector.multi_reduction <add>, %56, %cst_31 [1] : vector<64x16xf32> to vector<64xf32>
    %58 = vector.shape_cast %57 : vector<64xf32> to vector<64x1xf32>
    %59 = vector.broadcast %58 : vector<64x1xf32> to vector<64x16xf32>
    %60 = arith.divf %56, %59 : vector<64x16xf32>
    %cst_32 = arith.constant dense<0.000000e+00> : vector<64x8xf32>
    %61 = tpu.matmul %60, %50, %cst_32 {dimension_numbers = #tpu.dot_dimension_numbers<[1], [0], [0], [1], [0, 0, 1, 1], [], []>} : vector<64x16xf32>, vector<16x8xf32>, vector<64x8xf32> -> vector<64x8xf32>
    %c0_33 = arith.constant 0 : index
    %c0_34 = arith.constant 0 : index
    %62 = vector.load %arg20[%c0_33, %c0_34] : memref<64x128xf32, #tpu.memory_space<vmem>>, vector<64x8xf32>
    %63 = arith.addf %62, %61 : vector<64x8xf32>
    %c0_35 = arith.constant 0 : index
    %c0_36 = arith.constant 0 : index
    %64 = vector.load %arg20[%c0_35, %c0_36] : memref<64x128xf32, #tpu.memory_space<vmem>>, vector<64x8xf32>
    tpu.vector_store %arg20[%c0_35, %c0_36], %63 {strides = array<i32>} : memref<64x128xf32, #tpu.memory_space<vmem>>, vector<64x8xf32>,
    %65 = vector.extract_strided_slice %45 {offsets = [0, 8], sizes = [64, 8], strides = [1, 1]} : vector<64x128xf32> to vector<64x8xf32>
    %66 = vector.extract_strided_slice %46 {offsets = [0, 8], sizes = [16, 8], strides = [1, 1]} : vector<16x256xf32> to vector<16x8xf32>
    %67 = vector.extract_strided_slice %46 {offsets = [0, 136], sizes = [16, 8], strides = [1, 1]} : vector<16x256xf32> to vector<16x8xf32>
    %cst_37 = arith.constant dense<0.000000e+00> : vector<64x16xf32>
    %68 = tpu.matmul %65, %66, %cst_37 {dimension_numbers = #tpu.dot_dimension_numbers<[1], [1], [0], [0], [0, 0, 1, 0], [], []>} : vector<64x8xf32>, vector<16x8xf32>, vector<64x16xf32> -> vector<64x16xf32>
    %cst_38 = arith.constant dense<0xFF800000> : vector<64xf32>
    %69 = vector.multi_reduction <maximumf>, %68, %cst_38 [1] : vector<64x16xf32> to vector<64xf32>
    %70 = vector.shape_cast %69 : vector<64xf32> to vector<64x1xf32>
    %71 = vector.broadcast %70 : vector<64x1xf32> to vector<64x16xf32>
    %72 = arith.subf %68, %71 : vector<64x16xf32>
    %73 = math.exp %72 : vector<64x16xf32>
    %cst_39 = arith.constant dense<0.000000e+00> : vector<64xf32>
    %74 = vector.multi_reduction <add>, %73, %cst_39 [1] : vector<64x16xf32> to vector<64xf32>
    %75 = vector.shape_cast %74 : vector<64xf32> to vector<64x1xf32>
    %76 = vector.broadcast %75 : vector<64x1xf32> to vector<64x16xf32>
    %77 = arith.divf %73, %76 : vector<64x16xf32>
    %cst_40 = arith.constant dense<0.000000e+00> : vector<64x8xf32>
    %78 = tpu.matmul %77, %67, %cst_40 {dimension_numbers = #tpu.dot_dimension_numbers<[1], [0], [0], [1], [0, 0, 1, 1], [], []>} : vector<64x16xf32>, vector<16x8xf32>, vector<64x8xf32> -> vector<64x8xf32>
    %c0_41 = arith.constant 0 : index
    %c8 = arith.constant 8 : index
    %79 = vector.load %arg20[%c0_41, %c8] : memref<64x128xf32, #tpu.memory_space<vmem>>, vector<64x8xf32>
    %80 = arith.addf %79, %78 : vector<64x8xf32>
    %c0_42 = arith.constant 0 : index
    %c8_43 = arith.constant 8 : index
    %81 = vector.load %arg20[%c0_42, %c8_43] : memref<64x128xf32, #tpu.memory_space<vmem>>, vector<64x8xf32>
    tpu.vector_store %arg20[%c0_42, %c8_43], %80 {strides = array<i32>} : memref<64x128xf32, #tpu.memory_space<vmem>>, vector<64x8xf32>,
    %82 = vector.extract_strided_slice %45 {offsets = [0, 16], sizes = [64, 8], strides = [1, 1]} : vector<64x128xf32> to vector<64x8xf32>
    %83 = vector.extract_strided_slice %46 {offsets = [0, 16], sizes = [16, 8], strides = [1, 1]} : vector<16x256xf32> to vector<16x8xf32>
    %84 = vector.extract_strided_slice %46 {offsets = [0, 144], sizes = [16, 8], strides = [1, 1]} : vector<16x256xf32> to vector<16x8xf32>
    %cst_44 = arith.constant dense<0.000000e+00> : vector<64x16xf32>
    %85 = tpu.matmul %82, %83, %cst_44 {dimension_numbers = #tpu.dot_dimension_numbers<[1], [1], [0], [0], [0, 0, 1, 0], [], []>} : vector<64x8xf32>, vector<16x8xf32>, vector<64x16xf32> -> vector<64x16xf32>
    %cst_45 = arith.constant dense<0xFF800000> : vector<64xf32>
    %86 = vector.multi_reduction <maximumf>, %85, %cst_45 [1] : vector<64x16xf32> to vector<64xf32>
    %87 = vector.shape_cast %86 : vector<64xf32> to vector<64x1xf32>
    %88 = vector.broadcast %87 : vector<64x1xf32> to vector<64x16xf32>
    %89 = arith.subf %85, %88 : vector<64x16xf32>
    %90 = math.exp %89 : vector<64x16xf32>
    %cst_46 = arith.constant dense<0.000000e+00> : vector<64xf32>
    %91 = vector.multi_reduction <add>, %90, %cst_46 [1] : vector<64x16xf32> to vector<64xf32>
    %92 = vector.shape_cast %91 : vector<64xf32> to vector<64x1xf32>
    %93 = vector.broadcast %92 : vector<64x1xf32> to vector<64x16xf32>
    %94 = arith.divf %90, %93 : vector<64x16xf32>
    %cst_47 = arith.constant dense<0.000000e+00> : vector<64x8xf32>
    %95 = tpu.matmul %94, %84, %cst_47 {dimension_numbers = #tpu.dot_dimension_numbers<[1], [0], [0], [1], [0, 0, 1, 1], [], []>} : vector<64x16xf32>, vector<16x8xf32>, vector<64x8xf32> -> vector<64x8xf32>
    %c0_48 = arith.constant 0 : index
    %c16 = arith.constant 16 : index
    %96 = vector.load %arg20[%c0_48, %c16] : memref<64x128xf32, #tpu.memory_space<vmem>>, vector<64x8xf32>
    %97 = arith.addf %96, %95 : vector<64x8xf32>
    %c0_49 = arith.constant 0 : index
    %c16_50 = arith.constant 16 : index
    %98 = vector.load %arg20[%c0_49, %c16_50] : memref<64x128xf32, #tpu.memory_space<vmem>>, vector<64x8xf32>
    tpu.vector_store %arg20[%c0_49, %c16_50], %97 {strides = array<i32>} : memref<64x128xf32, #tpu.memory_space<vmem>>, vector<64x8xf32>,
    %99 = vector.extract_strided_slice %45 {offsets = [0, 24], sizes = [64, 8], strides = [1, 1]} : vector<64x128xf32> to vector<64x8xf32>
    %100 = vector.extract_strided_slice %46 {offsets = [0, 24], sizes = [16, 8], strides = [1, 1]} : vector<16x256xf32> to vector<16x8xf32>
    %101 = vector.extract_strided_slice %46 {offsets = [0, 152], sizes = [16, 8], strides = [1, 1]} : vector<16x256xf32> to vector<16x8xf32>
    %cst_51 = arith.constant dense<0.000000e+00> : vector<64x16xf32>
    %102 = tpu.matmul %99, %100, %cst_51 {dimension_numbers = #tpu.dot_dimension_numbers<[1], [1], [0], [0], [0, 0, 1, 0], [], []>} : vector<64x8xf32>, vector<16x8xf32>, vector<64x16xf32> -> vector<64x16xf32>
    %cst_52 = arith.constant dense<0xFF800000> : vector<64xf32>
    %103 = vector.multi_reduction <maximumf>, %102, %cst_52 [1] : vector<64x16xf32> to vector<64xf32>
    %104 = vector.shape_cast %103 : vector<64xf32> to vector<64x1xf32>
    %105 = vector.broadcast %104 : vector<64x1xf32> to vector<64x16xf32>
    %106 = arith.subf %102, %105 : vector<64x16xf32>
    %107 = math.exp %106 : vector<64x16xf32>
    %cst_53 = arith.constant dense<0.000000e+00> : vector<64xf32>
    %108 = vector.multi_reduction <add>, %107, %cst_53 [1] : vector<64x16xf32> to vector<64xf32>
    %109 = vector.shape_cast %108 : vector<64xf32> to vector<64x1xf32>
    %110 = vector.broadcast %109 : vector<64x1xf32> to vector<64x16xf32>
    %111 = arith.divf %107, %110 : vector<64x16xf32>
    %cst_54 = arith.constant dense<0.000000e+00> : vector<64x8xf32>
    %112 = tpu.matmul %111, %101, %cst_54 {dimension_numbers = #tpu.dot_dimension_numbers<[1], [0], [0], [1], [0, 0, 1, 1], [], []>} : vector<64x16xf32>, vector<16x8xf32>, vector<64x8xf32> -> vector<64x8xf32>
    %c0_55 = arith.constant 0 : index
    %c24 = arith.constant 24 : index
    %113 = vector.load %arg20[%c0_55, %c24] : memref<64x128xf32, #tpu.memory_space<vmem>>, vector<64x8xf32>
    %114 = arith.addf %113, %112 : vector<64x8xf32>
    %c0_56 = arith.constant 0 : index
    %c24_57 = arith.constant 24 : index
    %115 = vector.load %arg20[%c0_56, %c24_57] : memref<64x128xf32, #tpu.memory_space<vmem>>, vector<64x8xf32>
    tpu.vector_store %arg20[%c0_56, %c24_57], %114 {strides = array<i32>} : memref<64x128xf32, #tpu.memory_space<vmem>>, vector<64x8xf32>,
    %c0_58 = arith.constant 0 : index
    %c0_59 = arith.constant 0 : index
    %116 = vector.load %arg20[%c0_58, %c0_59] : memref<64x128xf32, #tpu.memory_space<vmem>>, vector<64x128xf32>
    %c0_60 = arith.constant 0 : index
    %c0_61 = arith.constant 0 : index
    %117 = vector.load %arg5[%c0_60, %c0_61] : memref<128x128xf32, #tpu.memory_space<vmem>>, vector<128x128xf32>
    %cst_62 = arith.constant dense<0.000000e+00> : vector<64x128xf32>
    %118 = tpu.matmul %116, %117, %cst_62 {dimension_numbers = #tpu.dot_dimension_numbers<[1], [0], [0], [1], [0, 0, 1, 1], [], []>} : vector<64x128xf32>, vector<128x128xf32>, vector<64x128xf32> -> vector<64x128xf32>
    %c0_63 = arith.constant 0 : index
    %c0_64 = arith.constant 0 : index
    %119 = vector.load %arg6[%c0_63, %c0_64] : memref<1x128xf32, #tpu.memory_space<vmem>>, vector<1x128xf32>
    %120 = vector.broadcast %119 : vector<1x128xf32> to vector<64x128xf32>
    %121 = arith.addf %118, %120 : vector<64x128xf32>
    %c0_65 = arith.constant 0 : index
    %c0_66 = arith.constant 0 : index
    %122 = vector.load %arg15[%c0_65, %c0_66] : memref<64x128xf32, #tpu.memory_space<vmem>>, vector<64x128xf32>
    %c0_67 = arith.constant 0 : index
    %c0_68 = arith.constant 0 : index
    %123 = vector.load %arg16[%c0_67, %c0_68] : memref<1x128xf32, #tpu.memory_space<vmem>>, vector<1x128xf32>
    %c0_69 = arith.constant 0 : index
    %c0_70 = arith.constant 0 : index
    %124 = vector.load %arg17[%c0_69, %c0_70] : memref<1x128xf32, #tpu.memory_space<vmem>>, vector<1x128xf32>
    %c0_71 = arith.constant 0 : index
    %c0_72 = arith.constant 0 : index
    %125 = vector.load %arg18[%c0_71, %c0_72] : memref<1x128xf32, #tpu.memory_space<vmem>>, vector<1x128xf32>
    %126 = arith.mulf %121, %122 : vector<64x128xf32>
    %cst_73 = arith.constant dense<0.000000e+00> : vector<16x128xf32>
    %127 = tpu.matmul %1, %126, %cst_73 {dimension_numbers = #tpu.dot_dimension_numbers<[1], [0], [0], [1], [0, 0, 1, 1], [], []>} : vector<16x64xf32>, vector<64x128xf32>, vector<16x128xf32> -> vector<16x128xf32>
    %128 = vector.broadcast %123 : vector<1x128xf32> to vector<16x128xf32>
    %129 = arith.addf %127, %128 : vector<16x128xf32>
    %cst_74 = arith.constant dense<0.000000e+00> : vector<16xf32>
    %130 = vector.multi_reduction <add>, %129, %cst_74 [1] : vector<16x128xf32> to vector<16xf32>
    %131 = vector.shape_cast %130 : vector<16xf32> to vector<16x1xf32>
    %cst_75 = arith.constant 3.125000e-02 : f32
    %132 = vector.broadcast %cst_75 : f32 to vector<16x1xf32>
    %133 = arith.mulf %131, %132 : vector<16x1xf32>
    %134 = arith.mulf %129, %129 : vector<16x128xf32>
    %cst_76 = arith.constant dense<0.000000e+00> : vector<16xf32>
    %135 = vector.multi_reduction <add>, %134, %cst_76 [1] : vector<16x128xf32> to vector<16xf32>
    %136 = vector.shape_cast %135 : vector<16xf32> to vector<16x1xf32>
    %cst_77 = arith.constant 3.125000e-02 : f32
    %137 = vector.broadcast %cst_77 : f32 to vector<16x1xf32>
    %138 = arith.mulf %136, %137 : vector<16x1xf32>
    %139 = arith.mulf %133, %133 : vector<16x1xf32>
    %140 = arith.subf %138, %139 : vector<16x1xf32>
    %141 = vector.broadcast %133 : vector<16x1xf32> to vector<16x128xf32>
    %142 = arith.subf %129, %141 : vector<16x128xf32>
    %cst_78 = arith.constant 9.99999974E-6 : f32
    %143 = vector.broadcast %cst_78 : f32 to vector<16x1xf32>
    %144 = arith.addf %140, %143 : vector<16x1xf32>
    %145 = math.rsqrt %144 : vector<16x1xf32>
    %146 = vector.broadcast %145 : vector<16x1xf32> to vector<16x128xf32>
    %147 = arith.mulf %142, %146 : vector<16x128xf32>
    %148 = vector.broadcast %124 : vector<1x128xf32> to vector<16x128xf32>
    %149 = arith.mulf %147, %148 : vector<16x128xf32>
    %150 = vector.broadcast %125 : vector<1x128xf32> to vector<16x128xf32>
    %151 = arith.addf %149, %150 : vector<16x128xf32>
    %cst_79 = arith.constant 5.000000e-01 : f32
    %152 = vector.broadcast %cst_79 : f32 to vector<16x128xf32>
    %153 = arith.mulf %152, %151 : vector<16x128xf32>
    %cst_80 = arith.constant 0.707106769 : f32
    %154 = vector.broadcast %cst_80 : f32 to vector<16x128xf32>
    %155 = arith.mulf %151, %154 : vector<16x128xf32>
    %156 = math.erf %155 : vector<16x128xf32>
    %cst_81 = arith.constant 1.000000e+00 : f32
    %157 = vector.broadcast %cst_81 : f32 to vector<16x128xf32>
    %158 = arith.addf %157, %156 : vector<16x128xf32>
    %159 = arith.mulf %153, %158 : vector<16x128xf32>
    %c0_82 = arith.constant 0 : index
    %c0_83 = arith.constant 0 : index
    %160 = vector.load %arg11[%c0_82, %c0_83] : memref<128x128xf32, #tpu.memory_space<vmem>>, vector<128x128xf32>
    %c0_84 = arith.constant 0 : index
    %c0_85 = arith.constant 0 : index
    %161 = vector.load %arg12[%c0_84, %c0_85] : memref<128x256xf32, #tpu.memory_space<vmem>>, vector<128x256xf32>
    %cst_86 = arith.constant dense<0.000000e+00> : vector<64x128xf32>
    %162 = tpu.matmul %121, %160, %cst_86 {dimension_numbers = #tpu.dot_dimension_numbers<[1], [0], [0], [1], [0, 0, 1, 1], [], []>} : vector<64x128xf32>, vector<128x128xf32>, vector<64x128xf32> -> vector<64x128xf32>
    %cst_87 = arith.constant 0.353553385 : f32
    %163 = vector.broadcast %cst_87 : f32 to vector<64x128xf32>
    %164 = arith.mulf %162, %163 : vector<64x128xf32>
    %cst_88 = arith.constant dense<0.000000e+00> : vector<16x256xf32>
    %165 = tpu.matmul %159, %161, %cst_88 {dimension_numbers = #tpu.dot_dimension_numbers<[1], [0], [0], [1], [0, 0, 1, 1], [], []>} : vector<16x128xf32>, vector<128x256xf32>, vector<16x256xf32> -> vector<16x256xf32>
    %c0_89 = arith.constant 0 : index
    %c0_90 = arith.constant 0 : index
    %166 = vector.load %arg20[%c0_89, %c0_90] : memref<64x128xf32, #tpu.memory_space<vmem>>, vector<64x128xf32>
    tpu.vector_store %arg20[%c0_89, %c0_90], %121 {strides = array<i32>} : memref<64x128xf32, #tpu.memory_space<vmem>>, vector<64x128xf32>,
    %167 = vector.extract_strided_slice %164 {offsets = [0, 0], sizes = [64, 8], strides = [1, 1]} : vector<64x128xf32> to vector<64x8xf32>
    %168 = vector.extract_strided_slice %165 {offsets = [0, 0], sizes = [16, 8], strides = [1, 1]} : vector<16x256xf32> to vector<16x8xf32>
    %169 = vector.extract_strided_slice %165 {offsets = [0, 128], sizes = [16, 8], strides = [1, 1]} : vector<16x256xf32> to vector<16x8xf32>
    %cst_91 = arith.constant dense<0.000000e+00> : vector<64x16xf32>
    %170 = tpu.matmul %167, %168, %cst_91 {dimension_numbers = #tpu.dot_dimension_numbers<[1], [1], [0], [0], [0, 0, 1, 0], [], []>} : vector<64x8xf32>, vector<16x8xf32>, vector<64x16xf32> -> vector<64x16xf32>
    %cst_92 = arith.constant dense<0xFF800000> : vector<64xf32>
    %171 = vector.multi_reduction <maximumf>, %170, %cst_92 [1] : vector<64x16xf32> to vector<64xf32>
    %172 = vector.shape_cast %171 : vector<64xf32> to vector<64x1xf32>
    %173 = vector.broadcast %172 : vector<64x1xf32> to vector<64x16xf32>
    %174 = arith.subf %170, %173 : vector<64x16xf32>
    %175 = math.exp %174 : vector<64x16xf32>
    %cst_93 = arith.constant dense<0.000000e+00> : vector<64xf32>
    %176 = vector.multi_reduction <add>, %175, %cst_93 [1] : vector<64x16xf32> to vector<64xf32>
    %177 = vector.shape_cast %176 : vector<64xf32> to vector<64x1xf32>
    %178 = vector.broadcast %177 : vector<64x1xf32> to vector<64x16xf32>
    %179 = arith.divf %175, %178 : vector<64x16xf32>
    %cst_94 = arith.constant dense<0.000000e+00> : vector<64x8xf32>
    %180 = tpu.matmul %179, %169, %cst_94 {dimension_numbers = #tpu.dot_dimension_numbers<[1], [0], [0], [1], [0, 0, 1, 1], [], []>} : vector<64x16xf32>, vector<16x8xf32>, vector<64x8xf32> -> vector<64x8xf32>
    %c0_95 = arith.constant 0 : index
    %c0_96 = arith.constant 0 : index
    %181 = vector.load %arg20[%c0_95, %c0_96] : memref<64x128xf32, #tpu.memory_space<vmem>>, vector<64x8xf32>
    %182 = arith.addf %181, %180 : vector<64x8xf32>
    %c0_97 = arith.constant 0 : index
    %c0_98 = arith.constant 0 : index
    %183 = vector.load %arg20[%c0_97, %c0_98] : memref<64x128xf32, #tpu.memory_space<vmem>>, vector<64x8xf32>
    tpu.vector_store %arg20[%c0_97, %c0_98], %182 {strides = array<i32>} : memref<64x128xf32, #tpu.memory_space<vmem>>, vector<64x8xf32>,
    %184 = vector.extract_strided_slice %164 {offsets = [0, 8], sizes = [64, 8], strides = [1, 1]} : vector<64x128xf32> to vector<64x8xf32>
    %185 = vector.extract_strided_slice %165 {offsets = [0, 8], sizes = [16, 8], strides = [1, 1]} : vector<16x256xf32> to vector<16x8xf32>
    %186 = vector.extract_strided_slice %165 {offsets = [0, 136], sizes = [16, 8], strides = [1, 1]} : vector<16x256xf32> to vector<16x8xf32>
    %cst_99 = arith.constant dense<0.000000e+00> : vector<64x16xf32>
    %187 = tpu.matmul %184, %185, %cst_99 {dimension_numbers = #tpu.dot_dimension_numbers<[1], [1], [0], [0], [0, 0, 1, 0], [], []>} : vector<64x8xf32>, vector<16x8xf32>, vector<64x16xf32> -> vector<64x16xf32>
    %cst_100 = arith.constant dense<0xFF800000> : vector<64xf32>
    %188 = vector.multi_reduction <maximumf>, %187, %cst_100 [1] : vector<64x16xf32> to vector<64xf32>
    %189 = vector.shape_cast %188 : vector<64xf32> to vector<64x1xf32>
    %190 = vector.broadcast %189 : vector<64x1xf32> to vector<64x16xf32>
    %191 = arith.subf %187, %190 : vector<64x16xf32>
    %192 = math.exp %191 : vector<64x16xf32>
    %cst_101 = arith.constant dense<0.000000e+00> : vector<64xf32>
    %193 = vector.multi_reduction <add>, %192, %cst_101 [1] : vector<64x16xf32> to vector<64xf32>
    %194 = vector.shape_cast %193 : vector<64xf32> to vector<64x1xf32>
    %195 = vector.broadcast %194 : vector<64x1xf32> to vector<64x16xf32>
    %196 = arith.divf %192, %195 : vector<64x16xf32>
    %cst_102 = arith.constant dense<0.000000e+00> : vector<64x8xf32>
    %197 = tpu.matmul %196, %186, %cst_102 {dimension_numbers = #tpu.dot_dimension_numbers<[1], [0], [0], [1], [0, 0, 1, 1], [], []>} : vector<64x16xf32>, vector<16x8xf32>, vector<64x8xf32> -> vector<64x8xf32>
    %c0_103 = arith.constant 0 : index
    %c8_104 = arith.constant 8 : index
    %198 = vector.load %arg20[%c0_103, %c8_104] : memref<64x128xf32, #tpu.memory_space<vmem>>, vector<64x8xf32>
    %199 = arith.addf %198, %197 : vector<64x8xf32>
    %c0_105 = arith.constant 0 : index
    %c8_106 = arith.constant 8 : index
    %200 = vector.load %arg20[%c0_105, %c8_106] : memref<64x128xf32, #tpu.memory_space<vmem>>, vector<64x8xf32>
    tpu.vector_store %arg20[%c0_105, %c8_106], %199 {strides = array<i32>} : memref<64x128xf32, #tpu.memory_space<vmem>>, vector<64x8xf32>,
    %201 = vector.extract_strided_slice %164 {offsets = [0, 16], sizes = [64, 8], strides = [1, 1]} : vector<64x128xf32> to vector<64x8xf32>
    %202 = vector.extract_strided_slice %165 {offsets = [0, 16], sizes = [16, 8], strides = [1, 1]} : vector<16x256xf32> to vector<16x8xf32>
    %203 = vector.extract_strided_slice %165 {offsets = [0, 144], sizes = [16, 8], strides = [1, 1]} : vector<16x256xf32> to vector<16x8xf32>
    %cst_107 = arith.constant dense<0.000000e+00> : vector<64x16xf32>
    %204 = tpu.matmul %201, %202, %cst_107 {dimension_numbers = #tpu.dot_dimension_numbers<[1], [1], [0], [0], [0, 0, 1, 0], [], []>} : vector<64x8xf32>, vector<16x8xf32>, vector<64x16xf32> -> vector<64x16xf32>
    %cst_108 = arith.constant dense<0xFF800000> : vector<64xf32>
    %205 = vector.multi_reduction <maximumf>, %204, %cst_108 [1] : vector<64x16xf32> to vector<64xf32>
    %206 = vector.shape_cast %205 : vector<64xf32> to vector<64x1xf32>
    %207 = vector.broadcast %206 : vector<64x1xf32> to vector<64x16xf32>
    %208 = arith.subf %204, %207 : vector<64x16xf32>
    %209 = math.exp %208 : vector<64x16xf32>
    %cst_109 = arith.constant dense<0.000000e+00> : vector<64xf32>
    %210 = vector.multi_reduction <add>, %209, %cst_109 [1] : vector<64x16xf32> to vector<64xf32>
    %211 = vector.shape_cast %210 : vector<64xf32> to vector<64x1xf32>
    %212 = vector.broadcast %211 : vector<64x1xf32> to vector<64x16xf32>
    %213 = arith.divf %209, %212 : vector<64x16xf32>
    %cst_110 = arith.constant dense<0.000000e+00> : vector<64x8xf32>
    %214 = tpu.matmul %213, %203, %cst_110 {dimension_numbers = #tpu.dot_dimension_numbers<[1], [0], [0], [1], [0, 0, 1, 1], [], []>} : vector<64x16xf32>, vector<16x8xf32>, vector<64x8xf32> -> vector<64x8xf32>
    %c0_111 = arith.constant 0 : index
    %c16_112 = arith.constant 16 : index
    %215 = vector.load %arg20[%c0_111, %c16_112] : memref<64x128xf32, #tpu.memory_space<vmem>>, vector<64x8xf32>
    %216 = arith.addf %215, %214 : vector<64x8xf32>
    %c0_113 = arith.constant 0 : index
    %c16_114 = arith.constant 16 : index
    %217 = vector.load %arg20[%c0_113, %c16_114] : memref<64x128xf32, #tpu.memory_space<vmem>>, vector<64x8xf32>
    tpu.vector_store %arg20[%c0_113, %c16_114], %216 {strides = array<i32>} : memref<64x128xf32, #tpu.memory_space<vmem>>, vector<64x8xf32>,
    %218 = vector.extract_strided_slice %164 {offsets = [0, 24], sizes = [64, 8], strides = [1, 1]} : vector<64x128xf32> to vector<64x8xf32>
    %219 = vector.extract_strided_slice %165 {offsets = [0, 24], sizes = [16, 8], strides = [1, 1]} : vector<16x256xf32> to vector<16x8xf32>
    %220 = vector.extract_strided_slice %165 {offsets = [0, 152], sizes = [16, 8], strides = [1, 1]} : vector<16x256xf32> to vector<16x8xf32>
    %cst_115 = arith.constant dense<0.000000e+00> : vector<64x16xf32>
    %221 = tpu.matmul %218, %219, %cst_115 {dimension_numbers = #tpu.dot_dimension_numbers<[1], [1], [0], [0], [0, 0, 1, 0], [], []>} : vector<64x8xf32>, vector<16x8xf32>, vector<64x16xf32> -> vector<64x16xf32>
    %cst_116 = arith.constant dense<0xFF800000> : vector<64xf32>
    %222 = vector.multi_reduction <maximumf>, %221, %cst_116 [1] : vector<64x16xf32> to vector<64xf32>
    %223 = vector.shape_cast %222 : vector<64xf32> to vector<64x1xf32>
    %224 = vector.broadcast %223 : vector<64x1xf32> to vector<64x16xf32>
    %225 = arith.subf %221, %224 : vector<64x16xf32>
    %226 = math.exp %225 : vector<64x16xf32>
    %cst_117 = arith.constant dense<0.000000e+00> : vector<64xf32>
    %227 = vector.multi_reduction <add>, %226, %cst_117 [1] : vector<64x16xf32> to vector<64xf32>
    %228 = vector.shape_cast %227 : vector<64xf32> to vector<64x1xf32>
    %229 = vector.broadcast %228 : vector<64x1xf32> to vector<64x16xf32>
    %230 = arith.divf %226, %229 : vector<64x16xf32>
    %cst_118 = arith.constant dense<0.000000e+00> : vector<64x8xf32>
    %231 = tpu.matmul %230, %220, %cst_118 {dimension_numbers = #tpu.dot_dimension_numbers<[1], [0], [0], [1], [0, 0, 1, 1], [], []>} : vector<64x16xf32>, vector<16x8xf32>, vector<64x8xf32> -> vector<64x8xf32>
    %c0_119 = arith.constant 0 : index
    %c24_120 = arith.constant 24 : index
    %232 = vector.load %arg20[%c0_119, %c24_120] : memref<64x128xf32, #tpu.memory_space<vmem>>, vector<64x8xf32>
    %233 = arith.addf %232, %231 : vector<64x8xf32>
    %c0_121 = arith.constant 0 : index
    %c24_122 = arith.constant 24 : index
    %234 = vector.load %arg20[%c0_121, %c24_122] : memref<64x128xf32, #tpu.memory_space<vmem>>, vector<64x8xf32>
    tpu.vector_store %arg20[%c0_121, %c24_122], %233 {strides = array<i32>} : memref<64x128xf32, #tpu.memory_space<vmem>>, vector<64x8xf32>,
    %c0_123 = arith.constant 0 : index
    %c0_124 = arith.constant 0 : index
    %235 = vector.load %arg20[%c0_123, %c0_124] : memref<64x128xf32, #tpu.memory_space<vmem>>, vector<64x128xf32>
    %c0_125 = arith.constant 0 : index
    %c0_126 = arith.constant 0 : index
    %236 = vector.load %arg13[%c0_125, %c0_126] : memref<128x128xf32, #tpu.memory_space<vmem>>, vector<128x128xf32>
    %cst_127 = arith.constant dense<0.000000e+00> : vector<64x128xf32>
    %237 = tpu.matmul %235, %236, %cst_127 {dimension_numbers = #tpu.dot_dimension_numbers<[1], [0], [0], [1], [0, 0, 1, 1], [], []>} : vector<64x128xf32>, vector<128x128xf32>, vector<64x128xf32> -> vector<64x128xf32>
    %c0_128 = arith.constant 0 : index
    %c0_129 = arith.constant 0 : index
    %238 = vector.load %arg14[%c0_128, %c0_129] : memref<1x128xf32, #tpu.memory_space<vmem>>, vector<1x128xf32>
    %239 = vector.broadcast %238 : vector<1x128xf32> to vector<64x128xf32>
    %240 = arith.addf %237, %239 : vector<64x128xf32>
    %c0_130 = arith.constant 0 : index
    %c0_131 = arith.constant 0 : index
    %241 = vector.load %arg19[%c0_130, %c0_131] : memref<64x128xf32, #tpu.memory_space<vmem>>, vector<64x128xf32>
    tpu.vector_store %arg19[%c0_130, %c0_131], %240 {strides = array<i32>} : memref<64x128xf32, #tpu.memory_space<vmem>>, vector<64x128xf32>,
    return
  }
  func.func @transform_0(%arg0: i32) -> (i32, i32) {
    %c0_i32 = arith.constant 0 : i32
    %c0_i32_0 = arith.constant 0 : i32
    return %arg0, %c0_i32 : i32, i32
  }
  func.func @transform_1(%arg0: i32) -> (i32, i32) {
    %c0_i32 = arith.constant 0 : i32
    %c0_i32_0 = arith.constant 0 : i32
    %c0_i32_1 = arith.constant 0 : i32
    return %c0_i32, %c0_i32_0 : i32, i32
  }
  func.func @transform_2(%arg0: i32) -> (i32, i32) {
    %c0_i32 = arith.constant 0 : i32
    %c0_i32_0 = arith.constant 0 : i32
    %c0_i32_1 = arith.constant 0 : i32
    return %c0_i32, %c0_i32_0 : i32, i32
  }
  func.func @transform_3(%arg0: i32) -> (i32, i32) {
    %c0_i32 = arith.constant 0 : i32
    %c0_i32_0 = arith.constant 0 : i32
    %c0_i32_1 = arith.constant 0 : i32
    return %c0_i32, %c0_i32_0 : i32, i32
  }
  func.func @transform_4(%arg0: i32) -> (i32, i32) {
    %c0_i32 = arith.constant 0 : i32
    %c0_i32_0 = arith.constant 0 : i32
    %c0_i32_1 = arith.constant 0 : i32
    return %c0_i32, %c0_i32_0 : i32, i32
  }
  func.func @transform_5(%arg0: i32) -> (i32, i32) {
    %c0_i32 = arith.constant 0 : i32
    %c0_i32_0 = arith.constant 0 : i32
    %c0_i32_1 = arith.constant 0 : i32
    return %c0_i32, %c0_i32_0 : i32, i32
  }
  func.func @transform_6(%arg0: i32) -> (i32, i32) {
    %c0_i32 = arith.constant 0 : i32
    %c0_i32_0 = arith.constant 0 : i32
    %c0_i32_1 = arith.constant 0 : i32
    return %c0_i32, %c0_i32_0 : i32, i32
  }
  func.func @transform_7(%arg0: i32) -> (i32, i32) {
    %c0_i32 = arith.constant 0 : i32
    %c0_i32_0 = arith.constant 0 : i32
    %c0_i32_1 = arith.constant 0 : i32
    return %c0_i32, %c0_i32_0 : i32, i32
  }
  func.func @transform_8(%arg0: i32) -> (i32, i32) {
    %c0_i32 = arith.constant 0 : i32
    %c0_i32_0 = arith.constant 0 : i32
    %c0_i32_1 = arith.constant 0 : i32
    return %c0_i32, %c0_i32_0 : i32, i32
  }
  func.func @transform_9(%arg0: i32) -> (i32, i32) {
    %c0_i32 = arith.constant 0 : i32
    %c0_i32_0 = arith.constant 0 : i32
    %c0_i32_1 = arith.constant 0 : i32
    return %c0_i32, %c0_i32_0 : i32, i32
  }
  func.func @transform_10(%arg0: i32) -> (i32, i32) {
    %c0_i32 = arith.constant 0 : i32
    %c0_i32_0 = arith.constant 0 : i32
    %c0_i32_1 = arith.constant 0 : i32
    return %c0_i32, %c0_i32_0 : i32, i32
  }
  func.func @transform_11(%arg0: i32) -> (i32, i32) {
    %c0_i32 = arith.constant 0 : i32
    %c0_i32_0 = arith.constant 0 : i32
    %c0_i32_1 = arith.constant 0 : i32
    return %c0_i32, %c0_i32_0 : i32, i32
  }
  func.func @transform_12(%arg0: i32) -> (i32, i32) {
    %c0_i32 = arith.constant 0 : i32
    %c0_i32_0 = arith.constant 0 : i32
    %c0_i32_1 = arith.constant 0 : i32
    return %c0_i32, %c0_i32_0 : i32, i32
  }
  func.func @transform_13(%arg0: i32) -> (i32, i32) {
    %c0_i32 = arith.constant 0 : i32
    %c0_i32_0 = arith.constant 0 : i32
    %c0_i32_1 = arith.constant 0 : i32
    return %c0_i32, %c0_i32_0 : i32, i32
  }
  func.func @transform_14(%arg0: i32) -> (i32, i32) {
    %c0_i32 = arith.constant 0 : i32
    %c0_i32_0 = arith.constant 0 : i32
    %c0_i32_1 = arith.constant 0 : i32
    return %c0_i32, %c0_i32_0 : i32, i32
  }
  func.func @transform_15(%arg0: i32) -> (i32, i32) {
    %c0_i32 = arith.constant 0 : i32
    %c0_i32_0 = arith.constant 0 : i32
    %c0_i32_1 = arith.constant 0 : i32
    return %c0_i32, %c0_i32_0 : i32, i32
  }
  func.func @transform_16(%arg0: i32) -> (i32, i32) {
    %c0_i32 = arith.constant 0 : i32
    %c0_i32_0 = arith.constant 0 : i32
    %c0_i32_1 = arith.constant 0 : i32
    return %c0_i32, %c0_i32_0 : i32, i32
  }
  func.func @transform_17(%arg0: i32) -> (i32, i32) {
    %c0_i32 = arith.constant 0 : i32
    %c0_i32_0 = arith.constant 0 : i32
    %c0_i32_1 = arith.constant 0 : i32
    return %c0_i32, %c0_i32_0 : i32, i32
  }
  func.func @transform_18(%arg0: i32) -> (i32, i32) {
    %c0_i32 = arith.constant 0 : i32
    %c0_i32_0 = arith.constant 0 : i32
    return %arg0, %c0_i32 : i32, i32
  }
}

</mosaic_0001>

<llo_original>
// kernel: tpu_custom_call.1
$region0: #{tpu_custom_call.1}
  #allocation0 [shape = 'u32[]', space=smem, size = 0x4, offset = 0x4, fixed_abs, tag = 'smem constant byte address 0x4 - core index']
  #allocation1 [shape = 'u32[144,128]{1,0:T(1,128)}', space=vmem, size = 0x12000, scoped, tag = 'internal scratch']
  #allocation2 [shape = 'f32[64,128]{1,0:T(8,128)}', space=vmem, size = 0x8000, scoped, tag = 'scratch operand']
  %s0 = inlined_call_operand.hbm [shape: f32[128,128], index: 0, kind: input, shape index: {}]
  %s1 = inlined_call_operand.hbm [shape: f32[16,64], index: 1, kind: input, shape index: {}]
  %s2 = inlined_call_operand.hbm [shape: f32[128,128], index: 2, kind: input, shape index: {}]
  %s3 = inlined_call_operand.hbm [shape: f32[128,256], index: 3, kind: input, shape index: {}]
  %s4 = inlined_call_operand.hbm [shape: f32[128,128], index: 4, kind: input, shape index: {}]
  %s5 = inlined_call_operand.vmem [shape: f32[1,128], index: 5, kind: input, shape index: {}]
  %s6 = inlined_call_operand.hbm [shape: f32[64,128], index: 6, kind: input, shape index: {}]
  %s7 = inlined_call_operand.vmem [shape: f32[1,128], index: 7, kind: input, shape index: {}]
  %s8 = inlined_call_operand.vmem [shape: f32[1,128], index: 8, kind: input, shape index: {}]
  %s9 = inlined_call_operand.vmem [shape: f32[1,128], index: 9, kind: input, shape index: {}]
  %s10 = inlined_call_operand.hbm [shape: f32[128,128], index: 10, kind: input, shape index: {}]
  %s11 = inlined_call_operand.hbm [shape: f32[128,256], index: 11, kind: input, shape index: {}]
  %s12 = inlined_call_operand.hbm [shape: f32[128,128], index: 12, kind: input, shape index: {}]
  %s13 = inlined_call_operand.vmem [shape: f32[1,128], index: 13, kind: input, shape index: {}]
  %s14 = inlined_call_operand.hbm [shape: f32[64,128], index: 14, kind: input, shape index: {}]
  %s15 = inlined_call_operand.vmem [shape: f32[1,128], index: 15, kind: input, shape index: {}]
  %s16 = inlined_call_operand.vmem [shape: f32[1,128], index: 16, kind: input, shape index: {}]
  %s17 = inlined_call_operand.vmem [shape: f32[1,128], index: 17, kind: input, shape index: {}]
  %s18 = inlined_call_operand.hbm [shape: f32[128,128], index: 18, kind: output, shape index: {}]
  %s19 = sld [smem:[#allocation0]]
  $region145: #{tpu_custom_call.1} parent=0
    _
  %s21 = ssub.s32 1, %s19
  %s22 = scalar_select 0, %s21, %s19
  $region1: #{tpu_custom_call.1} parent=0
    #allocation3 [shape = 'u8[65536]{0}', space=vmem, size = 0x10000, scoped, tag = 'input window, operand 0']
    #allocation4 [shape = 's32[2]{0}', space=sflag, size = 0x8, scoped, tag = 'scoped memory for tpu_custom_call.1']
    #allocation5 [shape = 's32[2]{0}', space=sflag, size = 0x8, scoped, tag = 'scoped memory for tpu_custom_call.1']
    #allocation6 [shape = 'u8[8192]{0}', space=vmem, size = 0x2000, scoped, tag = 'input window, operand 1, single buffered']
    #allocation7 [shape = 's32[1]{0}', space=sflag, size = 0x4, scoped, tag = 'scoped memory for tpu_custom_call.1']
    #allocation8 [shape = 'u8[65536]{0}', space=vmem, size = 0x10000, scoped, tag = 'input window, operand 2, single buffered']
    #allocation9 [shape = 'u8[131072]{0}', space=vmem, size = 0x20000, scoped, tag = 'input window, operand 3, single buffered']
    #allocation10 [shape = 's32[1]{0}', space=sflag, size = 0x4, scoped, tag = 'scoped memory for tpu_custom_call.1']
    #allocation11 [shape = 'u8[65536]{0}', space=vmem, size = 0x10000, scoped, tag = 'input window, operand 4, single buffered']
    #allocation12 [shape = 'u8[32768]{0}', space=vmem, size = 0x8000, scoped, tag = 'input window, operand 6, single buffered']
    #allocation13 [shape = 's32[1]{0}', space=sflag, size = 0x4, scoped, tag = 'scoped memory for tpu_custom_call.1']
    #allocation14 [shape = 'u8[65536]{0}', space=vmem, size = 0x10000, scoped, tag = 'input window, operand 10, single buffered']
    #allocation15 [shape = 'u8[131072]{0}', space=vmem, size = 0x20000, scoped, tag = 'input window, operand 11, single buffered']
    #allocation16 [shape = 's32[1]{0}', space=sflag, size = 0x4, scoped, tag = 'scoped memory for tpu_custom_call.1']
    #allocation17 [shape = 'u8[65536]{0}', space=vmem, size = 0x10000, scoped, tag = 'input window, operand 12, single buffered']
    #allocation18 [shape = 'u8[32768]{0}', space=vmem, size = 0x8000, scoped, tag = 'input window, operand 14, single buffered']
    #allocation19 [shape = 's32[1]{0}', space=sflag, size = 0x4, scoped, tag = 'scoped memory for tpu_custom_call.1']
    #allocation20 [shape = 'u8[65536]{0}', space=vmem, size = 0x10000, scoped, tag = 'output window, operand 0']
    %23 = vsyncpa [#allocation4], 0
    %s24 = scalar_lea.sflag [#allocation4], 1
    %25 = vsyncpa %s24, 0
    %26 = vsyncpa [#allocation7], 0
    %27 = vsyncpa [#allocation10], 0
    %28 = vsyncpa [#allocation13], 0
    %29 = vsyncpa [#allocation16], 0
    %30 = vsyncpa [#allocation19], 0
    %31 = vsyncpa [#allocation5], 0
    %s32 = scalar_lea.sflag [#allocation5], 1
    %33 = vsyncpa %s32, 0
    loop: start=0, step=1, limit=4
    $region2: #{tpu_custom_call.1} parent=1 // loop_pre_header
      _
    $region3: #{tpu_custom_call.1} parent=1 // loop_header
      %s35 = sphi 0, %s39
      %p36 = scmp.ge.s32.totalorder %s35, 4
      %s45 = sphi 0, %s47
      %s48 = sphi 0, %s45
      %s49 = sphi 0, %s48
      %s65 = sphi 0, %s49
      %s69 = sphi 0, %s69
      %s71 = sphi 0, %s69
      %s72 = sphi 0, %s71
      %s86 = sphi 0, %s72
      %s90 = sphi 0, %s90
      %s92 = sphi 0, %s90
      %s93 = sphi 0, %s92
      %s107 = sphi 0, %s93
      %s111 = sphi 0, %s111
      %s113 = sphi 0, %s111
      %s114 = sphi 0, %s113
      %s128 = sphi 0, %s114
      %s132 = sphi 0, %s132
      %s134 = sphi 0, %s132
      %s135 = sphi 0, %s134
      %s149 = sphi 0, %s135
      %s153 = sphi 0, %s153
      %s155 = sphi 0, %s153
      %s156 = sphi 0, %s155
      %s170 = sphi 0, %s156
      %s174 = sphi 0, %s174
      %s176 = sphi 0, %s174
      %s177 = sphi 0, %s176
      %s191 = sphi 0, %s177
      %s195 = sphi 0, %s195
      %s197 = sphi 0, %s195
      %s198 = sphi 0, %s197
      %s212 = sphi 0, %s198
      %s216 = sphi 0, %s216
      %s218 = sphi 0, %s216
      %s219 = sphi 0, %s218
      %s233 = sphi 0, %s219
      %s237 = sphi 0, %s237
      %s239 = sphi 0, %s237
      %s240 = sphi 0, %s239
      %s254 = sphi 0, %s240
      %s258 = sphi 0, %s258
      %s260 = sphi 0, %s258
      %s261 = sphi 0, %s260
      %s275 = sphi 0, %s261
      %s279 = sphi 0, %s279
      %s281 = sphi 0, %s279
      %s282 = sphi 0, %s281
      %s296 = sphi 0, %s282
      %s300 = sphi 0, %s300
      %s302 = sphi 0, %s300
      %s303 = sphi 0, %s302
      %s317 = sphi 0, %s303
      %s321 = sphi 0, %s321
      %s323 = sphi 0, %s321
      %s324 = sphi 0, %s323
      %s338 = sphi 0, %s324
      %s342 = sphi 0, %s342
      %s344 = sphi 0, %s342
      %s345 = sphi 0, %s344
      %s359 = sphi 0, %s345
      %s363 = sphi 0, %s363
      %s365 = sphi 0, %s363
      %s366 = sphi 0, %s365
      %s380 = sphi 0, %s366
      %s384 = sphi 0, %s384
      %s386 = sphi 0, %s384
      %s387 = sphi 0, %s386
      %s401 = sphi 0, %s387
      %s405 = sphi 0, %s405
      %s407 = sphi 0, %s405
      %s408 = sphi 0, %s407
      %s422 = sphi 0, %s408
      %s428 = sphi 0, %s430
      %s431 = sphi 0, %s428
      %s432 = sphi 0, %s431
      %s448 = sphi 0, %s432
    $region4: #{tpu_custom_call.1} parent=1 // loop_header_branch
      %38 = sbr.rel (%p36) target = $region8
    $region5: #{tpu_custom_call.1} parent=1 // loop_body
      %s40 = ssub.s32 %s35, 1
      %s41 = ssub.s32 %s35, 2
      %s42 = sadd.s32 %s35, 1
      %s43 = ssub.s32 %s35, %s42
      %p44 = scmp.eq.s32.totalorder %s43, 0
      %s46 = sadd.s32 %s45, 1
      %s47 = scalar_select %p44, %s45, %s46
      %p50 = pneg %p44
      %p51 = scmp.eq.s32.totalorder %s35, 1
      %p52 = por %p50, %p51
      %p53 = scmp.ne.s32.totalorder %s45, %s48
      %p54 = scmp.eq.s32.totalorder %s35, 0
      %p55 = por %p53, %p54
      %p56 = scmp.ne.s32.totalorder %s45, %s48
      %p57 = scmp.eq.s32.totalorder %s40, 1
      %p58 = por %p56, %p57
      %p59 = scmp.ne.s32.totalorder %s48, %s49
      %p60 = scmp.eq.s32.totalorder %s40, 0
      %p61 = por %p59, %p60
      %p62 = scmp.ne.s32.totalorder %s48, %s49
      %p63 = scmp.eq.s32.totalorder %s41, 1
      %p64 = por %p62, %p63
      %p66 = scmp.ne.s32.totalorder %s49, %s65
      %p67 = scmp.eq.s32.totalorder %s41, 0
      %p68 = por %p66, %p67
      %s70 = sadd.s32 %s69, 1
      %p73 = scmp.eq.s32.totalorder %s35, 1
      %p74 = scmp.ne.s32.totalorder %s69, %s71
      %p75 = scmp.eq.s32.totalorder %s35, 0
      %p76 = por %p74, %p75
      %p77 = scmp.ne.s32.totalorder %s69, %s71
      %p78 = scmp.eq.s32.totalorder %s40, 1
      %p79 = por %p77, %p78
      %p80 = scmp.ne.s32.totalorder %s71, %s72
      %p81 = scmp.eq.s32.totalorder %s40, 0
      %p82 = por %p80, %p81
      %p83 = scmp.ne.s32.totalorder %s71, %s72
      %p84 = scmp.eq.s32.totalorder %s41, 1
      %p85 = por %p83, %p84
      %p87 = scmp.ne.s32.totalorder %s72, %s86
      %p88 = scmp.eq.s32.totalorder %s41, 0
      %p89 = por %p87, %p88
      %s91 = sadd.s32 %s90, 1
      %p94 = scmp.eq.s32.totalorder %s35, 1
      %p95 = scmp.ne.s32.totalorder %s90, %s92
      %p96 = scmp.eq.s32.totalorder %s35, 0
      %p97 = por %p95, %p96
      %p98 = scmp.ne.s32.totalorder %s90, %s92
      %p99 = scmp.eq.s32.totalorder %s40, 1
      %p100 = por %p98, %p99
      %p101 = scmp.ne.s32.totalorder %s92, %s93
      %p102 = scmp.eq.s32.totalorder %s40, 0
      %p103 = por %p101, %p102
      %p104 = scmp.ne.s32.totalorder %s92, %s93
      %p105 = scmp.eq.s32.totalorder %s41, 1
      %p106 = por %p104, %p105
      %p108 = scmp.ne.s32.totalorder %s93, %s107
      %p109 = scmp.eq.s32.totalorder %s41, 0
      %p110 = por %p108, %p109
      %s112 = sadd.s32 %s111, 1
      %p115 = scmp.eq.s32.totalorder %s35, 1
      %p116 = scmp.ne.s32.totalorder %s111, %s113
      %p117 = scmp.eq.s32.totalorder %s35, 0
      %p118 = por %p116, %p117
      %p119 = scmp.ne.s32.totalorder %s111, %s113
      %p120 = scmp.eq.s32.totalorder %s40, 1
      %p121 = por %p119, %p120
      %p122 = scmp.ne.s32.totalorder %s113, %s114
      %p123 = scmp.eq.s32.totalorder %s40, 0
      %p124 = por %p122, %p123
      %p125 = scmp.ne.s32.totalorder %s113, %s114
      %p126 = scmp.eq.s32.totalorder %s41, 1
      %p127 = por %p125, %p126
      %p129 = scmp.ne.s32.totalorder %s114, %s128
      %p130 = scmp.eq.s32.totalorder %s41, 0
      %p131 = por %p129, %p130
      %s133 = sadd.s32 %s132, 1
      %p136 = scmp.eq.s32.totalorder %s35, 1
      %p137 = scmp.ne.s32.totalorder %s132, %s134
      %p138 = scmp.eq.s32.totalorder %s35, 0
      %p139 = por %p137, %p138
      %p140 = scmp.ne.s32.totalorder %s132, %s134
      %p141 = scmp.eq.s32.totalorder %s40, 1
      %p142 = por %p140, %p141
      %p143 = scmp.ne.s32.totalorder %s134, %s135
      %p144 = scmp.eq.s32.totalorder %s40, 0
      %p145 = por %p143, %p144
      %p146 = scmp.ne.s32.totalorder %s134, %s135
      %p147 = scmp.eq.s32.totalorder %s41, 1
      %p148 = por %p146, %p147
      %p150 = scmp.ne.s32.totalorder %s135, %s149
      %p151 = scmp.eq.s32.totalorder %s41, 0
      %p152 = por %p150, %p151
      %s154 = sadd.s32 %s153, 1
      %p157 = scmp.eq.s32.totalorder %s35, 1
      %p158 = scmp.ne.s32.totalorder %s153, %s155
      %p159 = scmp.eq.s32.totalorder %s35, 0
      %p160 = por %p158, %p159
      %p161 = scmp.ne.s32.totalorder %s153, %s155
      %p162 = scmp.eq.s32.totalorder %s40, 1
      %p163 = por %p161, %p162
      %p164 = scmp.ne.s32.totalorder %s155, %s156
      %p165 = scmp.eq.s32.totalorder %s40, 0
      %p166 = por %p164, %p165
      %p167 = scmp.ne.s32.totalorder %s155, %s156
      %p168 = scmp.eq.s32.totalorder %s41, 1
      %p169 = por %p167, %p168
      %p171 = scmp.ne.s32.totalorder %s156, %s170
      %p172 = scmp.eq.s32.totalorder %s41, 0
      %p173 = por %p171, %p172
      %s175 = sadd.s32 %s174, 1
      %p178 = scmp.eq.s32.totalorder %s35, 1
      %p179 = scmp.ne.s32.totalorder %s174, %s176
      %p180 = scmp.eq.s32.totalorder %s35, 0
      %p181 = por %p179, %p180
      %p182 = scmp.ne.s32.totalorder %s174, %s176
      %p183 = scmp.eq.s32.totalorder %s40, 1
      %p184 = por %p182, %p183
      %p185 = scmp.ne.s32.totalorder %s176, %s177
      %p186 = scmp.eq.s32.totalorder %s40, 0
      %p187 = por %p185, %p186
      %p188 = scmp.ne.s32.totalorder %s176, %s177
      %p189 = scmp.eq.s32.totalorder %s41, 1
      %p190 = por %p188, %p189
      %p192 = scmp.ne.s32.totalorder %s177, %s191
      %p193 = scmp.eq.s32.totalorder %s41, 0
      %p194 = por %p192, %p193
      %s196 = sadd.s32 %s195, 1
      %p199 = scmp.eq.s32.totalorder %s35, 1
      %p200 = scmp.ne.s32.totalorder %s195, %s197
      %p201 = scmp.eq.s32.totalorder %s35, 0
      %p202 = por %p200, %p201
      %p203 = scmp.ne.s32.totalorder %s195, %s197
      %p204 = scmp.eq.s32.totalorder %s40, 1
      %p205 = por %p203, %p204
      %p206 = scmp.ne.s32.totalorder %s197, %s198
      %p207 = scmp.eq.s32.totalorder %s40, 0
      %p208 = por %p206, %p207
      %p209 = scmp.ne.s32.totalorder %s197, %s198
      %p210 = scmp.eq.s32.totalorder %s41, 1
      %p211 = por %p209, %p210
      %p213 = scmp.ne.s32.totalorder %s198, %s212
      %p214 = scmp.eq.s32.totalorder %s41, 0
      %p215 = por %p213, %p214
      %s217 = sadd.s32 %s216, 1
      %p220 = scmp.eq.s32.totalorder %s35, 1
      %p221 = scmp.ne.s32.totalorder %s216, %s218
      %p222 = scmp.eq.s32.totalorder %s35, 0
      %p223 = por %p221, %p222
      %p224 = scmp.ne.s32.totalorder %s216, %s218
      %p225 = scmp.eq.s32.totalorder %s40, 1
      %p226 = por %p224, %p225
      %p227 = scmp.ne.s32.totalorder %s218, %s219
      %p228 = scmp.eq.s32.totalorder %s40, 0
      %p229 = por %p227, %p228
      %p230 = scmp.ne.s32.totalorder %s218, %s219
      %p231 = scmp.eq.s32.totalorder %s41, 1
      %p232 = por %p230, %p231
      %p234 = scmp.ne.s32.totalorder %s219, %s233
      %p235 = scmp.eq.s32.totalorder %s41, 0
      %p236 = por %p234, %p235
      %s238 = sadd.s32 %s237, 1
      %p241 = scmp.eq.s32.totalorder %s35, 1
      %p242 = scmp.ne.s32.totalorder %s237, %s239
      %p243 = scmp.eq.s32.totalorder %s35, 0
      %p244 = por %p242, %p243
      %p245 = scmp.ne.s32.totalorder %s237, %s239
      %p246 = scmp.eq.s32.totalorder %s40, 1
      %p247 = por %p245, %p246
      %p248 = scmp.ne.s32.totalorder %s239, %s240
      %p249 = scmp.eq.s32.totalorder %s40, 0
      %p250 = por %p248, %p249
      %p251 = scmp.ne.s32.totalorder %s239, %s240
      %p252 = scmp.eq.s32.totalorder %s41, 1
      %p253 = por %p251, %p252
      %p255 = scmp.ne.s32.totalorder %s240, %s254
      %p256 = scmp.eq.s32.totalorder %s41, 0
      %p257 = por %p255, %p256
      %s259 = sadd.s32 %s258, 1
      %p262 = scmp.eq.s32.totalorder %s35, 1
      %p263 = scmp.ne.s32.totalorder %s258, %s260
      %p264 = scmp.eq.s32.totalorder %s35, 0
      %p265 = por %p263, %p264
      %p266 = scmp.ne.s32.totalorder %s258, %s260
      %p267 = scmp.eq.s32.totalorder %s40, 1
      %p268 = por %p266, %p267
      %p269 = scmp.ne.s32.totalorder %s260, %s261
      %p270 = scmp.eq.s32.totalorder %s40, 0
      %p271 = por %p269, %p270
      %p272 = scmp.ne.s32.totalorder %s260, %s261
      %p273 = scmp.eq.s32.totalorder %s41, 1
      %p274 = por %p272, %p273
      %p276 = scmp.ne.s32.totalorder %s261, %s275
      %p277 = scmp.eq.s32.totalorder %s41, 0
      %p278 = por %p276, %p277
      %s280 = sadd.s32 %s279, 1
      %p283 = scmp.eq.s32.totalorder %s35, 1
      %p284 = scmp.ne.s32.totalorder %s279, %s281
      %p285 = scmp.eq.s32.totalorder %s35, 0
      %p286 = por %p284, %p285
      %p287 = scmp.ne.s32.totalorder %s279, %s281
      %p288 = scmp.eq.s32.totalorder %s40, 1
      %p289 = por %p287, %p288
      %p290 = scmp.ne.s32.totalorder %s281, %s282
      %p291 = scmp.eq.s32.totalorder %s40, 0
      %p292 = por %p290, %p291
      %p293 = scmp.ne.s32.totalorder %s281, %s282
      %p294 = scmp.eq.s32.totalorder %s41, 1
      %p295 = por %p293, %p294
      %p297 = scmp.ne.s32.totalorder %s282, %s296
      %p298 = scmp.eq.s32.totalorder %s41, 0
      %p299 = por %p297, %p298
      %s301 = sadd.s32 %s300, 1
      %p304 = scmp.eq.s32.totalorder %s35, 1
      %p305 = scmp.ne.s32.totalorder %s300, %s302
      %p306 = scmp.eq.s32.totalorder %s35, 0
      %p307 = por %p305, %p306
      %p308 = scmp.ne.s32.totalorder %s300, %s302
      %p309 = scmp.eq.s32.totalorder %s40, 1
      %p310 = por %p308, %p309
      %p311 = scmp.ne.s32.totalorder %s302, %s303
      %p312 = scmp.eq.s32.totalorder %s40, 0
      %p313 = por %p311, %p312
      %p314 = scmp.ne.s32.totalorder %s302, %s303
      %p315 = scmp.eq.s32.totalorder %s41, 1
      %p316 = por %p314, %p315
      %p318 = scmp.ne.s32.totalorder %s303, %s317
      %p319 = scmp.eq.s32.totalorder %s41, 0
      %p320 = por %p318, %p319
      %s322 = sadd.s32 %s321, 1
      %p325 = scmp.eq.s32.totalorder %s35, 1
      %p326 = scmp.ne.s32.totalorder %s321, %s323
      %p327 = scmp.eq.s32.totalorder %s35, 0
      %p328 = por %p326, %p327
      %p329 = scmp.ne.s32.totalorder %s321, %s323
      %p330 = scmp.eq.s32.totalorder %s40, 1
      %p331 = por %p329, %p330
      %p332 = scmp.ne.s32.totalorder %s323, %s324
      %p333 = scmp.eq.s32.totalorder %s40, 0
      %p334 = por %p332, %p333
      %p335 = scmp.ne.s32.totalorder %s323, %s324
      %p336 = scmp.eq.s32.totalorder %s41, 1
      %p337 = por %p335, %p336
      %p339 = scmp.ne.s32.totalorder %s324, %s338
      %p340 = scmp.eq.s32.totalorder %s41, 0
      %p341 = por %p339, %p340
      %s343 = sadd.s32 %s342, 1
      %p346 = scmp.eq.s32.totalorder %s35, 1
      %p347 = scmp.ne.s32.totalorder %s342, %s344
      %p348 = scmp.eq.s32.totalorder %s35, 0
      %p349 = por %p347, %p348
      %p350 = scmp.ne.s32.totalorder %s342, %s344
      %p351 = scmp.eq.s32.totalorder %s40, 1
      %p352 = por %p350, %p351
      %p353 = scmp.ne.s32.totalorder %s344, %s345
      %p354 = scmp.eq.s32.totalorder %s40, 0
      %p355 = por %p353, %p354
      %p356 = scmp.ne.s32.totalorder %s344, %s345
      %p357 = scmp.eq.s32.totalorder %s41, 1
      %p358 = por %p356, %p357
      %p360 = scmp.ne.s32.totalorder %s345, %s359
      %p361 = scmp.eq.s32.totalorder %s41, 0
      %p362 = por %p360, %p361
      %s364 = sadd.s32 %s363, 1
      %p367 = scmp.eq.s32.totalorder %s35, 1
      %p368 = scmp.ne.s32.totalorder %s363, %s365
      %p369 = scmp.eq.s32.totalorder %s35, 0
      %p370 = por %p368, %p369
      %p371 = scmp.ne.s32.totalorder %s363, %s365
      %p372 = scmp.eq.s32.totalorder %s40, 1
      %p373 = por %p371, %p372
      %p374 = scmp.ne.s32.totalorder %s365, %s366
      %p375 = scmp.eq.s32.totalorder %s40, 0
      %p376 = por %p374, %p375
      %p377 = scmp.ne.s32.totalorder %s365, %s366
      %p378 = scmp.eq.s32.totalorder %s41, 1
      %p379 = por %p377, %p378
      %p381 = scmp.ne.s32.totalorder %s366, %s380
      %p382 = scmp.eq.s32.totalorder %s41, 0
      %p383 = por %p381, %p382
      %s385 = sadd.s32 %s384, 1
      %p388 = scmp.eq.s32.totalorder %s35, 1
      %p389 = scmp.ne.s32.totalorder %s384, %s386
      %p390 = scmp.eq.s32.totalorder %s35, 0
      %p391 = por %p389, %p390
      %p392 = scmp.ne.s32.totalorder %s384, %s386
      %p393 = scmp.eq.s32.totalorder %s40, 1
      %p394 = por %p392, %p393
      %p395 = scmp.ne.s32.totalorder %s386, %s387
      %p396 = scmp.eq.s32.totalorder %s40, 0
      %p397 = por %p395, %p396
      %p398 = scmp.ne.s32.totalorder %s386, %s387
      %p399 = scmp.eq.s32.totalorder %s41, 1
      %p400 = por %p398, %p399
      %p402 = scmp.ne.s32.totalorder %s387, %s401
      %p403 = scmp.eq.s32.totalorder %s41, 0
      %p404 = por %p402, %p403
      %s406 = sadd.s32 %s405, 1
      %p409 = scmp.eq.s32.totalorder %s35, 1
      %p410 = scmp.ne.s32.totalorder %s405, %s407
      %p411 = scmp.eq.s32.totalorder %s35, 0
      %p412 = por %p410, %p411
      %p413 = scmp.ne.s32.totalorder %s405, %s407
      %p414 = scmp.eq.s32.totalorder %s40, 1
      %p415 = por %p413, %p414
      %p416 = scmp.ne.s32.totalorder %s407, %s408
      %p417 = scmp.eq.s32.totalorder %s40, 0
      %p418 = por %p416, %p417
      %p419 = scmp.ne.s32.totalorder %s407, %s408
      %p420 = scmp.eq.s32.totalorder %s41, 1
      %p421 = por %p419, %p420
      %p423 = scmp.ne.s32.totalorder %s408, %s422
      %p424 = scmp.eq.s32.totalorder %s41, 0
      %p425 = por %p423, %p424
      %s426 = ssub.s32 %s35, %s42
      %p427 = scmp.eq.s32.totalorder %s426, 0
      %s429 = sadd.s32 %s428, 1
      %s430 = scalar_select %p427, %s428, %s429
      %p433 = pneg %p427
      %p434 = scmp.eq.s32.totalorder %s35, 1
      %p435 = por %p433, %p434
      %p436 = scmp.ne.s32.totalorder %s428, %s431
      %p437 = scmp.eq.s32.totalorder %s35, 0
      %p438 = por %p436, %p437
      %p439 = scmp.ne.s32.totalorder %s428, %s431
      %p440 = scmp.eq.s32.totalorder %s40, 1
      %p441 = por %p439, %p440
      %p442 = scmp.ne.s32.totalorder %s431, %s432
      %p443 = scmp.eq.s32.totalorder %s40, 0
      %p444 = por %p442, %p443
      %p445 = scmp.ne.s32.totalorder %s431, %s432
      %p446 = scmp.eq.s32.totalorder %s41, 1
      %p447 = por %p445, %p446
      %p449 = scmp.ne.s32.totalorder %s432, %s448
      %p450 = scmp.eq.s32.totalorder %s41, 0
      %p451 = por %p449, %p450
      %p452 = scmp.le.s32.totalorder 1, %s35
      %p453 = scmp.lt.s32.totalorder %s35, 3
      %p454 = pnand %p452, %p453
      %p455 = pneg %p454
      // Predicated region
      $region9: #{tpu_custom_call.1} parent=5 // pred_check
        _
      $region10: #{tpu_custom_call.1} parent=5 // pred_check_branch
        %457 = sbr.rel (%p454) target = $region12
      $region11: #{tpu_custom_call.1} parent=5 // pred_region
        %s458 = ssub.s32 %s35, 1
        // Predicated region
        $region13: #{tpu_custom_call.1} parent=11 // pred_check
          %p459 = pneg %p82
        $region14: #{tpu_custom_call.1} parent=11 // pred_check_branch
          %461 = sbr.rel (%p459) target = $region16
        $region15: #{tpu_custom_call.1} parent=11 // pred_region
          %s463 = ssub.s32 256, 256
          %464 = vsyncadd [#allocation7], %s463
          %s465 = sshll.u32 [#allocation6], 4
          %s466 = int_to_ptr.vmem [resolvable:$true] %s465
          %471 = dma.hbm_to_vmem [thread:$0]  %s1, 256, %s466, [#allocation7], 128, 128, 8
        $region16: #{tpu_custom_call.1} parent=11 // pred_fallthru
          _
        // Predicated region
        $region17: #{tpu_custom_call.1} parent=11 // pred_check
          %p472 = pneg %p103
        $region18: #{tpu_custom_call.1} parent=11 // pred_check_branch
          %474 = sbr.rel (%p472) target = $region20
        $region19: #{tpu_custom_call.1} parent=11 // pred_region
          %s476 = ssub.s32 2048, 2048
          %477 = vsyncadd [#allocation7], %s476
          %s478 = sshll.u32 [#allocation8], 4
          %s479 = int_to_ptr.vmem [resolvable:$true] %s478
          %484 = dma.hbm_to_vmem [thread:$0]  %s2, 2048, %s479, [#allocation7], 128, 128, 8
        $region20: #{tpu_custom_call.1} parent=11 // pred_fallthru
          _
        // Predicated region
        $region21: #{tpu_custom_call.1} parent=11 // pred_check
          %p485 = pneg %p124
        $region22: #{tpu_custom_call.1} parent=11 // pred_check_branch
          %487 = sbr.rel (%p485) target = $region24
        $region23: #{tpu_custom_call.1} parent=11 // pred_region
          %s489 = ssub.s32 4096, 4096
          %490 = vsyncadd [#allocation10], %s489
          %s491 = sshll.u32 [#allocation9], 4
          %s492 = int_to_ptr.vmem [resolvable:$true] %s491
          %497 = dma.hbm_to_vmem [thread:$0]  %s3, 4096, %s492, [#allocation10], 256, 256, 16
        $region24: #{tpu_custom_call.1} parent=11 // pred_fallthru
          _
        // Predicated region
        $region25: #{tpu_custom_call.1} parent=11 // pred_check
          %p498 = pneg %p145
        $region26: #{tpu_custom_call.1} parent=11 // pred_check_branch
          %500 = sbr.rel (%p498) target = $region28
        $region27: #{tpu_custom_call.1} parent=11 // pred_region
          %s502 = ssub.s32 2048, 2048
          %503 = vsyncadd [#allocation10], %s502
          %s504 = sshll.u32 [#allocation11], 4
          %s505 = int_to_ptr.vmem [resolvable:$true] %s504
          %510 = dma.hbm_to_vmem [thread:$0]  %s4, 2048, %s505, [#allocation10], 128, 128, 8
        $region28: #{tpu_custom_call.1} parent=11 // pred_fallthru
          _
        // Predicated region
        $region29: #{tpu_custom_call.1} parent=11 // pred_check
          %p511 = pneg %p166
        $region30: #{tpu_custom_call.1} parent=11 // pred_check_branch
          %513 = sbr.rel (%p511) target = $region32
        $region31: #{tpu_custom_call.1} parent=11 // pred_region
          _
        $region32: #{tpu_custom_call.1} parent=11 // pred_fallthru
          _
        // Predicated region
        $region33: #{tpu_custom_call.1} parent=11 // pred_check
          %p514 = pneg %p187
        $region34: #{tpu_custom_call.1} parent=11 // pred_check_branch
          %516 = sbr.rel (%p514) target = $region36
        $region35: #{tpu_custom_call.1} parent=11 // pred_region
          %s518 = ssub.s32 1024, 1024
          %519 = vsyncadd [#allocation13], %s518
          %s520 = sshll.u32 [#allocation12], 4
          %s521 = int_to_ptr.vmem [resolvable:$true] %s520
          %526 = dma.hbm_to_vmem [thread:$0]  %s6, 1024, %s521, [#allocation13], 128, 128, 8
        $region36: #{tpu_custom_call.1} parent=11 // pred_fallthru
          _
        // Predicated region
        $region37: #{tpu_custom_call.1} parent=11 // pred_check
          %p527 = pneg %p208
        $region38: #{tpu_custom_call.1} parent=11 // pred_check_branch
          %529 = sbr.rel (%p527) target = $region40
        $region39: #{tpu_custom_call.1} parent=11 // pred_region
          _
        $region40: #{tpu_custom_call.1} parent=11 // pred_fallthru
          _
        // Predicated region
        $region41: #{tpu_custom_call.1} parent=11 // pred_check
          %p530 = pneg %p229
        $region42: #{tpu_custom_call.1} parent=11 // pred_check_branch
          %532 = sbr.rel (%p530) target = $region44
        $region43: #{tpu_custom_call.1} parent=11 // pred_region
          _
        $region44: #{tpu_custom_call.1} parent=11 // pred_fallthru
          _
        // Predicated region
        $region45: #{tpu_custom_call.1} parent=11 // pred_check
          %p533 = pneg %p250
        $region46: #{tpu_custom_call.1} parent=11 // pred_check_branch
          %535 = sbr.rel (%p533) target = $region48
        $region47: #{tpu_custom_call.1} parent=11 // pred_region
          _
        $region48: #{tpu_custom_call.1} parent=11 // pred_fallthru
          _
        // Predicated region
        $region49: #{tpu_custom_call.1} parent=11 // pred_check
          %p536 = pneg %p271
        $region50: #{tpu_custom_call.1} parent=11 // pred_check_branch
          %538 = sbr.rel (%p536) target = $region52
        $region51: #{tpu_custom_call.1} parent=11 // pred_region
          %s540 = ssub.s32 2048, 2048
          %541 = vsyncadd [#allocation13], %s540
          %s542 = sshll.u32 [#allocation14], 4
          %s543 = int_to_ptr.vmem [resolvable:$true] %s542
          %548 = dma.hbm_to_vmem [thread:$0]  %s10, 2048, %s543, [#allocation13], 128, 128, 8
        $region52: #{tpu_custom_call.1} parent=11 // pred_fallthru
          _
        // Predicated region
        $region53: #{tpu_custom_call.1} parent=11 // pred_check
          %p549 = pneg %p292
        $region54: #{tpu_custom_call.1} parent=11 // pred_check_branch
          %551 = sbr.rel (%p549) target = $region56
        $region55: #{tpu_custom_call.1} parent=11 // pred_region
          %s553 = ssub.s32 4096, 4096
          %554 = vsyncadd [#allocation16], %s553
          %s555 = sshll.u32 [#allocation15], 4
          %s556 = int_to_ptr.vmem [resolvable:$true] %s555
          %561 = dma.hbm_to_vmem [thread:$0]  %s11, 4096, %s556, [#allocation16], 256, 256, 16
        $region56: #{tpu_custom_call.1} parent=11 // pred_fallthru
          _
        // Predicated region
        $region57: #{tpu_custom_call.1} parent=11 // pred_check
          %p562 = pneg %p313
        $region58: #{tpu_custom_call.1} parent=11 // pred_check_branch
          %564 = sbr.rel (%p562) target = $region60
        $region59: #{tpu_custom_call.1} parent=11 // pred_region
          %s566 = ssub.s32 2048, 2048
          %567 = vsyncadd [#allocation16], %s566
          %s568 = sshll.u32 [#allocation17], 4
          %s569 = int_to_ptr.vmem [resolvable:$true] %s568
          %574 = dma.hbm_to_vmem [thread:$0]  %s12, 2048, %s569, [#allocation16], 128, 128, 8
        $region60: #{tpu_custom_call.1} parent=11 // pred_fallthru
          _
        // Predicated region
        $region61: #{tpu_custom_call.1} parent=11 // pred_check
          %p575 = pneg %p334
        $region62: #{tpu_custom_call.1} parent=11 // pred_check_branch
          %577 = sbr.rel (%p575) target = $region64
        $region63: #{tpu_custom_call.1} parent=11 // pred_region
          _
        $region64: #{tpu_custom_call.1} parent=11 // pred_fallthru
          _
        // Predicated region
        $region65: #{tpu_custom_call.1} parent=11 // pred_check
          %p578 = pneg %p355
        $region66: #{tpu_custom_call.1} parent=11 // pred_check_branch
          %580 = sbr.rel (%p578) target = $region68
        $region67: #{tpu_custom_call.1} parent=11 // pred_region
          %s582 = ssub.s32 1024, 1024
          %583 = vsyncadd [#allocation19], %s582
          %s584 = sshll.u32 [#allocation18], 4
          %s585 = int_to_ptr.vmem [resolvable:$true] %s584
          %590 = dma.hbm_to_vmem [thread:$0]  %s14, 1024, %s585, [#allocation19], 128, 128, 8
        $region68: #{tpu_custom_call.1} parent=11 // pred_fallthru
          _
        // Predicated region
        $region69: #{tpu_custom_call.1} parent=11 // pred_check
          %p591 = pneg %p376
        $region70: #{tpu_custom_call.1} parent=11 // pred_check_branch
          %593 = sbr.rel (%p591) target = $region72
        $region71: #{tpu_custom_call.1} parent=11 // pred_region
          _
        $region72: #{tpu_custom_call.1} parent=11 // pred_fallthru
          _
        // Predicated region
        $region73: #{tpu_custom_call.1} parent=11 // pred_check
          %p594 = pneg %p397
        $region74: #{tpu_custom_call.1} parent=11 // pred_check_branch
          %596 = sbr.rel (%p594) target = $region76
        $region75: #{tpu_custom_call.1} parent=11 // pred_region
          _
        $region76: #{tpu_custom_call.1} parent=11 // pred_fallthru
          _
        // Predicated region
        $region77: #{tpu_custom_call.1} parent=11 // pred_check
          %p597 = pneg %p418
        $region78: #{tpu_custom_call.1} parent=11 // pred_check_branch
          %599 = sbr.rel (%p597) target = $region80
        $region79: #{tpu_custom_call.1} parent=11 // pred_region
          _
        $region80: #{tpu_custom_call.1} parent=11 // pred_fallthru
          _
      $region12: #{tpu_custom_call.1} parent=5 // pred_fallthru
        _
      %p600 = scmp.lt.s32.totalorder %s35, 2
      // Predicated region
      $region81: #{tpu_custom_call.1} parent=5 // pred_check
        %p601 = pneg %p600
      $region82: #{tpu_custom_call.1} parent=5 // pred_check_branch
        %603 = sbr.rel (%p601) target = $region84
      $region83: #{tpu_custom_call.1} parent=5 // pred_region
        // Predicated region
        $region85: #{tpu_custom_call.1} parent=83 // pred_check
          %p604 = pneg %p55
        $region86: #{tpu_custom_call.1} parent=83 // pred_check_branch
          %606 = sbr.rel (%p604) target = $region88
        $region87: #{tpu_custom_call.1} parent=83 // pred_region
          %s607 = sand.u32 %s45, 1
          %s608 = scalar_lea.sflag [#allocation4], %s607
          %s609 = sand.u32 %s45, 1
          %s610 = smul.addr %s609, 64
          %s611 = scalar_lea.vmem [#allocation3], %s610
          %s612 = smul.u32 8, %s35
          %s614 = ssub.s32 1024, 1024
          %615 = vsyncadd %s608, %s614
          %s616 = smul.addr %s612, 128
          %s617 = scalar_lea.hbm %s0, %s616
          %s618 = sshll.u32 %s611, 4
          %s619 = int_to_ptr.vmem [resolvable:$true] %s618
          %624 = dma.hbm_to_vmem [thread:$0]  %s617, 1024, %s619, %s608, 128, 128, 8
        $region88: #{tpu_custom_call.1} parent=83 // pred_fallthru
          _
      $region84: #{tpu_custom_call.1} parent=5 // pred_fallthru
        _
      %p625 = scmp.le.s32.totalorder 1, %s35
      %p626 = scmp.lt.s32.totalorder %s35, 3
      %p627 = pnand %p625, %p626
      %p628 = pneg %p627
      // Predicated region
      $region89: #{tpu_custom_call.1} parent=5 // pred_check
        _
      $region90: #{tpu_custom_call.1} parent=5 // pred_check_branch
        %630 = sbr.rel (%p627) target = $region92
      $region91: #{tpu_custom_call.1} parent=5 // pred_region
        %s631 = ssub.s32 %s35, 1
        %s632 = sand.u32 %s48, 1
        %s633 = scalar_lea.sflag [#allocation4], %s632
        %s634 = sand.u32 %s48, 1
        %s635 = smul.addr %s634, 64
        %s636 = scalar_lea.vmem [#allocation3], %s635
        // Predicated region
        $region93: #{tpu_custom_call.1} parent=91 // pred_check
          %p637 = pneg %p61
        $region94: #{tpu_custom_call.1} parent=91 // pred_check_branch
          %639 = sbr.rel (%p637) target = $region96
        $region95: #{tpu_custom_call.1} parent=91 // pred_region
          %640 = dma.done %s633, 1024
        $region96: #{tpu_custom_call.1} parent=91 // pred_fallthru
          _
        // Predicated region
        $region97: #{tpu_custom_call.1} parent=91 // pred_check
          %p641 = pneg %p82
        $region98: #{tpu_custom_call.1} parent=91 // pred_check_branch
          %643 = sbr.rel (%p641) target = $region100
        $region99: #{tpu_custom_call.1} parent=91 // pred_region
          %644 = dma.done [#allocation7], 256
        $region100: #{tpu_custom_call.1} parent=91 // pred_fallthru
          _
        // Predicated region
        $region101: #{tpu_custom_call.1} parent=91 // pred_check
          %p645 = pneg %p103
        $region102: #{tpu_custom_call.1} parent=91 // pred_check_branch
          %647 = sbr.rel (%p645) target = $region104
        $region103: #{tpu_custom_call.1} parent=91 // pred_region
          %648 = dma.done [#allocation7], 2048
        $region104: #{tpu_custom_call.1} parent=91 // pred_fallthru
          _
        // Predicated region
        $region105: #{tpu_custom_call.1} parent=91 // pred_check
          %p649 = pneg %p124
        $region106: #{tpu_custom_call.1} parent=91 // pred_check_branch
          %651 = sbr.rel (%p649) target = $region108
        $region107: #{tpu_custom_call.1} parent=91 // pred_region
          %652 = dma.done [#allocation10], 4096
        $region108: #{tpu_custom_call.1} parent=91 // pred_fallthru
          _
        // Predicated region
        $region109: #{tpu_custom_call.1} parent=91 // pred_check
          %p653 = pneg %p145
        $region110: #{tpu_custom_call.1} parent=91 // pred_check_branch
          %655 = sbr.rel (%p653) target = $region112
        $region111: #{tpu_custom_call.1} parent=91 // pred_region
          %656 = dma.done [#allocation10], 2048
        $region112: #{tpu_custom_call.1} parent=91 // pred_fallthru
          _
        // Predicated region
        $region113: #{tpu_custom_call.1} parent=91 // pred_check
          %p657 = pneg %p187
        $region114: #{tpu_custom_call.1} parent=91 // pred_check_branch
          %659 = sbr.rel (%p657) target = $region116
        $region115: #{tpu_custom_call.1} parent=91 // pred_region
          %660 = dma.done [#allocation13], 1024
        $region116: #{tpu_custom_call.1} parent=91 // pred_fallthru
          _
        // Predicated region
        $region117: #{tpu_custom_call.1} parent=91 // pred_check
          %p661 = pneg %p271
        $region118: #{tpu_custom_call.1} parent=91 // pred_check_branch
          %663 = sbr.rel (%p661) target = $region120
        $region119: #{tpu_custom_call.1} parent=91 // pred_region
          %664 = dma.done [#allocation13], 2048
        $region120: #{tpu_custom_call.1} parent=91 // pred_fallthru
          _
        // Predicated region
        $region121: #{tpu_custom_call.1} parent=91 // pred_check
          %p665 = pneg %p292
        $region122: #{tpu_custom_call.1} parent=91 // pred_check_branch
          %667 = sbr.rel (%p665) target = $region124
        $region123: #{tpu_custom_call.1} parent=91 // pred_region
          %668 = dma.done [#allocation16], 4096
        $region124: #{tpu_custom_call.1} parent=91 // pred_fallthru
          _
        // Predicated region
        $region125: #{tpu_custom_call.1} parent=91 // pred_check
          %p669 = pneg %p313
        $region126: #{tpu_custom_call.1} parent=91 // pred_check_branch
          %671 = sbr.rel (%p669) target = $region128
        $region127: #{tpu_custom_call.1} parent=91 // pred_region
          %672 = dma.done [#allocation16], 2048
        $region128: #{tpu_custom_call.1} parent=91 // pred_fallthru
          _
        // Predicated region
        $region129: #{tpu_custom_call.1} parent=91 // pred_check
          %p673 = pneg %p355
        $region130: #{tpu_custom_call.1} parent=91 // pred_check_branch
          %675 = sbr.rel (%p673) target = $region132
        $region131: #{tpu_custom_call.1} parent=91 // pred_region
          %676 = dma.done [#allocation19], 1024
        $region132: #{tpu_custom_call.1} parent=91 // pred_fallthru
          _
        %s677 = sand.u32 %s48, 1
        %s678 = scalar_lea.sflag [#allocation4], %s677
        %s679 = sand.u32 %s48, 1
        %s680 = smul.addr %s679, 64
        %s681 = scalar_lea.vmem [#allocation3], %s680
        %p682 = pneg %p61
        %p683 = pneg %p58
        %p684 = pneg %p82
        %p685 = pneg %p79
        %p686 = pneg %p103
        %p687 = pneg %p100
        %p688 = pneg %p124
        %p689 = pneg %p121
        %p690 = pneg %p145
        %p691 = pneg %p142
        %p692 = pneg %p166
        %p693 = pneg %p163
        %p694 = pneg %p187
        %p695 = pneg %p184
        %p696 = pneg %p208
        %p697 = pneg %p205
        %p698 = pneg %p229
        %p699 = pneg %p226
        %p700 = pneg %p250
        %p701 = pneg %p247
        %p702 = pneg %p271
        %p703 = pneg %p268
        %p704 = pneg %p292
        %p705 = pneg %p289
        %p706 = pneg %p313
        %p707 = pneg %p310
        %p708 = pneg %p334
        %p709 = pneg %p331
        %p710 = pneg %p355
        %p711 = pneg %p352
        %p712 = pneg %p376
        %p713 = pneg %p373
        %p714 = pneg %p397
        %p715 = pneg %p394
        %p716 = pneg %p418
        %p717 = pneg %p415
        %p718 = pneg %p444
        %p719 = pneg %p441
        %s720 = sand.u32 %s431, 1
        %s721 = scalar_lea.sflag [#allocation5], %s720
        %s722 = sand.u32 %s431, 1
        %s723 = smul.addr %s722, 64
        %s724 = scalar_lea.vmem [#allocation20], %s723
        %s725 = smul.u32 8, %s40
        %s726 = smul.u32 8, %s40
        %v727 = vld [vmem:[%s636] sm:$0xff]
        %v728 = vld [vmem:[%s636 + $0x8] sm:$0xff]
        %v729 = vld [vmem:[%s636 + $0x10] sm:$0xff]
        %v730 = vld [vmem:[%s636 + $0x18] sm:$0xff]
        %v731 = vld [vmem:[%s636 + $0x20] sm:$0xff]
        %v732 = vld [vmem:[%s636 + $0x28] sm:$0xff]
        %v733 = vld [vmem:[%s636 + $0x30] sm:$0xff]
        %v734 = vld [vmem:[%s636 + $0x38] sm:$0xff]
        %v735 = vld [vmem:[#allocation6] sm:$0xff]
        %v736 = vld [vmem:[#allocation6 + $0x8] sm:$0xff]
        %v737 = vld [vmem:[#allocation12] sm:$0xff]
        %v738 = vld [vmem:[#allocation12 + $0x8] sm:$0xff]
        %v739 = vld [vmem:[#allocation12 + $0x10] sm:$0xff]
        %v740 = vld [vmem:[#allocation12 + $0x18] sm:$0xff]
        %v741 = vld [vmem:[#allocation12 + $0x20] sm:$0xff]
        %v742 = vld [vmem:[#allocation12 + $0x28] sm:$0xff]
        %v743 = vld [vmem:[#allocation12 + $0x30] sm:$0xff]
        %v744 = vld [vmem:[#allocation12 + $0x38] sm:$0xff]
        %v745 = vld [vmem:[%s7] sm:$0x1]
        %v746 = vld [vmem:[%s8] sm:$0x1]
        %v747 = vld [vmem:[%s9] sm:$0x1]
        %v748 = vmul.f32 %v727, %v737
        %v749 = vmul.f32 %v728, %v738
        %v750 = vmul.f32 %v729, %v739
        %v751 = vmul.f32 %v730, %v740
        %v752 = vmul.f32 %v731, %v741
        %v753 = vmul.f32 %v732, %v742
        %v754 = vmul.f32 %v733, %v743
        %v755 = vmul.f32 %v734, %v744
        %v757 = vlaneseq
        %v758 = vshrl.u32 %v757, 7
        %v759 = vsub.s32 0, %v758
        %v760 = vrot.slane %v745, %v759
        %vm762 = vcmask 523264
        %v764 = vsel %vm762, %v735, 0
        %v767 = vsel %vm762, %v736, 0
        %769 = vmatprep.subr.mxu0 0.0
        %770 = vmatpush1.msra.mxu0 0.0
        %771 = vmatprep.subr.mxu0 0.0
        %772 = vmatpush1.msra.mxu0 0.0
        %773 = vmatprep.subr.mxu0 0.0
        %774 = vmatpush1.msra.mxu0 0.0
        %775 = vmatprep.subr.mxu0 0.0
        %776 = vmatpush1.msra.mxu0 0.0
        %777 = vmatprep.subr.mxu0 0.0
        %778 = vmatpush1.msra.mxu0 0.0
        %779 = vmatprep.subr.mxu0 0.0
        %780 = vmatpush1.msra.mxu0 0.0
        %781 = vmatprep.subr.mxu0 0.0
        %782 = vmatpush1.msra.mxu0 0.0
        %783 = vmatprep.subr.mxu0 0.0
        %784 = vmatpush1.msra.mxu0 0.0
        %785 = vmatprep.subr.mxu0 0.0
        %786 = vmatpush1.msra.mxu0 %v755
        %787 = vmatprep.subr.mxu0 0.0
        %788 = vmatpush1.msra.mxu0 %v754
        %789 = vmatprep.subr.mxu0 0.0
        %790 = vmatpush1.msra.mxu0 %v753
        %791 = vmatprep.subr.mxu0 0.0
        %792 = vmatpush1.msra.mxu0 %v752
        %793 = vmatprep.subr.mxu0 0.0
        %794 = vmatpush1.msra.mxu0 %v751
        %795 = vmatprep.subr.mxu0 0.0
        %796 = vmatpush1.msra.mxu0 %v750
        %797 = vmatprep.subr.mxu0 0.0
        %798 = vmatpush1.msra.mxu0 %v749
        %799 = vmatprep.subr.mxu0 0.0
        %800 = vmatpush1.msra.mxu0 %v748
        %801 = vmatprep.subr.mxu0 0.0
        %802 = vmatpush2.msra.mxu0 0.0
        %803 = vmatprep.subr.mxu0 0.0
        %804 = vmatpush2.msra.mxu0 0.0
        %805 = vmatprep.subr.mxu0 0.0
        %806 = vmatpush2.msra.mxu0 0.0
        %807 = vmatprep.subr.mxu0 0.0
        %808 = vmatpush2.msra.mxu0 0.0
        %809 = vmatprep.subr.mxu0 0.0
        %810 = vmatpush2.msra.mxu0 0.0
        %811 = vmatprep.subr.mxu0 0.0
        %812 = vmatpush2.msra.mxu0 0.0
        %813 = vmatprep.subr.mxu0 0.0
        %814 = vmatpush2.msra.mxu0 0.0
        %815 = vmatprep.subr.mxu0 0.0
        %816 = vmatpush2.msra.mxu0 0.0
        %817 = vmatprep.subr.mxu0 0.0
        %818 = vmatpush2.msra.mxu0 0.0
        %819 = vmatprep.subr.mxu0 0.0
        %820 = vmatpush2.msra.mxu0 0.0
        %821 = vmatprep.subr.mxu0 0.0
        %822 = vmatpush2.msra.mxu0 0.0
        %823 = vmatprep.subr.mxu0 0.0
        %824 = vmatpush2.msra.mxu0 0.0
        %825 = vmatprep.subr.mxu0 0.0
        %826 = vmatpush2.msra.mxu0 0.0
        %827 = vmatprep.subr.mxu0 0.0
        %828 = vmatpush2.msra.mxu0 0.0
        %829 = vmatprep.subr.mxu0 0.0
        %830 = vmatpush2.msra.mxu0 0.0
        %831 = vmatprep.subr.mxu0 0.0
        %832 = vmatpush2.msra.mxu0 0.0
        %833 = vmatprep.mubr.f32.mxu0 0.0
        %834 = vmatmul.mubr.f32.gmra.mxu0 %v764
        %v835 = vpop.f32.mrf.mxu0
        %v836 = vadd.f32 %v760, %v835
        %v837 = vpop.f32.mrf.mxu0
        %838 = vmatprep.mubr.f32.mxu0 0.0
        %839 = vmatmul.mubr.f32.gmra.mxu0 %v767
        %v840 = vpop.f32.mrf.mxu0
        %v841 = vadd.f32 %v760, %v840
        %v842 = vpop.f32.mrf.mxu0
        %843 = vdwg.mxu0
        %844 = vadd.xlane.f32.xlu0 %v836
        %v845 = vpop.xlane.xlu0 %844
        %846 = vadd.xlane.f32.xlu0 %v841
        %v847 = vpop.xlane.xlu0 %846
        %v848 = vmul.f32 %v845, 0.03125
        %v849 = vmul.f32 %v847, 0.03125
        %v850 = vmul.f32 %v836, %v836
        %v851 = vmul.f32 %v841, %v841
        %852 = vadd.xlane.f32.xlu0 %v850
        %v853 = vpop.xlane.xlu0 %852
        %854 = vadd.xlane.f32.xlu0 %v851
        %v855 = vpop.xlane.xlu0 %854
        %v856 = vmul.f32 %v853, 0.03125
        %v857 = vmul.f32 %v855, 0.03125
        %v858 = vmul.f32 %v848, %v848
        %v859 = vmul.f32 %v849, %v849
        %v860 = vsub.f32 %v856, %v858
        %v861 = vsub.f32 %v857, %v859
        %v862 = vsub.f32 %v836, %v848
        %v863 = vsub.f32 %v841, %v849
        %v864 = vadd.f32 %v860, 1e-05
        %v865 = vadd.f32 %v861, 1e-05
        %v866 = vrsqrt.pop %v864
        %v867 = vrsqrt.pop %v865
        %v868 = vmul.f32 %v862, %v866
        %v869 = vmul.f32 %v863, %v867
        %v871 = vlaneseq
        %v872 = vshrl.u32 %v871, 7
        %v873 = vsub.s32 0, %v872
        %v874 = vrot.slane %v746, %v873
        %v876 = vmul.f32 %v868, %v874
        %v877 = vmul.f32 %v869, %v874
        %v879 = vlaneseq
        %v880 = vshrl.u32 %v879, 7
        %v881 = vsub.s32 0, %v880
        %v882 = vrot.slane %v747, %v881
        %v884 = vadd.f32 %v876, %v882
        %v885 = vadd.f32 %v877, %v882
        %v886 = vmul.f32 %v884, 0.5
        %v887 = vmul.f32 %v885, 0.5
        %v888 = vmul.f32 %v884, 0.70710677
        %v889 = vmul.f32 %v885, 0.70710677
        %v890 = verf.f32.pop %v888
        %v891 = verf.f32.pop %v889
        %v892 = vadd.f32 %v890, 1.0
        %v893 = vadd.f32 %v891, 1.0
        %v894 = vmul.f32 %v886, %v892
        %v895 = vmul.f32 %v887, %v893
        %v896 = vld [vmem:[#allocation8] sm:$0xff]
        %v897 = vld [vmem:[#allocation8 + $0x8] sm:$0xff]
        %v898 = vld [vmem:[#allocation8 + $0x10] sm:$0xff]
        %v899 = vld [vmem:[#allocation8 + $0x18] sm:$0xff]
        %v900 = vld [vmem:[#allocation8 + $0x20] sm:$0xff]
        %v901 = vld [vmem:[#allocation8 + $0x28] sm:$0xff]
        %v902 = vld [vmem:[#allocation8 + $0x30] sm:$0xff]
        %v903 = vld [vmem:[#allocation8 + $0x38] sm:$0xff]
        %v904 = vld [vmem:[#allocation8 + $0x40] sm:$0xff]
        %v905 = vld [vmem:[#allocation8 + $0x48] sm:$0xff]
        %v906 = vld [vmem:[#allocation8 + $0x50] sm:$0xff]
        %v907 = vld [vmem:[#allocation8 + $0x58] sm:$0xff]
        %v908 = vld [vmem:[#allocation8 + $0x60] sm:$0xff]
        %v909 = vld [vmem:[#allocation8 + $0x68] sm:$0xff]
        %v910 = vld [vmem:[#allocation8 + $0x70] sm:$0xff]
        %v911 = vld [vmem:[#allocation8 + $0x78] sm:$0xff]
        %v912 = vld [vmem:[#allocation9] sm:$0xff]
        %v913 = vld [vmem:[#allocation9 + $0x8] sm:$0xff]
        %v914 = vld [vmem:[#allocation9 + $0x10] sm:$0xff]
        %v915 = vld [vmem:[#allocation9 + $0x18] sm:$0xff]
        %v916 = vld [vmem:[#allocation9 + $0x20] sm:$0xff]
        %v917 = vld [vmem:[#allocation9 + $0x28] sm:$0xff]
        %v918 = vld [vmem:[#allocation9 + $0x30] sm:$0xff]
        %v919 = vld [vmem:[#allocation9 + $0x38] sm:$0xff]
        %v920 = vld [vmem:[#allocation9 + $0x40] sm:$0xff]
        %v921 = vld [vmem:[#allocation9 + $0x48] sm:$0xff]
        %v922 = vld [vmem:[#allocation9 + $0x50] sm:$0xff]
        %v923 = vld [vmem:[#allocation9 + $0x58] sm:$0xff]
        %v924 = vld [vmem:[#allocation9 + $0x60] sm:$0xff]
        %v925 = vld [vmem:[#allocation9 + $0x68] sm:$0xff]
        %v926 = vld [vmem:[#allocation9 + $0x70] sm:$0xff]
        %v927 = vld [vmem:[#allocation9 + $0x78] sm:$0xff]
        %v928 = vld [vmem:[#allocation9 + $0x80] sm:$0xff]
        %v929 = vld [vmem:[#allocation9 + $0x88] sm:$0xff]
        %v930 = vld [vmem:[#allocation9 + $0x90] sm:$0xff]
        %v931 = vld [vmem:[#allocation9 + $0x98] sm:$0xff]
        %v932 = vld [vmem:[#allocation9 + $0xa0] sm:$0xff]
        %v933 = vld [vmem:[#allocation9 + $0xa8] sm:$0xff]
        %v934 = vld [vmem:[#allocation9 + $0xb0] sm:$0xff]
        %v935 = vld [vmem:[#allocation9 + $0xb8] sm:$0xff]
        %v936 = vld [vmem:[#allocation9 + $0xc0] sm:$0xff]
        %v937 = vld [vmem:[#allocation9 + $0xc8] sm:$0xff]
        %v938 = vld [vmem:[#allocation9 + $0xd0] sm:$0xff]
        %v939 = vld [vmem:[#allocation9 + $0xd8] sm:$0xff]
        %v940 = vld [vmem:[#allocation9 + $0xe0] sm:$0xff]
        %v941 = vld [vmem:[#allocation9 + $0xe8] sm:$0xff]
        %v942 = vld [vmem:[#allocation9 + $0xf0] sm:$0xff]
        %v943 = vld [vmem:[#allocation9 + $0xf8] sm:$0xff]
        %944 = vmatprep.subr.mxu0 0.0
        %945 = vmatpush1.msra.mxu0 %v911
        %946 = vmatprep.subr.mxu0 0.0
        %947 = vmatpush1.msra.mxu0 %v910
        %948 = vmatprep.subr.mxu0 0.0
        %949 = vmatpush1.msra.mxu0 %v909
        %950 = vmatprep.subr.mxu0 0.0
        %951 = vmatpush1.msra.mxu0 %v908
        %952 = vmatprep.subr.mxu0 0.0
        %953 = vmatpush1.msra.mxu0 %v907
        %954 = vmatprep.subr.mxu0 0.0
        %955 = vmatpush1.msra.mxu0 %v906
        %956 = vmatprep.subr.mxu0 0.0
        %957 = vmatpush1.msra.mxu0 %v905
        %958 = vmatprep.subr.mxu0 0.0
        %959 = vmatpush1.msra.mxu0 %v904
        %960 = vmatprep.subr.mxu0 0.0
        %961 = vmatpush1.msra.mxu0 %v903
        %962 = vmatprep.subr.mxu0 0.0
        %963 = vmatpush1.msra.mxu0 %v902
        %964 = vmatprep.subr.mxu0 0.0
        %965 = vmatpush1.msra.mxu0 %v901
        %966 = vmatprep.subr.mxu0 0.0
        %967 = vmatpush1.msra.mxu0 %v900
        %968 = vmatprep.subr.mxu0 0.0
        %969 = vmatpush1.msra.mxu0 %v899
        %970 = vmatprep.subr.mxu0 0.0
        %971 = vmatpush1.msra.mxu0 %v898
        %972 = vmatprep.subr.mxu0 0.0
        %973 = vmatpush1.msra.mxu0 %v897
        %974 = vmatprep.subr.mxu0 0.0
        %975 = vmatpush1.msra.mxu0 %v896
        %976 = vmatprep.subr.mxu0 0.0
        %977 = vmatpush2.msra.mxu0 0.0
        %978 = vmatprep.subr.mxu0 0.0
        %979 = vmatpush2.msra.mxu0 0.0
        %980 = vmatprep.subr.mxu0 0.0
        %981 = vmatpush2.msra.mxu0 0.0
        %982 = vmatprep.subr.mxu0 0.0
        %983 = vmatpush2.msra.mxu0 0.0
        %984 = vmatprep.subr.mxu0 0.0
        %985 = vmatpush2.msra.mxu0 0.0
        %986 = vmatprep.subr.mxu0 0.0
        %987 = vmatpush2.msra.mxu0 0.0
        %988 = vmatprep.subr.mxu0 0.0
        %989 = vmatpush2.msra.mxu0 0.0
        %990 = vmatprep.subr.mxu0 0.0
        %991 = vmatpush2.msra.mxu0 0.0
        %992 = vmatprep.subr.mxu0 0.0
        %993 = vmatpush2.msra.mxu0 0.0
        %994 = vmatprep.subr.mxu0 0.0
        %995 = vmatpush2.msra.mxu0 0.0
        %996 = vmatprep.subr.mxu0 0.0
        %997 = vmatpush2.msra.mxu0 0.0
        %998 = vmatprep.subr.mxu0 0.0
        %999 = vmatpush2.msra.mxu0 0.0
        %1000 = vmatprep.subr.mxu0 0.0
        %1001 = vmatpush2.msra.mxu0 0.0
        %1002 = vmatprep.subr.mxu0 0.0
        %1003 = vmatpush2.msra.mxu0 0.0
        %1004 = vmatprep.subr.mxu0 0.0
        %1005 = vmatpush2.msra.mxu0 0.0
        %1006 = vmatprep.subr.mxu0 0.0
        %1007 = vmatpush2.msra.mxu0 0.0
        %1008 = vmatprep.mubr.f32.mxu0 0.0
        %1009 = vmatmul.mubr.f32.gmra.mxu0 %v727
        %v1010 = vpop.f32.mrf.mxu0
        %v1011 = vadd.f32 0.0, %v1010
        %v1012 = vpop.f32.mrf.mxu0
        %1013 = vmatprep.mubr.f32.mxu0 0.0
        %1014 = vmatmul.mubr.f32.gmra.mxu0 %v728
        %v1015 = vpop.f32.mrf.mxu0
        %v1016 = vadd.f32 0.0, %v1015
        %v1017 = vpop.f32.mrf.mxu0
        %1018 = vmatprep.mubr.f32.mxu0 0.0
        %1019 = vmatmul.mubr.f32.gmra.mxu0 %v729
        %v1020 = vpop.f32.mrf.mxu0
        %v1021 = vadd.f32 0.0, %v1020
        %v1022 = vpop.f32.mrf.mxu0
        %1023 = vmatprep.mubr.f32.mxu0 0.0
        %1024 = vmatmul.mubr.f32.gmra.mxu0 %v730
        %v1025 = vpop.f32.mrf.mxu0
        %v1026 = vadd.f32 0.0, %v1025
        %v1027 = vpop.f32.mrf.mxu0
        %1028 = vmatprep.mubr.f32.mxu0 0.0
        %1029 = vmatmul.mubr.f32.gmra.mxu0 %v731
        %v1030 = vpop.f32.mrf.mxu0
        %v1031 = vadd.f32 0.0, %v1030
        %v1032 = vpop.f32.mrf.mxu0
        %1033 = vmatprep.mubr.f32.mxu0 0.0
        %1034 = vmatmul.mubr.f32.gmra.mxu0 %v732
        %v1035 = vpop.f32.mrf.mxu0
        %v1036 = vadd.f32 0.0, %v1035
        %v1037 = vpop.f32.mrf.mxu0
        %1038 = vmatprep.mubr.f32.mxu0 0.0
        %1039 = vmatmul.mubr.f32.gmra.mxu0 %v733
        %v1040 = vpop.f32.mrf.mxu0
        %v1041 = vadd.f32 0.0, %v1040
        %v1042 = vpop.f32.mrf.mxu0
        %1043 = vmatprep.mubr.f32.mxu0 0.0
        %1044 = vmatmul.mubr.f32.gmra.mxu0 %v734
        %v1045 = vpop.f32.mrf.mxu0
        %v1046 = vadd.f32 0.0, %v1045
        %v1047 = vpop.f32.mrf.mxu0
        %1048 = vdwg.mxu0
        %v1049 = vmul.f32 %v1011, 0.35355338
        %v1050 = vmul.f32 %v1016, 0.35355338
        %v1051 = vmul.f32 %v1021, 0.35355338
        %v1052 = vmul.f32 %v1026, 0.35355338
        %v1053 = vmul.f32 %v1031, 0.35355338
        %v1054 = vmul.f32 %v1036, 0.35355338
        %v1055 = vmul.f32 %v1041, 0.35355338
        %v1056 = vmul.f32 %v1046, 0.35355338
        %1057 = vmatprep.subr.mxu0 %v943
        %1058 = vmatpush1.msra.mxu0 %v942
        %1059 = vmatprep.subr.mxu0 %v941
        %1060 = vmatpush1.msra.mxu0 %v940
        %1061 = vmatprep.subr.mxu0 %v939
        %1062 = vmatpush1.msra.mxu0 %v938
        %1063 = vmatprep.subr.mxu0 %v937
        %1064 = vmatpush1.msra.mxu0 %v936
        %1065 = vmatprep.subr.mxu0 %v935
        %1066 = vmatpush1.msra.mxu0 %v934
        %1067 = vmatprep.subr.mxu0 %v933
        %1068 = vmatpush1.msra.mxu0 %v932
        %1069 = vmatprep.subr.mxu0 %v931
        %1070 = vmatpush1.msra.mxu0 %v930
        %1071 = vmatprep.subr.mxu0 %v929
        %1072 = vmatpush1.msra.mxu0 %v928
        %1073 = vmatprep.subr.mxu0 %v927
        %1074 = vmatpush1.msra.mxu0 %v926
        %1075 = vmatprep.subr.mxu0 %v925
        %1076 = vmatpush1.msra.mxu0 %v924
        %1077 = vmatprep.subr.mxu0 %v923
        %1078 = vmatpush1.msra.mxu0 %v922
        %1079 = vmatprep.subr.mxu0 %v921
        %1080 = vmatpush1.msra.mxu0 %v920
        %1081 = vmatprep.subr.mxu0 %v919
        %1082 = vmatpush1.msra.mxu0 %v918
        %1083 = vmatprep.subr.mxu0 %v917
        %1084 = vmatpush1.msra.mxu0 %v916
        %1085 = vmatprep.subr.mxu0 %v915
        %1086 = vmatpush1.msra.mxu0 %v914
        %1087 = vmatprep.subr.mxu0 %v913
        %1088 = vmatpush1.msra.mxu0 %v912
        %1089 = vmatprep.subr.mxu0 0.0
        %1090 = vmatpush2.msra.mxu0 0.0
        %1091 = vmatprep.subr.mxu0 0.0
        %1092 = vmatpush2.msra.mxu0 0.0
        %1093 = vmatprep.subr.mxu0 0.0
        %1094 = vmatpush2.msra.mxu0 0.0
        %1095 = vmatprep.subr.mxu0 0.0
        %1096 = vmatpush2.msra.mxu0 0.0
        %1097 = vmatprep.subr.mxu0 0.0
        %1098 = vmatpush2.msra.mxu0 0.0
        %1099 = vmatprep.subr.mxu0 0.0
        %1100 = vmatpush2.msra.mxu0 0.0
        %1101 = vmatprep.subr.mxu0 0.0
        %1102 = vmatpush2.msra.mxu0 0.0
        %1103 = vmatprep.subr.mxu0 0.0
        %1104 = vmatpush2.msra.mxu0 0.0
        %1105 = vmatprep.subr.mxu0 0.0
        %1106 = vmatpush2.msra.mxu0 0.0
        %1107 = vmatprep.subr.mxu0 0.0
        %1108 = vmatpush2.msra.mxu0 0.0
        %1109 = vmatprep.subr.mxu0 0.0
        %1110 = vmatpush2.msra.mxu0 0.0
        %1111 = vmatprep.subr.mxu0 0.0
        %1112 = vmatpush2.msra.mxu0 0.0
        %1113 = vmatprep.subr.mxu0 0.0
        %1114 = vmatpush2.msra.mxu0 0.0
        %1115 = vmatprep.subr.mxu0 0.0
        %1116 = vmatpush2.msra.mxu0 0.0
        %1117 = vmatprep.subr.mxu0 0.0
        %1118 = vmatpush2.msra.mxu0 0.0
        %1119 = vmatprep.subr.mxu0 0.0
        %1120 = vmatpush2.msra.mxu0 0.0
        %1121 = vmatprep.mubr.f32.mxu0 0.0
        %1122 = vmatmul.mubr.f32.gmra.mxu0 %v894
        %v1123 = vpop.f32.mrf.mxu0
        %v1124 = vadd.f32 0.0, %v1123
        %v1125 = vpop.f32.mrf.mxu0
        %v1126 = vadd.f32 0.0, %v1125
        %1127 = vmatprep.mubr.f32.mxu0 0.0
        %1128 = vmatmul.mubr.f32.gmra.mxu0 %v895
        %v1129 = vpop.f32.mrf.mxu0
        %v1130 = vadd.f32 0.0, %v1129
        %v1131 = vpop.f32.mrf.mxu0
        %v1132 = vadd.f32 0.0, %v1131
        %1133 = vdwg.mxu0
        %1134 = vst [vmem:[#allocation2] sm:$0xff] 0.0
        %1135 = vst [vmem:[#allocation2 + $0x8] sm:$0xff] 0.0
        %1136 = vst [vmem:[#allocation2 + $0x10] sm:$0xff] 0.0
        %1137 = vst [vmem:[#allocation2 + $0x18] sm:$0xff] 0.0
        %1138 = vst [vmem:[#allocation2 + $0x20] sm:$0xff] 0.0
        %1139 = vst [vmem:[#allocation2 + $0x28] sm:$0xff] 0.0
        %1140 = vst [vmem:[#allocation2 + $0x30] sm:$0xff] 0.0
        %1141 = vst [vmem:[#allocation2 + $0x38] sm:$0xff] 0.0
        %vm1142 = vcmask 64512
        %v1144 = vsel %vm1142, %v1049, 0
        %v1147 = vsel %vm1142, %v1050, 0
        %v1150 = vsel %vm1142, %v1051, 0
        %v1153 = vsel %vm1142, %v1052, 0
        %v1156 = vsel %vm1142, %v1053, 0
        %v1159 = vsel %vm1142, %v1054, 0
        %v1162 = vsel %vm1142, %v1055, 0
        %v1165 = vsel %vm1142, %v1056, 0
        %v1168 = vsel %vm1142, %v1124, 0
        %v1171 = vsel %vm1142, %v1130, 0
        %1173 = vmatprep.subr.mxu0 0.0
        %1174 = vmatpush1.xpose.msra.mxu0 0.0
        %1175 = vmatprep.subr.mxu0 0.0
        %1176 = vmatpush1.xpose.msra.mxu0 0.0
        %1177 = vmatprep.subr.mxu0 0.0
        %1178 = vmatpush1.xpose.msra.mxu0 0.0
        %1179 = vmatprep.subr.mxu0 0.0
        %1180 = vmatpush1.xpose.msra.mxu0 0.0
        %1181 = vmatprep.subr.mxu0 0.0
        %1182 = vmatpush1.xpose.msra.mxu0 0.0
        %1183 = vmatprep.subr.mxu0 0.0
        %1184 = vmatpush1.xpose.msra.mxu0 0.0
        %1185 = vmatprep.subr.mxu0 0.0
        %1186 = vmatpush1.xpose.msra.mxu0 0.0
        %1187 = vmatprep.subr.mxu0 0.0
        %1188 = vmatpush1.xpose.msra.mxu0 0.0
        %1189 = vmatprep.subr.mxu0 0.0
        %1190 = vmatpush1.xpose.msra.mxu0 0.0
        %1191 = vmatprep.subr.mxu0 0.0
        %1192 = vmatpush1.xpose.msra.mxu0 0.0
        %1193 = vmatprep.subr.mxu0 0.0
        %1194 = vmatpush1.xpose.msra.mxu0 0.0
        %1195 = vmatprep.subr.mxu0 0.0
        %1196 = vmatpush1.xpose.msra.mxu0 0.0
        %1197 = vmatprep.subr.mxu0 0.0
        %1198 = vmatpush1.xpose.msra.mxu0 0.0
        %1199 = vmatprep.subr.mxu0 0.0
        %1200 = vmatpush1.xpose.msra.mxu0 0.0
        %1201 = vmatprep.subr.mxu0 0.0
        %1202 = vmatpush1.xpose.msra.mxu0 %v1171
        %1203 = vmatprep.subr.mxu0 0.0
        %1204 = vmatpush1.xpose.msra.mxu0 %v1168
        %1205 = vmatprep.subr.mxu0 0.0
        %1206 = vmatpush2.xpose.msra.mxu0 0.0
        %1207 = vmatprep.subr.mxu0 0.0
        %1208 = vmatpush2.xpose.msra.mxu0 0.0
        %1209 = vmatprep.subr.mxu0 0.0
        %1210 = vmatpush2.xpose.msra.mxu0 0.0
        %1211 = vmatprep.subr.mxu0 0.0
        %1212 = vmatpush2.xpose.msra.mxu0 0.0
        %1213 = vmatprep.subr.mxu0 0.0
        %1214 = vmatpush2.xpose.msra.mxu0 0.0
        %1215 = vmatprep.subr.mxu0 0.0
        %1216 = vmatpush2.xpose.msra.mxu0 0.0
        %1217 = vmatprep.subr.mxu0 0.0
        %1218 = vmatpush2.xpose.msra.mxu0 0.0
        %1219 = vmatprep.subr.mxu0 0.0
        %1220 = vmatpush2.xpose.msra.mxu0 0.0
        %1221 = vmatprep.subr.mxu0 0.0
        %1222 = vmatpush2.xpose.msra.mxu0 0.0
        %1223 = vmatprep.subr.mxu0 0.0
        %1224 = vmatpush2.xpose.msra.mxu0 0.0
        %1225 = vmatprep.subr.mxu0 0.0
        %1226 = vmatpush2.xpose.msra.mxu0 0.0
        %1227 = vmatprep.subr.mxu0 0.0
        %1228 = vmatpush2.xpose.msra.mxu0 0.0
        %1229 = vmatprep.subr.mxu0 0.0
        %1230 = vmatpush2.xpose.msra.mxu0 0.0
        %1231 = vmatprep.subr.mxu0 0.0
        %1232 = vmatpush2.xpose.msra.mxu0 0.0
        %1233 = vmatprep.subr.mxu0 0.0
        %1234 = vmatpush2.xpose.msra.mxu0 0.0
        %1235 = vmatprep.subr.mxu0 0.0
        %1236 = vmatpush2.xpose.msra.mxu0 0.0
        %1237 = vmatprep.mubr.f32.mxu0 0.0
        %1238 = vmatmul.mubr.f32.gmra.mxu0 %v1144
        %v1239 = vpop.f32.mrf.mxu0
        %v1240 = vadd.f32 0.0, %v1239
        %v1241 = vpop.f32.mrf.mxu0
        %1242 = vmatprep.mubr.f32.mxu0 0.0
        %1243 = vmatmul.mubr.f32.gmra.mxu0 %v1147
        %v1244 = vpop.f32.mrf.mxu0
        %v1245 = vadd.f32 0.0, %v1244
        %v1246 = vpop.f32.mrf.mxu0
        %1247 = vmatprep.mubr.f32.mxu0 0.0
        %1248 = vmatmul.mubr.f32.gmra.mxu0 %v1150
        %v1249 = vpop.f32.mrf.mxu0
        %v1250 = vadd.f32 0.0, %v1249
        %v1251 = vpop.f32.mrf.mxu0
        %1252 = vmatprep.mubr.f32.mxu0 0.0
        %1253 = vmatmul.mubr.f32.gmra.mxu0 %v1153
        %v1254 = vpop.f32.mrf.mxu0
        %v1255 = vadd.f32 0.0, %v1254
        %v1256 = vpop.f32.mrf.mxu0
        %1257 = vmatprep.mubr.f32.mxu0 0.0
        %1258 = vmatmul.mubr.f32.gmra.mxu0 %v1156
        %v1259 = vpop.f32.mrf.mxu0
        %v1260 = vadd.f32 0.0, %v1259
        %v1261 = vpop.f32.mrf.mxu0
        %1262 = vmatprep.mubr.f32.mxu0 0.0
        %1263 = vmatmul.mubr.f32.gmra.mxu0 %v1159
        %v1264 = vpop.f32.mrf.mxu0
        %v1265 = vadd.f32 0.0, %v1264
        %v1266 = vpop.f32.mrf.mxu0
        %1267 = vmatprep.mubr.f32.mxu0 0.0
        %1268 = vmatmul.mubr.f32.gmra.mxu0 %v1162
        %v1269 = vpop.f32.mrf.mxu0
        %v1270 = vadd.f32 0.0, %v1269
        %v1271 = vpop.f32.mrf.mxu0
        %1272 = vmatprep.mubr.f32.mxu0 0.0
        %1273 = vmatmul.mubr.f32.gmra.mxu0 %v1165
        %v1274 = vpop.f32.mrf.mxu0
        %v1275 = vadd.f32 0.0, %v1274
        %v1276 = vpop.f32.mrf.mxu0
        %1277 = vdwg.mxu0
        %vm1278 = vcmask 130048
        %v1279 = vsel %vm1278, %v1240, -inf
        %1280 = vmax.xlane.f32.xlu0 %v1279
        %v1281 = vpop.xlane.xlu0 %1280
        %v1282 = vsel %vm1278, %v1245, -inf
        %1283 = vmax.xlane.f32.xlu0 %v1282
        %v1284 = vpop.xlane.xlu0 %1283
        %v1285 = vsel %vm1278, %v1250, -inf
        %1286 = vmax.xlane.f32.xlu0 %v1285
        %v1287 = vpop.xlane.xlu0 %1286
        %v1288 = vsel %vm1278, %v1255, -inf
        %1289 = vmax.xlane.f32.xlu0 %v1288
        %v1290 = vpop.xlane.xlu0 %1289
        %v1291 = vsel %vm1278, %v1260, -inf
        %1292 = vmax.xlane.f32.xlu0 %v1291
        %v1293 = vpop.xlane.xlu0 %1292
        %v1294 = vsel %vm1278, %v1265, -inf
        %1295 = vmax.xlane.f32.xlu0 %v1294
        %v1296 = vpop.xlane.xlu0 %1295
        %v1297 = vsel %vm1278, %v1270, -inf
        %1298 = vmax.xlane.f32.xlu0 %v1297
        %v1299 = vpop.xlane.xlu0 %1298
        %v1300 = vsel %vm1278, %v1275, -inf
        %1301 = vmax.xlane.f32.xlu0 %v1300
        %v1302 = vpop.xlane.xlu0 %1301
        %v1303 = vsub.f32 %v1240, %v1281
        %v1304 = vsub.f32 %v1245, %v1284
        %v1305 = vsub.f32 %v1250, %v1287
        %v1306 = vsub.f32 %v1255, %v1290
        %v1307 = vsub.f32 %v1260, %v1293
        %v1308 = vsub.f32 %v1265, %v1296
        %v1309 = vsub.f32 %v1270, %v1299
        %v1310 = vsub.f32 %v1275, %v1302
        %v1311 = vmul.f32 %v1303, 1.442695
        %v1312 = vpow.pop %v1311
        %v1313 = vmul.f32 %v1304, 1.442695
        %v1314 = vpow.pop %v1313
        %v1315 = vmul.f32 %v1305, 1.442695
        %v1316 = vpow.pop %v1315
        %v1317 = vmul.f32 %v1306, 1.442695
        %v1318 = vpow.pop %v1317
        %v1319 = vmul.f32 %v1307, 1.442695
        %v1320 = vpow.pop %v1319
        %v1321 = vmul.f32 %v1308, 1.442695
        %v1322 = vpow.pop %v1321
        %v1323 = vmul.f32 %v1309, 1.442695
        %v1324 = vpow.pop %v1323
        %v1325 = vmul.f32 %v1310, 1.442695
        %v1326 = vpow.pop %v1325
        %v1327 = vsel %vm1278, %v1312, 0.0
        %1328 = vadd.xlane.f32.xlu0 %v1327
        %v1329 = vpop.xlane.xlu0 %1328
        %v1330 = vsel %vm1278, %v1314, 0.0
        %1331 = vadd.xlane.f32.xlu0 %v1330
        %v1332 = vpop.xlane.xlu0 %1331
        %v1333 = vsel %vm1278, %v1316, 0.0
        %1334 = vadd.xlane.f32.xlu0 %v1333
        %v1335 = vpop.xlane.xlu0 %1334
        %v1336 = vsel %vm1278, %v1318, 0.0
        %1337 = vadd.xlane.f32.xlu0 %v1336
        %v1338 = vpop.xlane.xlu0 %1337
        %v1339 = vsel %vm1278, %v1320, 0.0
        %1340 = vadd.xlane.f32.xlu0 %v1339
        %v1341 = vpop.xlane.xlu0 %1340
        %v1342 = vsel %vm1278, %v1322, 0.0
        %1343 = vadd.xlane.f32.xlu0 %v1342
        %v1344 = vpop.xlane.xlu0 %1343
        %v1345 = vsel %vm1278, %v1324, 0.0
        %1346 = vadd.xlane.f32.xlu0 %v1345
        %v1347 = vpop.xlane.xlu0 %1346
        %v1348 = vsel %vm1278, %v1326, 0.0
        %1349 = vadd.xlane.f32.xlu0 %v1348
        %v1350 = vpop.xlane.xlu0 %1349
        %v1351 = vrcp.pop %v1329
        %v1352 = vmul.f32 %v1312, %v1351
        %v1353 = vrcp.pop %v1332
        %v1354 = vmul.f32 %v1314, %v1353
        %v1355 = vrcp.pop %v1335
        %v1356 = vmul.f32 %v1316, %v1355
        %v1357 = vrcp.pop %v1338
        %v1358 = vmul.f32 %v1318, %v1357
        %v1359 = vrcp.pop %v1341
        %v1360 = vmul.f32 %v1320, %v1359
        %v1361 = vrcp.pop %v1344
        %v1362 = vmul.f32 %v1322, %v1361
        %v1363 = vrcp.pop %v1347
        %v1364 = vmul.f32 %v1324, %v1363
        %v1365 = vrcp.pop %v1350
        %v1366 = vmul.f32 %v1326, %v1365
        %v1368 = vsel %vm1278, %v1352, 0
        %v1371 = vsel %vm1278, %v1354, 0
        %v1374 = vsel %vm1278, %v1356, 0
        %v1377 = vsel %vm1278, %v1358, 0
        %v1380 = vsel %vm1278, %v1360, 0
        %v1383 = vsel %vm1278, %v1362, 0
        %v1386 = vsel %vm1278, %v1364, 0
        %v1389 = vsel %vm1278, %v1366, 0
        %1391 = vmatprep.subr.mxu0 0.0
        %1392 = vmatpush1.msra.mxu0 0.0
        %1393 = vmatprep.subr.mxu0 0.0
        %1394 = vmatpush1.msra.mxu0 0.0
        %1395 = vmatprep.subr.mxu0 0.0
        %1396 = vmatpush1.msra.mxu0 0.0
        %1397 = vmatprep.subr.mxu0 0.0
        %1398 = vmatpush1.msra.mxu0 0.0
        %1399 = vmatprep.subr.mxu0 0.0
        %1400 = vmatpush1.msra.mxu0 0.0
        %1401 = vmatprep.subr.mxu0 0.0
        %1402 = vmatpush1.msra.mxu0 0.0
        %1403 = vmatprep.subr.mxu0 0.0
        %1404 = vmatpush1.msra.mxu0 0.0
        %1405 = vmatprep.subr.mxu0 0.0
        %1406 = vmatpush1.msra.mxu0 0.0
        %1407 = vmatprep.subr.mxu0 0.0
        %1408 = vmatpush1.msra.mxu0 0.0
        %1409 = vmatprep.subr.mxu0 0.0
        %1410 = vmatpush1.msra.mxu0 0.0
        %1411 = vmatprep.subr.mxu0 0.0
        %1412 = vmatpush1.msra.mxu0 0.0
        %1413 = vmatprep.subr.mxu0 0.0
        %1414 = vmatpush1.msra.mxu0 0.0
        %1415 = vmatprep.subr.mxu0 0.0
        %1416 = vmatpush1.msra.mxu0 0.0
        %1417 = vmatprep.subr.mxu0 0.0
        %1418 = vmatpush1.msra.mxu0 0.0
        %1419 = vmatprep.subr.mxu0 0.0
        %1420 = vmatpush1.msra.mxu0 %v1132
        %1421 = vmatprep.subr.mxu0 0.0
        %1422 = vmatpush1.msra.mxu0 %v1126
        %1423 = vmatprep.subr.mxu0 0.0
        %1424 = vmatpush2.msra.mxu0 0.0
        %1425 = vmatprep.subr.mxu0 0.0
        %1426 = vmatpush2.msra.mxu0 0.0
        %1427 = vmatprep.subr.mxu0 0.0
        %1428 = vmatpush2.msra.mxu0 0.0
        %1429 = vmatprep.subr.mxu0 0.0
        %1430 = vmatpush2.msra.mxu0 0.0
        %1431 = vmatprep.subr.mxu0 0.0
        %1432 = vmatpush2.msra.mxu0 0.0
        %1433 = vmatprep.subr.mxu0 0.0
        %1434 = vmatpush2.msra.mxu0 0.0
        %1435 = vmatprep.subr.mxu0 0.0
        %1436 = vmatpush2.msra.mxu0 0.0
        %1437 = vmatprep.subr.mxu0 0.0
        %1438 = vmatpush2.msra.mxu0 0.0
        %1439 = vmatprep.subr.mxu0 0.0
        %1440 = vmatpush2.msra.mxu0 0.0
        %1441 = vmatprep.subr.mxu0 0.0
        %1442 = vmatpush2.msra.mxu0 0.0
        %1443 = vmatprep.subr.mxu0 0.0
        %1444 = vmatpush2.msra.mxu0 0.0
        %1445 = vmatprep.subr.mxu0 0.0
        %1446 = vmatpush2.msra.mxu0 0.0
        %1447 = vmatprep.subr.mxu0 0.0
        %1448 = vmatpush2.msra.mxu0 0.0
        %1449 = vmatprep.subr.mxu0 0.0
        %1450 = vmatpush2.msra.mxu0 0.0
        %1451 = vmatprep.subr.mxu0 0.0
        %1452 = vmatpush2.msra.mxu0 0.0
        %1453 = vmatprep.subr.mxu0 0.0
        %1454 = vmatpush2.msra.mxu0 0.0
        %1455 = vmatprep.mubr.f32.mxu0 0.0
        %1456 = vmatmul.mubr.f32.gmra.mxu0 %v1368
        %v1457 = vpop.f32.mrf.mxu0
        %v1458 = vadd.f32 0.0, %v1457
        %v1459 = vpop.f32.mrf.mxu0
        %1460 = vmatprep.mubr.f32.mxu0 0.0
        %1461 = vmatmul.mubr.f32.gmra.mxu0 %v1371
        %v1462 = vpop.f32.mrf.mxu0
        %v1463 = vadd.f32 0.0, %v1462
        %v1464 = vpop.f32.mrf.mxu0
        %1465 = vmatprep.mubr.f32.mxu0 0.0
        %1466 = vmatmul.mubr.f32.gmra.mxu0 %v1374
        %v1467 = vpop.f32.mrf.mxu0
        %v1468 = vadd.f32 0.0, %v1467
        %v1469 = vpop.f32.mrf.mxu0
        %1470 = vmatprep.mubr.f32.mxu0 0.0
        %1471 = vmatmul.mubr.f32.gmra.mxu0 %v1377
        %v1472 = vpop.f32.mrf.mxu0
        %v1473 = vadd.f32 0.0, %v1472
        %v1474 = vpop.f32.mrf.mxu0
        %1475 = vmatprep.mubr.f32.mxu0 0.0
        %1476 = vmatmul.mubr.f32.gmra.mxu0 %v1380
        %v1477 = vpop.f32.mrf.mxu0
        %v1478 = vadd.f32 0.0, %v1477
        %v1479 = vpop.f32.mrf.mxu0
        %1480 = vmatprep.mubr.f32.mxu0 0.0
        %1481 = vmatmul.mubr.f32.gmra.mxu0 %v1383
        %v1482 = vpop.f32.mrf.mxu0
        %v1483 = vadd.f32 0.0, %v1482
        %v1484 = vpop.f32.mrf.mxu0
        %1485 = vmatprep.mubr.f32.mxu0 0.0
        %1486 = vmatmul.mubr.f32.gmra.mxu0 %v1386
        %v1487 = vpop.f32.mrf.mxu0
        %v1488 = vadd.f32 0.0, %v1487
        %v1489 = vpop.f32.mrf.mxu0
        %1490 = vmatprep.mubr.f32.mxu0 0.0
        %1491 = vmatmul.mubr.f32.gmra.mxu0 %v1389
        %v1492 = vpop.f32.mrf.mxu0
        %v1493 = vadd.f32 0.0, %v1492
        %v1494 = vpop.f32.mrf.mxu0
        %1495 = vdwg.mxu0
        %v1496 = vld [vmem:[#allocation2] sm:$0xff]
        %v1497 = vld [vmem:[#allocation2 + $0x8] sm:$0xff]
        %v1498 = vld [vmem:[#allocation2 + $0x10] sm:$0xff]
        %v1499 = vld [vmem:[#allocation2 + $0x18] sm:$0xff]
        %v1500 = vld [vmem:[#allocation2 + $0x20] sm:$0xff]
        %v1501 = vld [vmem:[#allocation2 + $0x28] sm:$0xff]
        %v1502 = vld [vmem:[#allocation2 + $0x30] sm:$0xff]
        %v1503 = vld [vmem:[#allocation2 + $0x38] sm:$0xff]
        %v1504 = vadd.f32 %v1496, %v1458
        %v1505 = vadd.f32 %v1497, %v1463
        %v1506 = vadd.f32 %v1498, %v1468
        %v1507 = vadd.f32 %v1499, %v1473
        %v1508 = vadd.f32 %v1500, %v1478
        %v1509 = vadd.f32 %v1501, %v1483
        %v1510 = vadd.f32 %v1502, %v1488
        %v1511 = vadd.f32 %v1503, %v1493
        %1512 = vst.msk [vmem:[#allocation2] sm:$0xff] %vm1142, %v1504
        %1513 = vst.msk [vmem:[#allocation2 + $0x8] sm:$0xff] %vm1142, %v1505
        %1514 = vst.msk [vmem:[#allocation2 + $0x10] sm:$0xff] %vm1142, %v1506
        %1515 = vst.msk [vmem:[#allocation2 + $0x18] sm:$0xff] %vm1142, %v1507
        %1516 = vst.msk [vmem:[#allocation2 + $0x20] sm:$0xff] %vm1142, %v1508
        %1517 = vst.msk [vmem:[#allocation2 + $0x28] sm:$0xff] %vm1142, %v1509
        %1518 = vst.msk [vmem:[#allocation2 + $0x30] sm:$0xff] %vm1142, %v1510
        %1519 = vst.msk [vmem:[#allocation2 + $0x38] sm:$0xff] %vm1142, %v1511
        %1520 = vrot.lane.b32.xlu0 %v1049, 120
        %v1521 = vpop.permute.xlu0 %1520
        %1522 = vrot.lane.b32.xlu0 %v1050, 120
        %v1523 = vpop.permute.xlu0 %1522
        %1524 = vrot.lane.b32.xlu0 %v1051, 120
        %v1525 = vpop.permute.xlu0 %1524
        %1526 = vrot.lane.b32.xlu0 %v1052, 120
        %v1527 = vpop.permute.xlu0 %1526
        %1528 = vrot.lane.b32.xlu0 %v1053, 120
        %v1529 = vpop.permute.xlu0 %1528
        %1530 = vrot.lane.b32.xlu0 %v1054, 120
        %v1531 = vpop.permute.xlu0 %1530
        %1532 = vrot.lane.b32.xlu0 %v1055, 120
        %v1533 = vpop.permute.xlu0 %1532
        %1534 = vrot.lane.b32.xlu0 %v1056, 120
        %v1535 = vpop.permute.xlu0 %1534
        %1536 = vrot.lane.b32.xlu0 %v1124, 120
        %v1537 = vpop.permute.xlu0 %1536
        %1538 = vrot.lane.b32.xlu0 %v1130, 120
        %v1539 = vpop.permute.xlu0 %1538
        %v1540 = vsel %vm1142, %v1521, 0
        %v1542 = vsel %vm1142, %v1523, 0
        %v1544 = vsel %vm1142, %v1525, 0
        %v1546 = vsel %vm1142, %v1527, 0
        %v1548 = vsel %vm1142, %v1529, 0
        %v1550 = vsel %vm1142, %v1531, 0
        %v1552 = vsel %vm1142, %v1533, 0
        %v1554 = vsel %vm1142, %v1535, 0
        %v1556 = vsel %vm1142, %v1537, 0
        %v1558 = vsel %vm1142, %v1539, 0
        %1560 = vmatprep.subr.mxu0 0.0
        %1561 = vmatpush1.xpose.msra.mxu0 0.0
        %1562 = vmatprep.subr.mxu0 0.0
        %1563 = vmatpush1.xpose.msra.mxu0 0.0
        %1564 = vmatprep.subr.mxu0 0.0
        %1565 = vmatpush1.xpose.msra.mxu0 0.0
        %1566 = vmatprep.subr.mxu0 0.0
        %1567 = vmatpush1.xpose.msra.mxu0 0.0
        %1568 = vmatprep.subr.mxu0 0.0
        %1569 = vmatpush1.xpose.msra.mxu0 0.0
        %1570 = vmatprep.subr.mxu0 0.0
        %1571 = vmatpush1.xpose.msra.mxu0 0.0
        %1572 = vmatprep.subr.mxu0 0.0
        %1573 = vmatpush1.xpose.msra.mxu0 0.0
        %1574 = vmatprep.subr.mxu0 0.0
        %1575 = vmatpush1.xpose.msra.mxu0 0.0
        %1576 = vmatprep.subr.mxu0 0.0
        %1577 = vmatpush1.xpose.msra.mxu0 0.0
        %1578 = vmatprep.subr.mxu0 0.0
        %1579 = vmatpush1.xpose.msra.mxu0 0.0
        %1580 = vmatprep.subr.mxu0 0.0
        %1581 = vmatpush1.xpose.msra.mxu0 0.0
        %1582 = vmatprep.subr.mxu0 0.0
        %1583 = vmatpush1.xpose.msra.mxu0 0.0
        %1584 = vmatprep.subr.mxu0 0.0
        %1585 = vmatpush1.xpose.msra.mxu0 0.0
        %1586 = vmatprep.subr.mxu0 0.0
        %1587 = vmatpush1.xpose.msra.mxu0 0.0
        %1588 = vmatprep.subr.mxu0 0.0
        %1589 = vmatpush1.xpose.msra.mxu0 %v1558
        %1590 = vmatprep.subr.mxu0 0.0
        %1591 = vmatpush1.xpose.msra.mxu0 %v1556
        %1592 = vmatprep.subr.mxu0 0.0
        %1593 = vmatpush2.xpose.msra.mxu0 0.0
        %1594 = vmatprep.subr.mxu0 0.0
        %1595 = vmatpush2.xpose.msra.mxu0 0.0
        %1596 = vmatprep.subr.mxu0 0.0
        %1597 = vmatpush2.xpose.msra.mxu0 0.0
        %1598 = vmatprep.subr.mxu0 0.0
        %1599 = vmatpush2.xpose.msra.mxu0 0.0
        %1600 = vmatprep.subr.mxu0 0.0
        %1601 = vmatpush2.xpose.msra.mxu0 0.0
        %1602 = vmatprep.subr.mxu0 0.0
        %1603 = vmatpush2.xpose.msra.mxu0 0.0
        %1604 = vmatprep.subr.mxu0 0.0
        %1605 = vmatpush2.xpose.msra.mxu0 0.0
        %1606 = vmatprep.subr.mxu0 0.0
        %1607 = vmatpush2.xpose.msra.mxu0 0.0
        %1608 = vmatprep.subr.mxu0 0.0
        %1609 = vmatpush2.xpose.msra.mxu0 0.0
        %1610 = vmatprep.subr.mxu0 0.0
        %1611 = vmatpush2.xpose.msra.mxu0 0.0
        %1612 = vmatprep.subr.mxu0 0.0
        %1613 = vmatpush2.xpose.msra.mxu0 0.0
        %1614 = vmatprep.subr.mxu0 0.0
        %1615 = vmatpush2.xpose.msra.mxu0 0.0
        %1616 = vmatprep.subr.mxu0 0.0
        %1617 = vmatpush2.xpose.msra.mxu0 0.0
        %1618 = vmatprep.subr.mxu0 0.0
        %1619 = vmatpush2.xpose.msra.mxu0 0.0
        %1620 = vmatprep.subr.mxu0 0.0
        %1621 = vmatpush2.xpose.msra.mxu0 0.0
        %1622 = vmatprep.subr.mxu0 0.0
        %1623 = vmatpush2.xpose.msra.mxu0 0.0
        %1624 = vmatprep.mubr.f32.mxu0 0.0
        %1625 = vmatmul.mubr.f32.gmra.mxu0 %v1540
        %v1626 = vpop.f32.mrf.mxu0
        %v1627 = vadd.f32 0.0, %v1626
        %v1628 = vpop.f32.mrf.mxu0
        %1629 = vmatprep.mubr.f32.mxu0 0.0
        %1630 = vmatmul.mubr.f32.gmra.mxu0 %v1542
        %v1631 = vpop.f32.mrf.mxu0
        %v1632 = vadd.f32 0.0, %v1631
        %v1633 = vpop.f32.mrf.mxu0
        %1634 = vmatprep.mubr.f32.mxu0 0.0
        %1635 = vmatmul.mubr.f32.gmra.mxu0 %v1544
        %v1636 = vpop.f32.mrf.mxu0
        %v1637 = vadd.f32 0.0, %v1636
        %v1638 = vpop.f32.mrf.mxu0
        %1639 = vmatprep.mubr.f32.mxu0 0.0
        %1640 = vmatmul.mubr.f32.gmra.mxu0 %v1546
        %v1641 = vpop.f32.mrf.mxu0
        %v1642 = vadd.f32 0.0, %v1641
        %v1643 = vpop.f32.mrf.mxu0
        %1644 = vmatprep.mubr.f32.mxu0 0.0
        %1645 = vmatmul.mubr.f32.gmra.mxu0 %v1548
        %v1646 = vpop.f32.mrf.mxu0
        %v1647 = vadd.f32 0.0, %v1646
        %v1648 = vpop.f32.mrf.mxu0
        %1649 = vmatprep.mubr.f32.mxu0 0.0
        %1650 = vmatmul.mubr.f32.gmra.mxu0 %v1550
        %v1651 = vpop.f32.mrf.mxu0
        %v1652 = vadd.f32 0.0, %v1651
        %v1653 = vpop.f32.mrf.mxu0
        %1654 = vmatprep.mubr.f32.mxu0 0.0
        %1655 = vmatmul.mubr.f32.gmra.mxu0 %v1552
        %v1656 = vpop.f32.mrf.mxu0
        %v1657 = vadd.f32 0.0, %v1656
        %v1658 = vpop.f32.mrf.mxu0
        %1659 = vmatprep.mubr.f32.mxu0 0.0
        %1660 = vmatmul.mubr.f32.gmra.mxu0 %v1554
        %v1661 = vpop.f32.mrf.mxu0
        %v1662 = vadd.f32 0.0, %v1661
        %v1663 = vpop.f32.mrf.mxu0
        %1664 = vdwg.mxu0
        %v1665 = vsel %vm1278, %v1627, -inf
        %1666 = vmax.xlane.f32.xlu0 %v1665
        %v1667 = vpop.xlane.xlu0 %1666
        %v1668 = vsel %vm1278, %v1632, -inf
        %1669 = vmax.xlane.f32.xlu0 %v1668
        %v1670 = vpop.xlane.xlu0 %1669
        %v1671 = vsel %vm1278, %v1637, -inf
        %1672 = vmax.xlane.f32.xlu0 %v1671
        %v1673 = vpop.xlane.xlu0 %1672
        %v1674 = vsel %vm1278, %v1642, -inf
        %1675 = vmax.xlane.f32.xlu0 %v1674
        %v1676 = vpop.xlane.xlu0 %1675
        %v1677 = vsel %vm1278, %v1647, -inf
        %1678 = vmax.xlane.f32.xlu0 %v1677
        %v1679 = vpop.xlane.xlu0 %1678
        %v1680 = vsel %vm1278, %v1652, -inf
        %1681 = vmax.xlane.f32.xlu0 %v1680
        %v1682 = vpop.xlane.xlu0 %1681
        %v1683 = vsel %vm1278, %v1657, -inf
        %1684 = vmax.xlane.f32.xlu0 %v1683
        %v1685 = vpop.xlane.xlu0 %1684
        %v1686 = vsel %vm1278, %v1662, -inf
        %1687 = vmax.xlane.f32.xlu0 %v1686
        %v1688 = vpop.xlane.xlu0 %1687
        %v1689 = vsub.f32 %v1627, %v1667
        %v1690 = vsub.f32 %v1632, %v1670
        %v1691 = vsub.f32 %v1637, %v1673
        %v1692 = vsub.f32 %v1642, %v1676
        %v1693 = vsub.f32 %v1647, %v1679
        %v1694 = vsub.f32 %v1652, %v1682
        %v1695 = vsub.f32 %v1657, %v1685
        %v1696 = vsub.f32 %v1662, %v1688
        %v1697 = vmul.f32 %v1689, 1.442695
        %v1698 = vpow.pop %v1697
        %v1699 = vmul.f32 %v1690, 1.442695
        %v1700 = vpow.pop %v1699
        %v1701 = vmul.f32 %v1691, 1.442695
        %v1702 = vpow.pop %v1701
        %v1703 = vmul.f32 %v1692, 1.442695
        %v1704 = vpow.pop %v1703
        %v1705 = vmul.f32 %v1693, 1.442695
        %v1706 = vpow.pop %v1705
        %v1707 = vmul.f32 %v1694, 1.442695
        %v1708 = vpow.pop %v1707
        %v1709 = vmul.f32 %v1695, 1.442695
        %v1710 = vpow.pop %v1709
        %v1711 = vmul.f32 %v1696, 1.442695
        %v1712 = vpow.pop %v1711
        %v1713 = vsel %vm1278, %v1698, 0.0
        %1714 = vadd.xlane.f32.xlu0 %v1713
        %v1715 = vpop.xlane.xlu0 %1714
        %v1716 = vsel %vm1278, %v1700, 0.0
        %1717 = vadd.xlane.f32.xlu0 %v1716
        %v1718 = vpop.xlane.xlu0 %1717
        %v1719 = vsel %vm1278, %v1702, 0.0
        %1720 = vadd.xlane.f32.xlu0 %v1719
        %v1721 = vpop.xlane.xlu0 %1720
        %v1722 = vsel %vm1278, %v1704, 0.0
        %1723 = vadd.xlane.f32.xlu0 %v1722
        %v1724 = vpop.xlane.xlu0 %1723
        %v1725 = vsel %vm1278, %v1706, 0.0
        %1726 = vadd.xlane.f32.xlu0 %v1725
        %v1727 = vpop.xlane.xlu0 %1726
        %v1728 = vsel %vm1278, %v1708, 0.0
        %1729 = vadd.xlane.f32.xlu0 %v1728
        %v1730 = vpop.xlane.xlu0 %1729
        %v1731 = vsel %vm1278, %v1710, 0.0
        %1732 = vadd.xlane.f32.xlu0 %v1731
        %v1733 = vpop.xlane.xlu0 %1732
        %v1734 = vsel %vm1278, %v1712, 0.0
        %1735 = vadd.xlane.f32.xlu0 %v1734
        %v1736 = vpop.xlane.xlu0 %1735
        %v1737 = vrcp.pop %v1715
        %v1738 = vmul.f32 %v1698, %v1737
        %v1739 = vrcp.pop %v1718
        %v1740 = vmul.f32 %v1700, %v1739
        %v1741 = vrcp.pop %v1721
        %v1742 = vmul.f32 %v1702, %v1741
        %v1743 = vrcp.pop %v1724
        %v1744 = vmul.f32 %v1704, %v1743
        %v1745 = vrcp.pop %v1727
        %v1746 = vmul.f32 %v1706, %v1745
        %v1747 = vrcp.pop %v1730
        %v1748 = vmul.f32 %v1708, %v1747
        %v1749 = vrcp.pop %v1733
        %v1750 = vmul.f32 %v1710, %v1749
        %v1751 = vrcp.pop %v1736
        %v1752 = vmul.f32 %v1712, %v1751
        %1755 = vrot.lane.b32.xlu0 %v1126, 120
        %v1756 = vpop.permute.xlu0 %1755
        %1757 = vrot.lane.b32.xlu0 %v1132, 120
        %v1758 = vpop.permute.xlu0 %1757
        %v1762 = vsel %vm1278, %v1738, 0
        %v1765 = vsel %vm1278, %v1740, 0
        %v1768 = vsel %vm1278, %v1742, 0
        %v1771 = vsel %vm1278, %v1744, 0
        %v1774 = vsel %vm1278, %v1746, 0
        %v1777 = vsel %vm1278, %v1748, 0
        %v1780 = vsel %vm1278, %v1750, 0
        %v1783 = vsel %vm1278, %v1752, 0
        %1785 = vmatprep.subr.mxu0 0.0
        %1786 = vmatpush1.msra.mxu0 0.0
        %1787 = vmatprep.subr.mxu0 0.0
        %1788 = vmatpush1.msra.mxu0 0.0
        %1789 = vmatprep.subr.mxu0 0.0
        %1790 = vmatpush1.msra.mxu0 0.0
        %1791 = vmatprep.subr.mxu0 0.0
        %1792 = vmatpush1.msra.mxu0 0.0
        %1793 = vmatprep.subr.mxu0 0.0
        %1794 = vmatpush1.msra.mxu0 0.0
        %1795 = vmatprep.subr.mxu0 0.0
        %1796 = vmatpush1.msra.mxu0 0.0
        %1797 = vmatprep.subr.mxu0 0.0
        %1798 = vmatpush1.msra.mxu0 0.0
        %1799 = vmatprep.subr.mxu0 0.0
        %1800 = vmatpush1.msra.mxu0 0.0
        %1801 = vmatprep.subr.mxu0 0.0
        %1802 = vmatpush1.msra.mxu0 0.0
        %1803 = vmatprep.subr.mxu0 0.0
        %1804 = vmatpush1.msra.mxu0 0.0
        %1805 = vmatprep.subr.mxu0 0.0
        %1806 = vmatpush1.msra.mxu0 0.0
        %1807 = vmatprep.subr.mxu0 0.0
        %1808 = vmatpush1.msra.mxu0 0.0
        %1809 = vmatprep.subr.mxu0 0.0
        %1810 = vmatpush1.msra.mxu0 0.0
        %1811 = vmatprep.subr.mxu0 0.0
        %1812 = vmatpush1.msra.mxu0 0.0
        %1813 = vmatprep.subr.mxu0 0.0
        %1814 = vmatpush1.msra.mxu0 %v1758
        %1815 = vmatprep.subr.mxu0 0.0
        %1816 = vmatpush1.msra.mxu0 %v1756
        %1817 = vmatprep.subr.mxu0 0.0
        %1818 = vmatpush2.msra.mxu0 0.0
        %1819 = vmatprep.subr.mxu0 0.0
        %1820 = vmatpush2.msra.mxu0 0.0
        %1821 = vmatprep.subr.mxu0 0.0
        %1822 = vmatpush2.msra.mxu0 0.0
        %1823 = vmatprep.subr.mxu0 0.0
        %1824 = vmatpush2.msra.mxu0 0.0
        %1825 = vmatprep.subr.mxu0 0.0
        %1826 = vmatpush2.msra.mxu0 0.0
        %1827 = vmatprep.subr.mxu0 0.0
        %1828 = vmatpush2.msra.mxu0 0.0
        %1829 = vmatprep.subr.mxu0 0.0
        %1830 = vmatpush2.msra.mxu0 0.0
        %1831 = vmatprep.subr.mxu0 0.0
        %1832 = vmatpush2.msra.mxu0 0.0
        %1833 = vmatprep.subr.mxu0 0.0
        %1834 = vmatpush2.msra.mxu0 0.0
        %1835 = vmatprep.subr.mxu0 0.0
        %1836 = vmatpush2.msra.mxu0 0.0
        %1837 = vmatprep.subr.mxu0 0.0
        %1838 = vmatpush2.msra.mxu0 0.0
        %1839 = vmatprep.subr.mxu0 0.0
        %1840 = vmatpush2.msra.mxu0 0.0
        %1841 = vmatprep.subr.mxu0 0.0
        %1842 = vmatpush2.msra.mxu0 0.0
        %1843 = vmatprep.subr.mxu0 0.0
        %1844 = vmatpush2.msra.mxu0 0.0
        %1845 = vmatprep.subr.mxu0 0.0
        %1846 = vmatpush2.msra.mxu0 0.0
        %1847 = vmatprep.subr.mxu0 0.0
        %1848 = vmatpush2.msra.mxu0 0.0
        %1849 = vmatprep.mubr.f32.mxu0 0.0
        %1850 = vmatmul.mubr.f32.gmra.mxu0 %v1762
        %v1851 = vpop.f32.mrf.mxu0
        %v1852 = vadd.f32 0.0, %v1851
        %v1853 = vpop.f32.mrf.mxu0
        %1854 = vmatprep.mubr.f32.mxu0 0.0
        %1855 = vmatmul.mubr.f32.gmra.mxu0 %v1765
        %v1856 = vpop.f32.mrf.mxu0
        %v1857 = vadd.f32 0.0, %v1856
        %v1858 = vpop.f32.mrf.mxu0
        %1859 = vmatprep.mubr.f32.mxu0 0.0
        %1860 = vmatmul.mubr.f32.gmra.mxu0 %v1768
        %v1861 = vpop.f32.mrf.mxu0
        %v1862 = vadd.f32 0.0, %v1861
        %v1863 = vpop.f32.mrf.mxu0
        %1864 = vmatprep.mubr.f32.mxu0 0.0
        %1865 = vmatmul.mubr.f32.gmra.mxu0 %v1771
        %v1866 = vpop.f32.mrf.mxu0
        %v1867 = vadd.f32 0.0, %v1866
        %v1868 = vpop.f32.mrf.mxu0
        %1869 = vmatprep.mubr.f32.mxu0 0.0
        %1870 = vmatmul.mubr.f32.gmra.mxu0 %v1774
        %v1871 = vpop.f32.mrf.mxu0
        %v1872 = vadd.f32 0.0, %v1871
        %v1873 = vpop.f32.mrf.mxu0
        %1874 = vmatprep.mubr.f32.mxu0 0.0
        %1875 = vmatmul.mubr.f32.gmra.mxu0 %v1777
        %v1876 = vpop.f32.mrf.mxu0
        %v1877 = vadd.f32 0.0, %v1876
        %v1878 = vpop.f32.mrf.mxu0
        %1879 = vmatprep.mubr.f32.mxu0 0.0
        %1880 = vmatmul.mubr.f32.gmra.mxu0 %v1780
        %v1881 = vpop.f32.mrf.mxu0
        %v1882 = vadd.f32 0.0, %v1881
        %v1883 = vpop.f32.mrf.mxu0
        %1884 = vmatprep.mubr.f32.mxu0 0.0
        %1885 = vmatmul.mubr.f32.gmra.mxu0 %v1783
        %v1886 = vpop.f32.mrf.mxu0
        %v1887 = vadd.f32 0.0, %v1886
        %v1888 = vpop.f32.mrf.mxu0
        %1889 = vdwg.mxu0
        %v1890 = vld [vmem:[#allocation2] sm:$0xff]
        %v1891 = vld [vmem:[#allocation2 + $0x8] sm:$0xff]
        %v1892 = vld [vmem:[#allocation2 + $0x10] sm:$0xff]
        %v1893 = vld [vmem:[#allocation2 + $0x18] sm:$0xff]
        %v1894 = vld [vmem:[#allocation2 + $0x20] sm:$0xff]
        %v1895 = vld [vmem:[#allocation2 + $0x28] sm:$0xff]
        %v1896 = vld [vmem:[#allocation2 + $0x30] sm:$0xff]
        %v1897 = vld [vmem:[#allocation2 + $0x38] sm:$0xff]
        %1906 = vrot.lane.b32.xlu0 %v1852, 8
        %v1907 = vpop.permute.xlu0 %1906
        %1908 = vrot.lane.b32.xlu0 %v1857, 8
        %v1909 = vpop.permute.xlu0 %1908
        %1910 = vrot.lane.b32.xlu0 %v1862, 8
        %v1911 = vpop.permute.xlu0 %1910
        %1912 = vrot.lane.b32.xlu0 %v1867, 8
        %v1913 = vpop.permute.xlu0 %1912
        %1914 = vrot.lane.b32.xlu0 %v1872, 8
        %v1915 = vpop.permute.xlu0 %1914
        %1916 = vrot.lane.b32.xlu0 %v1877, 8
        %v1917 = vpop.permute.xlu0 %1916
        %1918 = vrot.lane.b32.xlu0 %v1882, 8
        %v1919 = vpop.permute.xlu0 %1918
        %1920 = vrot.lane.b32.xlu0 %v1887, 8
        %v1921 = vpop.permute.xlu0 %1920
        %v1930 = vadd.f32 %v1890, %v1907
        %v1931 = vadd.f32 %v1891, %v1909
        %v1932 = vadd.f32 %v1892, %v1911
        %v1933 = vadd.f32 %v1893, %v1913
        %v1934 = vadd.f32 %v1894, %v1915
        %v1935 = vadd.f32 %v1895, %v1917
        %v1936 = vadd.f32 %v1896, %v1919
        %v1937 = vadd.f32 %v1897, %v1921
        %vm1938 = vcmask 130112
        %1939 = vst.msk [vmem:[#allocation2] sm:$0xff] %vm1938, %v1930
        %1940 = vst.msk [vmem:[#allocation2 + $0x8] sm:$0xff] %vm1938, %v1931
        %1941 = vst.msk [vmem:[#allocation2 + $0x10] sm:$0xff] %vm1938, %v1932
        %1942 = vst.msk [vmem:[#allocation2 + $0x18] sm:$0xff] %vm1938, %v1933
        %1943 = vst.msk [vmem:[#allocation2 + $0x20] sm:$0xff] %vm1938, %v1934
        %1944 = vst.msk [vmem:[#allocation2 + $0x28] sm:$0xff] %vm1938, %v1935
        %1945 = vst.msk [vmem:[#allocation2 + $0x30] sm:$0xff] %vm1938, %v1936
        %1946 = vst.msk [vmem:[#allocation2 + $0x38] sm:$0xff] %vm1938, %v1937
        %1947 = vrot.lane.b32.xlu0 %v1049, 112
        %v1948 = vpop.permute.xlu0 %1947
        %1949 = vrot.lane.b32.xlu0 %v1050, 112
        %v1950 = vpop.permute.xlu0 %1949
        %1951 = vrot.lane.b32.xlu0 %v1051, 112
        %v1952 = vpop.permute.xlu0 %1951
        %1953 = vrot.lane.b32.xlu0 %v1052, 112
        %v1954 = vpop.permute.xlu0 %1953
        %1955 = vrot.lane.b32.xlu0 %v1053, 112
        %v1956 = vpop.permute.xlu0 %1955
        %1957 = vrot.lane.b32.xlu0 %v1054, 112
        %v1958 = vpop.permute.xlu0 %1957
        %1959 = vrot.lane.b32.xlu0 %v1055, 112
        %v1960 = vpop.permute.xlu0 %1959
        %1961 = vrot.lane.b32.xlu0 %v1056, 112
        %v1962 = vpop.permute.xlu0 %1961
        %1963 = vrot.lane.b32.xlu0 %v1124, 112
        %v1964 = vpop.permute.xlu0 %1963
        %1965 = vrot.lane.b32.xlu0 %v1130, 112
        %v1966 = vpop.permute.xlu0 %1965
        %v1967 = vsel %vm1142, %v1948, 0
        %v1969 = vsel %vm1142, %v1950, 0
        %v1971 = vsel %vm1142, %v1952, 0
        %v1973 = vsel %vm1142, %v1954, 0
        %v1975 = vsel %vm1142, %v1956, 0
        %v1977 = vsel %vm1142, %v1958, 0
        %v1979 = vsel %vm1142, %v1960, 0
        %v1981 = vsel %vm1142, %v1962, 0
        %v1983 = vsel %vm1142, %v1964, 0
        %v1985 = vsel %vm1142, %v1966, 0
        %1987 = vmatprep.subr.mxu0 0.0
        %1988 = vmatpush1.xpose.msra.mxu0 0.0
        %1989 = vmatprep.subr.mxu0 0.0
        %1990 = vmatpush1.xpose.msra.mxu0 0.0
        %1991 = vmatprep.subr.mxu0 0.0
        %1992 = vmatpush1.xpose.msra.mxu0 0.0
        %1993 = vmatprep.subr.mxu0 0.0
        %1994 = vmatpush1.xpose.msra.mxu0 0.0
        %1995 = vmatprep.subr.mxu0 0.0
        %1996 = vmatpush1.xpose.msra.mxu0 0.0
        %1997 = vmatprep.subr.mxu0 0.0
        %1998 = vmatpush1.xpose.msra.mxu0 0.0
        %1999 = vmatprep.subr.mxu0 0.0
        %2000 = vmatpush1.xpose.msra.mxu0 0.0
        %2001 = vmatprep.subr.mxu0 0.0
        %2002 = vmatpush1.xpose.msra.mxu0 0.0
        %2003 = vmatprep.subr.mxu0 0.0
        %2004 = vmatpush1.xpose.msra.mxu0 0.0
        %2005 = vmatprep.subr.mxu0 0.0
        %2006 = vmatpush1.xpose.msra.mxu0 0.0
        %2007 = vmatprep.subr.mxu0 0.0
        %2008 = vmatpush1.xpose.msra.mxu0 0.0
        %2009 = vmatprep.subr.mxu0 0.0
        %2010 = vmatpush1.xpose.msra.mxu0 0.0
        %2011 = vmatprep.subr.mxu0 0.0
        %2012 = vmatpush1.xpose.msra.mxu0 0.0
        %2013 = vmatprep.subr.mxu0 0.0
        %2014 = vmatpush1.xpose.msra.mxu0 0.0
        %2015 = vmatprep.subr.mxu0 0.0
        %2016 = vmatpush1.xpose.msra.mxu0 %v1985
        %2017 = vmatprep.subr.mxu0 0.0
        %2018 = vmatpush1.xpose.msra.mxu0 %v1983
        %2019 = vmatprep.subr.mxu0 0.0
        %2020 = vmatpush2.xpose.msra.mxu0 0.0
        %2021 = vmatprep.subr.mxu0 0.0
        %2022 = vmatpush2.xpose.msra.mxu0 0.0
        %2023 = vmatprep.subr.mxu0 0.0
        %2024 = vmatpush2.xpose.msra.mxu0 0.0
        %2025 = vmatprep.subr.mxu0 0.0
        %2026 = vmatpush2.xpose.msra.mxu0 0.0
        %2027 = vmatprep.subr.mxu0 0.0
        %2028 = vmatpush2.xpose.msra.mxu0 0.0
        %2029 = vmatprep.subr.mxu0 0.0
        %2030 = vmatpush2.xpose.msra.mxu0 0.0
        %2031 = vmatprep.subr.mxu0 0.0
        %2032 = vmatpush2.xpose.msra.mxu0 0.0
        %2033 = vmatprep.subr.mxu0 0.0
        %2034 = vmatpush2.xpose.msra.mxu0 0.0
        %2035 = vmatprep.subr.mxu0 0.0
        %2036 = vmatpush2.xpose.msra.mxu0 0.0
        %2037 = vmatprep.subr.mxu0 0.0
        %2038 = vmatpush2.xpose.msra.mxu0 0.0
        %2039 = vmatprep.subr.mxu0 0.0
        %2040 = vmatpush2.xpose.msra.mxu0 0.0
        %2041 = vmatprep.subr.mxu0 0.0
        %2042 = vmatpush2.xpose.msra.mxu0 0.0
        %2043 = vmatprep.subr.mxu0 0.0
        %2044 = vmatpush2.xpose.msra.mxu0 0.0
        %2045 = vmatprep.subr.mxu0 0.0
        %2046 = vmatpush2.xpose.msra.mxu0 0.0
        %2047 = vmatprep.subr.mxu0 0.0
        %2048 = vmatpush2.xpose.msra.mxu0 0.0
        %2049 = vmatprep.subr.mxu0 0.0
        %2050 = vmatpush2.xpose.msra.mxu0 0.0
        %2051 = vmatprep.mubr.f32.mxu0 0.0
        %2052 = vmatmul.mubr.f32.gmra.mxu0 %v1967
        %v2053 = vpop.f32.mrf.mxu0
        %v2054 = vadd.f32 0.0, %v2053
        %v2055 = vpop.f32.mrf.mxu0
        %2056 = vmatprep.mubr.f32.mxu0 0.0
        %2057 = vmatmul.mubr.f32.gmra.mxu0 %v1969
        %v2058 = vpop.f32.mrf.mxu0
        %v2059 = vadd.f32 0.0, %v2058
        %v2060 = vpop.f32.mrf.mxu0
        %2061 = vmatprep.mubr.f32.mxu0 0.0
        %2062 = vmatmul.mubr.f32.gmra.mxu0 %v1971
        %v2063 = vpop.f32.mrf.mxu0
        %v2064 = vadd.f32 0.0, %v2063
        %v2065 = vpop.f32.mrf.mxu0
        %2066 = vmatprep.mubr.f32.mxu0 0.0
        %2067 = vmatmul.mubr.f32.gmra.mxu0 %v1973
        %v2068 = vpop.f32.mrf.mxu0
        %v2069 = vadd.f32 0.0, %v2068
        %v2070 = vpop.f32.mrf.mxu0
        %2071 = vmatprep.mubr.f32.mxu0 0.0
        %2072 = vmatmul.mubr.f32.gmra.mxu0 %v1975
        %v2073 = vpop.f32.mrf.mxu0
        %v2074 = vadd.f32 0.0, %v2073
        %v2075 = vpop.f32.mrf.mxu0
        %2076 = vmatprep.mubr.f32.mxu0 0.0
        %2077 = vmatmul.mubr.f32.gmra.mxu0 %v1977
        %v2078 = vpop.f32.mrf.mxu0
        %v2079 = vadd.f32 0.0, %v2078
        %v2080 = vpop.f32.mrf.mxu0
        %2081 = vmatprep.mubr.f32.mxu0 0.0
        %2082 = vmatmul.mubr.f32.gmra.mxu0 %v1979
        %v2083 = vpop.f32.mrf.mxu0
        %v2084 = vadd.f32 0.0, %v2083
        %v2085 = vpop.f32.mrf.mxu0
        %2086 = vmatprep.mubr.f32.mxu0 0.0
        %2087 = vmatmul.mubr.f32.gmra.mxu0 %v1981
        %v2088 = vpop.f32.mrf.mxu0
        %v2089 = vadd.f32 0.0, %v2088
        %v2090 = vpop.f32.mrf.mxu0
        %2091 = vdwg.mxu0
        %v2092 = vsel %vm1278, %v2054, -inf
        %2093 = vmax.xlane.f32.xlu0 %v2092
        %v2094 = vpop.xlane.xlu0 %2093
        %v2095 = vsel %vm1278, %v2059, -inf
        %2096 = vmax.xlane.f32.xlu0 %v2095
        %v2097 = vpop.xlane.xlu0 %2096
        %v2098 = vsel %vm1278, %v2064, -inf
        %2099 = vmax.xlane.f32.xlu0 %v2098
        %v2100 = vpop.xlane.xlu0 %2099
        %v2101 = vsel %vm1278, %v2069, -inf
        %2102 = vmax.xlane.f32.xlu0 %v2101
        %v2103 = vpop.xlane.xlu0 %2102
        %v2104 = vsel %vm1278, %v2074, -inf
        %2105 = vmax.xlane.f32.xlu0 %v2104
        %v2106 = vpop.xlane.xlu0 %2105
        %v2107 = vsel %vm1278, %v2079, -inf
        %2108 = vmax.xlane.f32.xlu0 %v2107
        %v2109 = vpop.xlane.xlu0 %2108
        %v2110 = vsel %vm1278, %v2084, -inf
        %2111 = vmax.xlane.f32.xlu0 %v2110
        %v2112 = vpop.xlane.xlu0 %2111
        %v2113 = vsel %vm1278, %v2089, -inf
        %2114 = vmax.xlane.f32.xlu0 %v2113
        %v2115 = vpop.xlane.xlu0 %2114
        %v2116 = vsub.f32 %v2054, %v2094
        %v2117 = vsub.f32 %v2059, %v2097
        %v2118 = vsub.f32 %v2064, %v2100
        %v2119 = vsub.f32 %v2069, %v2103
        %v2120 = vsub.f32 %v2074, %v2106
        %v2121 = vsub.f32 %v2079, %v2109
        %v2122 = vsub.f32 %v2084, %v2112
        %v2123 = vsub.f32 %v2089, %v2115
        %v2124 = vmul.f32 %v2116, 1.442695
        %v2125 = vpow.pop %v2124
        %v2126 = vmul.f32 %v2117, 1.442695
        %v2127 = vpow.pop %v2126
        %v2128 = vmul.f32 %v2118, 1.442695
        %v2129 = vpow.pop %v2128
        %v2130 = vmul.f32 %v2119, 1.442695
        %v2131 = vpow.pop %v2130
        %v2132 = vmul.f32 %v2120, 1.442695
        %v2133 = vpow.pop %v2132
        %v2134 = vmul.f32 %v2121, 1.442695
        %v2135 = vpow.pop %v2134
        %v2136 = vmul.f32 %v2122, 1.442695
        %v2137 = vpow.pop %v2136
        %v2138 = vmul.f32 %v2123, 1.442695
        %v2139 = vpow.pop %v2138
        %v2140 = vsel %vm1278, %v2125, 0.0
        %2141 = vadd.xlane.f32.xlu0 %v2140
        %v2142 = vpop.xlane.xlu0 %2141
        %v2143 = vsel %vm1278, %v2127, 0.0
        %2144 = vadd.xlane.f32.xlu0 %v2143
        %v2145 = vpop.xlane.xlu0 %2144
        %v2146 = vsel %vm1278, %v2129, 0.0
        %2147 = vadd.xlane.f32.xlu0 %v2146
        %v2148 = vpop.xlane.xlu0 %2147
        %v2149 = vsel %vm1278, %v2131, 0.0
        %2150 = vadd.xlane.f32.xlu0 %v2149
        %v2151 = vpop.xlane.xlu0 %2150
        %v2152 = vsel %vm1278, %v2133, 0.0
        %2153 = vadd.xlane.f32.xlu0 %v2152
        %v2154 = vpop.xlane.xlu0 %2153
        %v2155 = vsel %vm1278, %v2135, 0.0
        %2156 = vadd.xlane.f32.xlu0 %v2155
        %v2157 = vpop.xlane.xlu0 %2156
        %v2158 = vsel %vm1278, %v2137, 0.0
        %2159 = vadd.xlane.f32.xlu0 %v2158
        %v2160 = vpop.xlane.xlu0 %2159
        %v2161 = vsel %vm1278, %v2139, 0.0
        %2162 = vadd.xlane.f32.xlu0 %v2161
        %v2163 = vpop.xlane.xlu0 %2162
        %v2164 = vrcp.pop %v2142
        %v2165 = vmul.f32 %v2125, %v2164
        %v2166 = vrcp.pop %v2145
        %v2167 = vmul.f32 %v2127, %v2166
        %v2168 = vrcp.pop %v2148
        %v2169 = vmul.f32 %v2129, %v2168
        %v2170 = vrcp.pop %v2151
        %v2171 = vmul.f32 %v2131, %v2170
        %v2172 = vrcp.pop %v2154
        %v2173 = vmul.f32 %v2133, %v2172
        %v2174 = vrcp.pop %v2157
        %v2175 = vmul.f32 %v2135, %v2174
        %v2176 = vrcp.pop %v2160
        %v2177 = vmul.f32 %v2137, %v2176
        %v2178 = vrcp.pop %v2163
        %v2179 = vmul.f32 %v2139, %v2178
        %2180 = vrot.lane.b32.xlu0 %v1126, 112
        %v2181 = vpop.permute.xlu0 %2180
        %2182 = vrot.lane.b32.xlu0 %v1132, 112
        %v2183 = vpop.permute.xlu0 %2182
        %v2187 = vsel %vm1278, %v2165, 0
        %v2190 = vsel %vm1278, %v2167, 0
        %v2193 = vsel %vm1278, %v2169, 0
        %v2196 = vsel %vm1278, %v2171, 0
        %v2199 = vsel %vm1278, %v2173, 0
        %v2202 = vsel %vm1278, %v2175, 0
        %v2205 = vsel %vm1278, %v2177, 0
        %v2208 = vsel %vm1278, %v2179, 0
        %2210 = vmatprep.subr.mxu0 0.0
        %2211 = vmatpush1.msra.mxu0 0.0
        %2212 = vmatprep.subr.mxu0 0.0
        %2213 = vmatpush1.msra.mxu0 0.0
        %2214 = vmatprep.subr.mxu0 0.0
        %2215 = vmatpush1.msra.mxu0 0.0
        %2216 = vmatprep.subr.mxu0 0.0
        %2217 = vmatpush1.msra.mxu0 0.0
        %2218 = vmatprep.subr.mxu0 0.0
        %2219 = vmatpush1.msra.mxu0 0.0
        %2220 = vmatprep.subr.mxu0 0.0
        %2221 = vmatpush1.msra.mxu0 0.0
        %2222 = vmatprep.subr.mxu0 0.0
        %2223 = vmatpush1.msra.mxu0 0.0
        %2224 = vmatprep.subr.mxu0 0.0
        %2225 = vmatpush1.msra.mxu0 0.0
        %2226 = vmatprep.subr.mxu0 0.0
        %2227 = vmatpush1.msra.mxu0 0.0
        %2228 = vmatprep.subr.mxu0 0.0
        %2229 = vmatpush1.msra.mxu0 0.0
        %2230 = vmatprep.subr.mxu0 0.0
        %2231 = vmatpush1.msra.mxu0 0.0
        %2232 = vmatprep.subr.mxu0 0.0
        %2233 = vmatpush1.msra.mxu0 0.0
        %2234 = vmatprep.subr.mxu0 0.0
        %2235 = vmatpush1.msra.mxu0 0.0
        %2236 = vmatprep.subr.mxu0 0.0
        %2237 = vmatpush1.msra.mxu0 0.0
        %2238 = vmatprep.subr.mxu0 0.0
        %2239 = vmatpush1.msra.mxu0 %v2183
        %2240 = vmatprep.subr.mxu0 0.0
        %2241 = vmatpush1.msra.mxu0 %v2181
        %2242 = vmatprep.subr.mxu0 0.0
        %2243 = vmatpush2.msra.mxu0 0.0
        %2244 = vmatprep.subr.mxu0 0.0
        %2245 = vmatpush2.msra.mxu0 0.0
        %2246 = vmatprep.subr.mxu0 0.0
        %2247 = vmatpush2.msra.mxu0 0.0
        %2248 = vmatprep.subr.mxu0 0.0
        %2249 = vmatpush2.msra.mxu0 0.0
        %2250 = vmatprep.subr.mxu0 0.0
        %2251 = vmatpush2.msra.mxu0 0.0
        %2252 = vmatprep.subr.mxu0 0.0
        %2253 = vmatpush2.msra.mxu0 0.0
        %2254 = vmatprep.subr.mxu0 0.0
        %2255 = vmatpush2.msra.mxu0 0.0
        %2256 = vmatprep.subr.mxu0 0.0
        %2257 = vmatpush2.msra.mxu0 0.0
        %2258 = vmatprep.subr.mxu0 0.0
        %2259 = vmatpush2.msra.mxu0 0.0
        %2260 = vmatprep.subr.mxu0 0.0
        %2261 = vmatpush2.msra.mxu0 0.0
        %2262 = vmatprep.subr.mxu0 0.0
        %2263 = vmatpush2.msra.mxu0 0.0
        %2264 = vmatprep.subr.mxu0 0.0
        %2265 = vmatpush2.msra.mxu0 0.0
        %2266 = vmatprep.subr.mxu0 0.0
        %2267 = vmatpush2.msra.mxu0 0.0
        %2268 = vmatprep.subr.mxu0 0.0
        %2269 = vmatpush2.msra.mxu0 0.0
        %2270 = vmatprep.subr.mxu0 0.0
        %2271 = vmatpush2.msra.mxu0 0.0
        %2272 = vmatprep.subr.mxu0 0.0
        %2273 = vmatpush2.msra.mxu0 0.0
        %2274 = vmatprep.mubr.f32.mxu0 0.0
        %2275 = vmatmul.mubr.f32.gmra.mxu0 %v2187
        %v2276 = vpop.f32.mrf.mxu0
        %v2277 = vadd.f32 0.0, %v2276
        %v2278 = vpop.f32.mrf.mxu0
        %2279 = vmatprep.mubr.f32.mxu0 0.0
        %2280 = vmatmul.mubr.f32.gmra.mxu0 %v2190
        %v2281 = vpop.f32.mrf.mxu0
        %v2282 = vadd.f32 0.0, %v2281
        %v2283 = vpop.f32.mrf.mxu0
        %2284 = vmatprep.mubr.f32.mxu0 0.0
        %2285 = vmatmul.mubr.f32.gmra.mxu0 %v2193
        %v2286 = vpop.f32.mrf.mxu0
        %v2287 = vadd.f32 0.0, %v2286
        %v2288 = vpop.f32.mrf.mxu0
        %2289 = vmatprep.mubr.f32.mxu0 0.0
        %2290 = vmatmul.mubr.f32.gmra.mxu0 %v2196
        %v2291 = vpop.f32.mrf.mxu0
        %v2292 = vadd.f32 0.0, %v2291
        %v2293 = vpop.f32.mrf.mxu0
        %2294 = vmatprep.mubr.f32.mxu0 0.0
        %2295 = vmatmul.mubr.f32.gmra.mxu0 %v2199
        %v2296 = vpop.f32.mrf.mxu0
        %v2297 = vadd.f32 0.0, %v2296
        %v2298 = vpop.f32.mrf.mxu0
        %2299 = vmatprep.mubr.f32.mxu0 0.0
        %2300 = vmatmul.mubr.f32.gmra.mxu0 %v2202
        %v2301 = vpop.f32.mrf.mxu0
        %v2302 = vadd.f32 0.0, %v2301
        %v2303 = vpop.f32.mrf.mxu0
        %2304 = vmatprep.mubr.f32.mxu0 0.0
        %2305 = vmatmul.mubr.f32.gmra.mxu0 %v2205
        %v2306 = vpop.f32.mrf.mxu0
        %v2307 = vadd.f32 0.0, %v2306
        %v2308 = vpop.f32.mrf.mxu0
        %2309 = vmatprep.mubr.f32.mxu0 0.0
        %2310 = vmatmul.mubr.f32.gmra.mxu0 %v2208
        %v2311 = vpop.f32.mrf.mxu0
        %v2312 = vadd.f32 0.0, %v2311
        %v2313 = vpop.f32.mrf.mxu0
        %2314 = vdwg.mxu0
        %v2315 = vld [vmem:[#allocation2] sm:$0xff]
        %v2316 = vld [vmem:[#allocation2 + $0x8] sm:$0xff]
        %v2317 = vld [vmem:[#allocation2 + $0x10] sm:$0xff]
        %v2318 = vld [vmem:[#allocation2 + $0x18] sm:$0xff]
        %v2319 = vld [vmem:[#allocation2 + $0x20] sm:$0xff]
        %v2320 = vld [vmem:[#allocation2 + $0x28] sm:$0xff]
        %v2321 = vld [vmem:[#allocation2 + $0x30] sm:$0xff]
        %v2322 = vld [vmem:[#allocation2 + $0x38] sm:$0xff]
        %2331 = vrot.lane.b32.xlu0 %v2277, 16
        %v2332 = vpop.permute.xlu0 %2331
        %2333 = vrot.lane.b32.xlu0 %v2282, 16
        %v2334 = vpop.permute.xlu0 %2333
        %2335 = vrot.lane.b32.xlu0 %v2287, 16
        %v2336 = vpop.permute.xlu0 %2335
        %2337 = vrot.lane.b32.xlu0 %v2292, 16
        %v2338 = vpop.permute.xlu0 %2337
        %2339 = vrot.lane.b32.xlu0 %v2297, 16
        %v2340 = vpop.permute.xlu0 %2339
        %2341 = vrot.lane.b32.xlu0 %v2302, 16
        %v2342 = vpop.permute.xlu0 %2341
        %2343 = vrot.lane.b32.xlu0 %v2307, 16
        %v2344 = vpop.permute.xlu0 %2343
        %2345 = vrot.lane.b32.xlu0 %v2312, 16
        %v2346 = vpop.permute.xlu0 %2345
        %v2355 = vadd.f32 %v2315, %v2332
        %v2356 = vadd.f32 %v2316, %v2334
        %v2357 = vadd.f32 %v2317, %v2336
        %v2358 = vadd.f32 %v2318, %v2338
        %v2359 = vadd.f32 %v2319, %v2340
        %v2360 = vadd.f32 %v2320, %v2342
        %v2361 = vadd.f32 %v2321, %v2344
        %v2362 = vadd.f32 %v2322, %v2346
        %vm2363 = vcmask 195712
        %2364 = vst.msk [vmem:[#allocation2] sm:$0xff] %vm2363, %v2355
        %2365 = vst.msk [vmem:[#allocation2 + $0x8] sm:$0xff] %vm2363, %v2356
        %2366 = vst.msk [vmem:[#allocation2 + $0x10] sm:$0xff] %vm2363, %v2357
        %2367 = vst.msk [vmem:[#allocation2 + $0x18] sm:$0xff] %vm2363, %v2358
        %2368 = vst.msk [vmem:[#allocation2 + $0x20] sm:$0xff] %vm2363, %v2359
        %2369 = vst.msk [vmem:[#allocation2 + $0x28] sm:$0xff] %vm2363, %v2360
        %2370 = vst.msk [vmem:[#allocation2 + $0x30] sm:$0xff] %vm2363, %v2361
        %2371 = vst.msk [vmem:[#allocation2 + $0x38] sm:$0xff] %vm2363, %v2362
        %2372 = vrot.lane.b32.xlu0 %v1049, 104
        %v2373 = vpop.permute.xlu0 %2372
        %2374 = vrot.lane.b32.xlu0 %v1050, 104
        %v2375 = vpop.permute.xlu0 %2374
        %2376 = vrot.lane.b32.xlu0 %v1051, 104
        %v2377 = vpop.permute.xlu0 %2376
        %2378 = vrot.lane.b32.xlu0 %v1052, 104
        %v2379 = vpop.permute.xlu0 %2378
        %2380 = vrot.lane.b32.xlu0 %v1053, 104
        %v2381 = vpop.permute.xlu0 %2380
        %2382 = vrot.lane.b32.xlu0 %v1054, 104
        %v2383 = vpop.permute.xlu0 %2382
        %2384 = vrot.lane.b32.xlu0 %v1055, 104
        %v2385 = vpop.permute.xlu0 %2384
        %2386 = vrot.lane.b32.xlu0 %v1056, 104
        %v2387 = vpop.permute.xlu0 %2386
        %2388 = vrot.lane.b32.xlu0 %v1124, 104
        %v2389 = vpop.permute.xlu0 %2388
        %2390 = vrot.lane.b32.xlu0 %v1130, 104
        %v2391 = vpop.permute.xlu0 %2390
        %v2392 = vsel %vm1142, %v2373, 0
        %v2394 = vsel %vm1142, %v2375, 0
        %v2396 = vsel %vm1142, %v2377, 0
        %v2398 = vsel %vm1142, %v2379, 0
        %v2400 = vsel %vm1142, %v2381, 0
        %v2402 = vsel %vm1142, %v2383, 0
        %v2404 = vsel %vm1142, %v2385, 0
        %v2406 = vsel %vm1142, %v2387, 0
        %v2408 = vsel %vm1142, %v2389, 0
        %v2410 = vsel %vm1142, %v2391, 0
        %2412 = vmatprep.subr.mxu0 0.0
        %2413 = vmatpush1.xpose.msra.mxu0 0.0
        %2414 = vmatprep.subr.mxu0 0.0
        %2415 = vmatpush1.xpose.msra.mxu0 0.0
        %2416 = vmatprep.subr.mxu0 0.0
        %2417 = vmatpush1.xpose.msra.mxu0 0.0
        %2418 = vmatprep.subr.mxu0 0.0
        %2419 = vmatpush1.xpose.msra.mxu0 0.0
        %2420 = vmatprep.subr.mxu0 0.0
        %2421 = vmatpush1.xpose.msra.mxu0 0.0
        %2422 = vmatprep.subr.mxu0 0.0
        %2423 = vmatpush1.xpose.msra.mxu0 0.0
        %2424 = vmatprep.subr.mxu0 0.0
        %2425 = vmatpush1.xpose.msra.mxu0 0.0
        %2426 = vmatprep.subr.mxu0 0.0
        %2427 = vmatpush1.xpose.msra.mxu0 0.0
        %2428 = vmatprep.subr.mxu0 0.0
        %2429 = vmatpush1.xpose.msra.mxu0 0.0
        %2430 = vmatprep.subr.mxu0 0.0
        %2431 = vmatpush1.xpose.msra.mxu0 0.0
        %2432 = vmatprep.subr.mxu0 0.0
        %2433 = vmatpush1.xpose.msra.mxu0 0.0
        %2434 = vmatprep.subr.mxu0 0.0
        %2435 = vmatpush1.xpose.msra.mxu0 0.0
        %2436 = vmatprep.subr.mxu0 0.0
        %2437 = vmatpush1.xpose.msra.mxu0 0.0
        %2438 = vmatprep.subr.mxu0 0.0
        %2439 = vmatpush1.xpose.msra.mxu0 0.0
        %2440 = vmatprep.subr.mxu0 0.0
        %2441 = vmatpush1.xpose.msra.mxu0 %v2410
        %2442 = vmatprep.subr.mxu0 0.0
        %2443 = vmatpush1.xpose.msra.mxu0 %v2408
        %2444 = vmatprep.subr.mxu0 0.0
        %2445 = vmatpush2.xpose.msra.mxu0 0.0
        %2446 = vmatprep.subr.mxu0 0.0
        %2447 = vmatpush2.xpose.msra.mxu0 0.0
        %2448 = vmatprep.subr.mxu0 0.0
        %2449 = vmatpush2.xpose.msra.mxu0 0.0
        %2450 = vmatprep.subr.mxu0 0.0
        %2451 = vmatpush2.xpose.msra.mxu0 0.0
        %2452 = vmatprep.subr.mxu0 0.0
        %2453 = vmatpush2.xpose.msra.mxu0 0.0
        %2454 = vmatprep.subr.mxu0 0.0
        %2455 = vmatpush2.xpose.msra.mxu0 0.0
        %2456 = vmatprep.subr.mxu0 0.0
        %2457 = vmatpush2.xpose.msra.mxu0 0.0
        %2458 = vmatprep.subr.mxu0 0.0
        %2459 = vmatpush2.xpose.msra.mxu0 0.0
        %2460 = vmatprep.subr.mxu0 0.0
        %2461 = vmatpush2.xpose.msra.mxu0 0.0
        %2462 = vmatprep.subr.mxu0 0.0
        %2463 = vmatpush2.xpose.msra.mxu0 0.0
        %2464 = vmatprep.subr.mxu0 0.0
        %2465 = vmatpush2.xpose.msra.mxu0 0.0
        %2466 = vmatprep.subr.mxu0 0.0
        %2467 = vmatpush2.xpose.msra.mxu0 0.0
        %2468 = vmatprep.subr.mxu0 0.0
        %2469 = vmatpush2.xpose.msra.mxu0 0.0
        %2470 = vmatprep.subr.mxu0 0.0
        %2471 = vmatpush2.xpose.msra.mxu0 0.0
        %2472 = vmatprep.subr.mxu0 0.0
        %2473 = vmatpush2.xpose.msra.mxu0 0.0
        %2474 = vmatprep.subr.mxu0 0.0
        %2475 = vmatpush2.xpose.msra.mxu0 0.0
        %2476 = vmatprep.mubr.f32.mxu0 0.0
        %2477 = vmatmul.mubr.f32.gmra.mxu0 %v2392
        %v2478 = vpop.f32.mrf.mxu0
        %v2479 = vadd.f32 0.0, %v2478
        %v2480 = vpop.f32.mrf.mxu0
        %2481 = vmatprep.mubr.f32.mxu0 0.0
        %2482 = vmatmul.mubr.f32.gmra.mxu0 %v2394
        %v2483 = vpop.f32.mrf.mxu0
        %v2484 = vadd.f32 0.0, %v2483
        %v2485 = vpop.f32.mrf.mxu0
        %2486 = vmatprep.mubr.f32.mxu0 0.0
        %2487 = vmatmul.mubr.f32.gmra.mxu0 %v2396
        %v2488 = vpop.f32.mrf.mxu0
        %v2489 = vadd.f32 0.0, %v2488
        %v2490 = vpop.f32.mrf.mxu0
        %2491 = vmatprep.mubr.f32.mxu0 0.0
        %2492 = vmatmul.mubr.f32.gmra.mxu0 %v2398
        %v2493 = vpop.f32.mrf.mxu0
        %v2494 = vadd.f32 0.0, %v2493
        %v2495 = vpop.f32.mrf.mxu0
        %2496 = vmatprep.mubr.f32.mxu0 0.0
        %2497 = vmatmul.mubr.f32.gmra.mxu0 %v2400
        %v2498 = vpop.f32.mrf.mxu0
        %v2499 = vadd.f32 0.0, %v2498
        %v2500 = vpop.f32.mrf.mxu0
        %2501 = vmatprep.mubr.f32.mxu0 0.0
        %2502 = vmatmul.mubr.f32.gmra.mxu0 %v2402
        %v2503 = vpop.f32.mrf.mxu0
        %v2504 = vadd.f32 0.0, %v2503
        %v2505 = vpop.f32.mrf.mxu0
        %2506 = vmatprep.mubr.f32.mxu0 0.0
        %2507 = vmatmul.mubr.f32.gmra.mxu0 %v2404
        %v2508 = vpop.f32.mrf.mxu0
        %v2509 = vadd.f32 0.0, %v2508
        %v2510 = vpop.f32.mrf.mxu0
        %2511 = vmatprep.mubr.f32.mxu0 0.0
        %2512 = vmatmul.mubr.f32.gmra.mxu0 %v2406
        %v2513 = vpop.f32.mrf.mxu0
        %v2514 = vadd.f32 0.0, %v2513
        %v2515 = vpop.f32.mrf.mxu0
        %2516 = vdwg.mxu0
        %v2517 = vsel %vm1278, %v2479, -inf
        %2518 = vmax.xlane.f32.xlu0 %v2517
        %v2519 = vpop.xlane.xlu0 %2518
        %v2520 = vsel %vm1278, %v2484, -inf
        %2521 = vmax.xlane.f32.xlu0 %v2520
        %v2522 = vpop.xlane.xlu0 %2521
        %v2523 = vsel %vm1278, %v2489, -inf
        %2524 = vmax.xlane.f32.xlu0 %v2523
        %v2525 = vpop.xlane.xlu0 %2524
        %v2526 = vsel %vm1278, %v2494, -inf
        %2527 = vmax.xlane.f32.xlu0 %v2526
        %v2528 = vpop.xlane.xlu0 %2527
        %v2529 = vsel %vm1278, %v2499, -inf
        %2530 = vmax.xlane.f32.xlu0 %v2529
        %v2531 = vpop.xlane.xlu0 %2530
        %v2532 = vsel %vm1278, %v2504, -inf
        %2533 = vmax.xlane.f32.xlu0 %v2532
        %v2534 = vpop.xlane.xlu0 %2533
        %v2535 = vsel %vm1278, %v2509, -inf
        %2536 = vmax.xlane.f32.xlu0 %v2535
        %v2537 = vpop.xlane.xlu0 %2536
        %v2538 = vsel %vm1278, %v2514, -inf
        %2539 = vmax.xlane.f32.xlu0 %v2538
        %v2540 = vpop.xlane.xlu0 %2539
        %v2541 = vsub.f32 %v2479, %v2519
        %v2542 = vsub.f32 %v2484, %v2522
        %v2543 = vsub.f32 %v2489, %v2525
        %v2544 = vsub.f32 %v2494, %v2528
        %v2545 = vsub.f32 %v2499, %v2531
        %v2546 = vsub.f32 %v2504, %v2534
        %v2547 = vsub.f32 %v2509, %v2537
        %v2548 = vsub.f32 %v2514, %v2540
        %v2549 = vmul.f32 %v2541, 1.442695
        %v2550 = vpow.pop %v2549
        %v2551 = vmul.f32 %v2542, 1.442695
        %v2552 = vpow.pop %v2551
        %v2553 = vmul.f32 %v2543, 1.442695
        %v2554 = vpow.pop %v2553
        %v2555 = vmul.f32 %v2544, 1.442695
        %v2556 = vpow.pop %v2555
        %v2557 = vmul.f32 %v2545, 1.442695
        %v2558 = vpow.pop %v2557
        %v2559 = vmul.f32 %v2546, 1.442695
        %v2560 = vpow.pop %v2559
        %v2561 = vmul.f32 %v2547, 1.442695
        %v2562 = vpow.pop %v2561
        %v2563 = vmul.f32 %v2548, 1.442695
        %v2564 = vpow.pop %v2563
        %v2565 = vsel %vm1278, %v2550, 0.0
        %2566 = vadd.xlane.f32.xlu0 %v2565
        %v2567 = vpop.xlane.xlu0 %2566
        %v2568 = vsel %vm1278, %v2552, 0.0
        %2569 = vadd.xlane.f32.xlu0 %v2568
        %v2570 = vpop.xlane.xlu0 %2569
        %v2571 = vsel %vm1278, %v2554, 0.0
        %2572 = vadd.xlane.f32.xlu0 %v2571
        %v2573 = vpop.xlane.xlu0 %2572
        %v2574 = vsel %vm1278, %v2556, 0.0
        %2575 = vadd.xlane.f32.xlu0 %v2574
        %v2576 = vpop.xlane.xlu0 %2575
        %v2577 = vsel %vm1278, %v2558, 0.0
        %2578 = vadd.xlane.f32.xlu0 %v2577
        %v2579 = vpop.xlane.xlu0 %2578
        %v2580 = vsel %vm1278, %v2560, 0.0
        %2581 = vadd.xlane.f32.xlu0 %v2580
        %v2582 = vpop.xlane.xlu0 %2581
        %v2583 = vsel %vm1278, %v2562, 0.0
        %2584 = vadd.xlane.f32.xlu0 %v2583
        %v2585 = vpop.xlane.xlu0 %2584
        %v2586 = vsel %vm1278, %v2564, 0.0
        %2587 = vadd.xlane.f32.xlu0 %v2586
        %v2588 = vpop.xlane.xlu0 %2587
        %v2589 = vrcp.pop %v2567
        %v2590 = vmul.f32 %v2550, %v2589
        %v2591 = vrcp.pop %v2570
        %v2592 = vmul.f32 %v2552, %v2591
        %v2593 = vrcp.pop %v2573
        %v2594 = vmul.f32 %v2554, %v2593
        %v2595 = vrcp.pop %v2576
        %v2596 = vmul.f32 %v2556, %v2595
        %v2597 = vrcp.pop %v2579
        %v2598 = vmul.f32 %v2558, %v2597
        %v2599 = vrcp.pop %v2582
        %v2600 = vmul.f32 %v2560, %v2599
        %v2601 = vrcp.pop %v2585
        %v2602 = vmul.f32 %v2562, %v2601
        %v2603 = vrcp.pop %v2588
        %v2604 = vmul.f32 %v2564, %v2603
        %2605 = vrot.lane.b32.xlu0 %v1126, 104
        %v2606 = vpop.permute.xlu0 %2605
        %2607 = vrot.lane.b32.xlu0 %v1132, 104
        %v2608 = vpop.permute.xlu0 %2607
        %v2612 = vsel %vm1278, %v2590, 0
        %v2615 = vsel %vm1278, %v2592, 0
        %v2618 = vsel %vm1278, %v2594, 0
        %v2621 = vsel %vm1278, %v2596, 0
        %v2624 = vsel %vm1278, %v2598, 0
        %v2627 = vsel %vm1278, %v2600, 0
        %v2630 = vsel %vm1278, %v2602, 0
        %v2633 = vsel %vm1278, %v2604, 0
        %2635 = vmatprep.subr.mxu0 0.0
        %2636 = vmatpush1.msra.mxu0 0.0
        %2637 = vmatprep.subr.mxu0 0.0
        %2638 = vmatpush1.msra.mxu0 0.0
        %2639 = vmatprep.subr.mxu0 0.0
        %2640 = vmatpush1.msra.mxu0 0.0
        %2641 = vmatprep.subr.mxu0 0.0
        %2642 = vmatpush1.msra.mxu0 0.0
        %2643 = vmatprep.subr.mxu0 0.0
        %2644 = vmatpush1.msra.mxu0 0.0
        %2645 = vmatprep.subr.mxu0 0.0
        %2646 = vmatpush1.msra.mxu0 0.0
        %2647 = vmatprep.subr.mxu0 0.0
        %2648 = vmatpush1.msra.mxu0 0.0
        %2649 = vmatprep.subr.mxu0 0.0
        %2650 = vmatpush1.msra.mxu0 0.0
        %2651 = vmatprep.subr.mxu0 0.0
        %2652 = vmatpush1.msra.mxu0 0.0
        %2653 = vmatprep.subr.mxu0 0.0
        %2654 = vmatpush1.msra.mxu0 0.0
        %2655 = vmatprep.subr.mxu0 0.0
        %2656 = vmatpush1.msra.mxu0 0.0
        %2657 = vmatprep.subr.mxu0 0.0
        %2658 = vmatpush1.msra.mxu0 0.0
        %2659 = vmatprep.subr.mxu0 0.0
        %2660 = vmatpush1.msra.mxu0 0.0
        %2661 = vmatprep.subr.mxu0 0.0
        %2662 = vmatpush1.msra.mxu0 0.0
        %2663 = vmatprep.subr.mxu0 0.0
        %2664 = vmatpush1.msra.mxu0 %v2608
        %2665 = vmatprep.subr.mxu0 0.0
        %2666 = vmatpush1.msra.mxu0 %v2606
        %2667 = vmatprep.subr.mxu0 0.0
        %2668 = vmatpush2.msra.mxu0 0.0
        %2669 = vmatprep.subr.mxu0 0.0
        %2670 = vmatpush2.msra.mxu0 0.0
        %2671 = vmatprep.subr.mxu0 0.0
        %2672 = vmatpush2.msra.mxu0 0.0
        %2673 = vmatprep.subr.mxu0 0.0
        %2674 = vmatpush2.msra.mxu0 0.0
        %2675 = vmatprep.subr.mxu0 0.0
        %2676 = vmatpush2.msra.mxu0 0.0
        %2677 = vmatprep.subr.mxu0 0.0
        %2678 = vmatpush2.msra.mxu0 0.0
        %2679 = vmatprep.subr.mxu0 0.0
        %2680 = vmatpush2.msra.mxu0 0.0
        %2681 = vmatprep.subr.mxu0 0.0
        %2682 = vmatpush2.msra.mxu0 0.0
        %2683 = vmatprep.subr.mxu0 0.0
        %2684 = vmatpush2.msra.mxu0 0.0
        %2685 = vmatprep.subr.mxu0 0.0
        %2686 = vmatpush2.msra.mxu0 0.0
        %2687 = vmatprep.subr.mxu0 0.0
        %2688 = vmatpush2.msra.mxu0 0.0
        %2689 = vmatprep.subr.mxu0 0.0
        %2690 = vmatpush2.msra.mxu0 0.0
        %2691 = vmatprep.subr.mxu0 0.0
        %2692 = vmatpush2.msra.mxu0 0.0
        %2693 = vmatprep.subr.mxu0 0.0
        %2694 = vmatpush2.msra.mxu0 0.0
        %2695 = vmatprep.subr.mxu0 0.0
        %2696 = vmatpush2.msra.mxu0 0.0
        %2697 = vmatprep.subr.mxu0 0.0
        %2698 = vmatpush2.msra.mxu0 0.0
        %2699 = vmatprep.mubr.f32.mxu0 0.0
        %2700 = vmatmul.mubr.f32.gmra.mxu0 %v2612
        %v2701 = vpop.f32.mrf.mxu0
        %v2702 = vadd.f32 0.0, %v2701
        %v2703 = vpop.f32.mrf.mxu0
        %2704 = vmatprep.mubr.f32.mxu0 0.0
        %2705 = vmatmul.mubr.f32.gmra.mxu0 %v2615
        %v2706 = vpop.f32.mrf.mxu0
        %v2707 = vadd.f32 0.0, %v2706
        %v2708 = vpop.f32.mrf.mxu0
        %2709 = vmatprep.mubr.f32.mxu0 0.0
        %2710 = vmatmul.mubr.f32.gmra.mxu0 %v2618
        %v2711 = vpop.f32.mrf.mxu0
        %v2712 = vadd.f32 0.0, %v2711
        %v2713 = vpop.f32.mrf.mxu0
        %2714 = vmatprep.mubr.f32.mxu0 0.0
        %2715 = vmatmul.mubr.f32.gmra.mxu0 %v2621
        %v2716 = vpop.f32.mrf.mxu0
        %v2717 = vadd.f32 0.0, %v2716
        %v2718 = vpop.f32.mrf.mxu0
        %2719 = vmatprep.mubr.f32.mxu0 0.0
        %2720 = vmatmul.mubr.f32.gmra.mxu0 %v2624
        %v2721 = vpop.f32.mrf.mxu0
        %v2722 = vadd.f32 0.0, %v2721
        %v2723 = vpop.f32.mrf.mxu0
        %2724 = vmatprep.mubr.f32.mxu0 0.0
        %2725 = vmatmul.mubr.f32.gmra.mxu0 %v2627
        %v2726 = vpop.f32.mrf.mxu0
        %v2727 = vadd.f32 0.0, %v2726
        %v2728 = vpop.f32.mrf.mxu0
        %2729 = vmatprep.mubr.f32.mxu0 0.0
        %2730 = vmatmul.mubr.f32.gmra.mxu0 %v2630
        %v2731 = vpop.f32.mrf.mxu0
        %v2732 = vadd.f32 0.0, %v2731
        %v2733 = vpop.f32.mrf.mxu0
        %2734 = vmatprep.mubr.f32.mxu0 0.0
        %2735 = vmatmul.mubr.f32.gmra.mxu0 %v2633
        %v2736 = vpop.f32.mrf.mxu0
        %v2737 = vadd.f32 0.0, %v2736
        %v2738 = vpop.f32.mrf.mxu0
        %2739 = vdwg.mxu0
        %v2740 = vld [vmem:[#allocation2] sm:$0xff]
        %v2741 = vld [vmem:[#allocation2 + $0x8] sm:$0xff]
        %v2742 = vld [vmem:[#allocation2 + $0x10] sm:$0xff]
        %v2743 = vld [vmem:[#allocation2 + $0x18] sm:$0xff]
        %v2744 = vld [vmem:[#allocation2 + $0x20] sm:$0xff]
        %v2745 = vld [vmem:[#allocation2 + $0x28] sm:$0xff]
        %v2746 = vld [vmem:[#allocation2 + $0x30] sm:$0xff]
        %v2747 = vld [vmem:[#allocation2 + $0x38] sm:$0xff]
        %2756 = vrot.lane.b32.xlu0 %v2702, 24
        %v2757 = vpop.permute.xlu0 %2756
        %2758 = vrot.lane.b32.xlu0 %v2707, 24
        %v2759 = vpop.permute.xlu0 %2758
        %2760 = vrot.lane.b32.xlu0 %v2712, 24
        %v2761 = vpop.permute.xlu0 %2760
        %2762 = vrot.lane.b32.xlu0 %v2717, 24
        %v2763 = vpop.permute.xlu0 %2762
        %2764 = vrot.lane.b32.xlu0 %v2722, 24
        %v2765 = vpop.permute.xlu0 %2764
        %2766 = vrot.lane.b32.xlu0 %v2727, 24
        %v2767 = vpop.permute.xlu0 %2766
        %2768 = vrot.lane.b32.xlu0 %v2732, 24
        %v2769 = vpop.permute.xlu0 %2768
        %2770 = vrot.lane.b32.xlu0 %v2737, 24
        %v2771 = vpop.permute.xlu0 %2770
        %v2780 = vadd.f32 %v2740, %v2757
        %v2781 = vadd.f32 %v2741, %v2759
        %v2782 = vadd.f32 %v2742, %v2761
        %v2783 = vadd.f32 %v2743, %v2763
        %v2784 = vadd.f32 %v2744, %v2765
        %v2785 = vadd.f32 %v2745, %v2767
        %v2786 = vadd.f32 %v2746, %v2769
        %v2787 = vadd.f32 %v2747, %v2771
        %vm2788 = vcmask 261312
        %2789 = vst.msk [vmem:[#allocation2] sm:$0xff] %vm2788, %v2780
        %2790 = vst.msk [vmem:[#allocation2 + $0x8] sm:$0xff] %vm2788, %v2781
        %2791 = vst.msk [vmem:[#allocation2 + $0x10] sm:$0xff] %vm2788, %v2782
        %2792 = vst.msk [vmem:[#allocation2 + $0x18] sm:$0xff] %vm2788, %v2783
        %2793 = vst.msk [vmem:[#allocation2 + $0x20] sm:$0xff] %vm2788, %v2784
        %2794 = vst.msk [vmem:[#allocation2 + $0x28] sm:$0xff] %vm2788, %v2785
        %2795 = vst.msk [vmem:[#allocation2 + $0x30] sm:$0xff] %vm2788, %v2786
        %2796 = vst.msk [vmem:[#allocation2 + $0x38] sm:$0xff] %vm2788, %v2787
        %v2797 = vld [vmem:[#allocation2] sm:$0xff]
        %v2798 = vld [vmem:[#allocation2 + $0x8] sm:$0xff]
        %v2799 = vld [vmem:[#allocation2 + $0x10] sm:$0xff]
        %v2800 = vld [vmem:[#allocation2 + $0x18] sm:$0xff]
        %v2801 = vld [vmem:[#allocation2 + $0x20] sm:$0xff]
        %v2802 = vld [vmem:[#allocation2 + $0x28] sm:$0xff]
        %v2803 = vld [vmem:[#allocation2 + $0x30] sm:$0xff]
        %v2804 = vld [vmem:[#allocation2 + $0x38] sm:$0xff]
        %v2805 = vld [vmem:[#allocation11] sm:$0xff]
        %v2806 = vld [vmem:[#allocation11 + $0x8] sm:$0xff]
        %v2807 = vld [vmem:[#allocation11 + $0x10] sm:$0xff]
        %v2808 = vld [vmem:[#allocation11 + $0x18] sm:$0xff]
        %v2809 = vld [vmem:[#allocation11 + $0x20] sm:$0xff]
        %v2810 = vld [vmem:[#allocation11 + $0x28] sm:$0xff]
        %v2811 = vld [vmem:[#allocation11 + $0x30] sm:$0xff]
        %v2812 = vld [vmem:[#allocation11 + $0x38] sm:$0xff]
        %v2813 = vld [vmem:[#allocation11 + $0x40] sm:$0xff]
        %v2814 = vld [vmem:[#allocation11 + $0x48] sm:$0xff]
        %v2815 = vld [vmem:[#allocation11 + $0x50] sm:$0xff]
        %v2816 = vld [vmem:[#allocation11 + $0x58] sm:$0xff]
        %v2817 = vld [vmem:[#allocation11 + $0x60] sm:$0xff]
        %v2818 = vld [vmem:[#allocation11 + $0x68] sm:$0xff]
        %v2819 = vld [vmem:[#allocation11 + $0x70] sm:$0xff]
        %v2820 = vld [vmem:[#allocation11 + $0x78] sm:$0xff]
        %v2821 = vld [vmem:[%s5] sm:$0x1]
        %v2823 = vlaneseq
        %v2824 = vshrl.u32 %v2823, 7
        %v2825 = vsub.s32 0, %v2824
        %v2826 = vrot.slane %v2821, %v2825
        %2828 = vmatprep.subr.mxu0 0.0
        %2829 = vmatpush1.msra.mxu0 %v2820
        %2830 = vmatprep.subr.mxu0 0.0
        %2831 = vmatpush1.msra.mxu0 %v2819
        %2832 = vmatprep.subr.mxu0 0.0
        %2833 = vmatpush1.msra.mxu0 %v2818
        %2834 = vmatprep.subr.mxu0 0.0
        %2835 = vmatpush1.msra.mxu0 %v2817
        %2836 = vmatprep.subr.mxu0 0.0
        %2837 = vmatpush1.msra.mxu0 %v2816
        %2838 = vmatprep.subr.mxu0 0.0
        %2839 = vmatpush1.msra.mxu0 %v2815
        %2840 = vmatprep.subr.mxu0 0.0
        %2841 = vmatpush1.msra.mxu0 %v2814
        %2842 = vmatprep.subr.mxu0 0.0
        %2843 = vmatpush1.msra.mxu0 %v2813
        %2844 = vmatprep.subr.mxu0 0.0
        %2845 = vmatpush1.msra.mxu0 %v2812
        %2846 = vmatprep.subr.mxu0 0.0
        %2847 = vmatpush1.msra.mxu0 %v2811
        %2848 = vmatprep.subr.mxu0 0.0
        %2849 = vmatpush1.msra.mxu0 %v2810
        %2850 = vmatprep.subr.mxu0 0.0
        %2851 = vmatpush1.msra.mxu0 %v2809
        %2852 = vmatprep.subr.mxu0 0.0
        %2853 = vmatpush1.msra.mxu0 %v2808
        %2854 = vmatprep.subr.mxu0 0.0
        %2855 = vmatpush1.msra.mxu0 %v2807
        %2856 = vmatprep.subr.mxu0 0.0
        %2857 = vmatpush1.msra.mxu0 %v2806
        %2858 = vmatprep.subr.mxu0 0.0
        %2859 = vmatpush1.msra.mxu0 %v2805
        %2860 = vmatprep.subr.mxu0 0.0
        %2861 = vmatpush2.msra.mxu0 0.0
        %2862 = vmatprep.subr.mxu0 0.0
        %2863 = vmatpush2.msra.mxu0 0.0
        %2864 = vmatprep.subr.mxu0 0.0
        %2865 = vmatpush2.msra.mxu0 0.0
        %2866 = vmatprep.subr.mxu0 0.0
        %2867 = vmatpush2.msra.mxu0 0.0
        %2868 = vmatprep.subr.mxu0 0.0
        %2869 = vmatpush2.msra.mxu0 0.0
        %2870 = vmatprep.subr.mxu0 0.0
        %2871 = vmatpush2.msra.mxu0 0.0
        %2872 = vmatprep.subr.mxu0 0.0
        %2873 = vmatpush2.msra.mxu0 0.0
        %2874 = vmatprep.subr.mxu0 0.0
        %2875 = vmatpush2.msra.mxu0 0.0
        %2876 = vmatprep.subr.mxu0 0.0
        %2877 = vmatpush2.msra.mxu0 0.0
        %2878 = vmatprep.subr.mxu0 0.0
        %2879 = vmatpush2.msra.mxu0 0.0
        %2880 = vmatprep.subr.mxu0 0.0
        %2881 = vmatpush2.msra.mxu0 0.0
        %2882 = vmatprep.subr.mxu0 0.0
        %2883 = vmatpush2.msra.mxu0 0.0
        %2884 = vmatprep.subr.mxu0 0.0
        %2885 = vmatpush2.msra.mxu0 0.0
        %2886 = vmatprep.subr.mxu0 0.0
        %2887 = vmatpush2.msra.mxu0 0.0
        %2888 = vmatprep.subr.mxu0 0.0
        %2889 = vmatpush2.msra.mxu0 0.0
        %2890 = vmatprep.subr.mxu0 0.0
        %2891 = vmatpush2.msra.mxu0 0.0
        %2892 = vmatprep.mubr.f32.mxu0 0.0
        %2893 = vmatmul.mubr.f32.gmra.mxu0 %v2797
        %v2894 = vpop.f32.mrf.mxu0
        %v2895 = vadd.f32 %v2826, %v2894
        %v2896 = vpop.f32.mrf.mxu0
        %2897 = vmatprep.mubr.f32.mxu0 0.0
        %2898 = vmatmul.mubr.f32.gmra.mxu0 %v2798
        %v2899 = vpop.f32.mrf.mxu0
        %v2900 = vadd.f32 %v2826, %v2899
        %v2901 = vpop.f32.mrf.mxu0
        %2902 = vmatprep.mubr.f32.mxu0 0.0
        %2903 = vmatmul.mubr.f32.gmra.mxu0 %v2799
        %v2904 = vpop.f32.mrf.mxu0
        %v2905 = vadd.f32 %v2826, %v2904
        %v2906 = vpop.f32.mrf.mxu0
        %2907 = vmatprep.mubr.f32.mxu0 0.0
        %2908 = vmatmul.mubr.f32.gmra.mxu0 %v2800
        %v2909 = vpop.f32.mrf.mxu0
        %v2910 = vadd.f32 %v2826, %v2909
        %v2911 = vpop.f32.mrf.mxu0
        %2912 = vmatprep.mubr.f32.mxu0 0.0
        %2913 = vmatmul.mubr.f32.gmra.mxu0 %v2801
        %v2914 = vpop.f32.mrf.mxu0
        %v2915 = vadd.f32 %v2826, %v2914
        %v2916 = vpop.f32.mrf.mxu0
        %2917 = vmatprep.mubr.f32.mxu0 0.0
        %2918 = vmatmul.mubr.f32.gmra.mxu0 %v2802
        %v2919 = vpop.f32.mrf.mxu0
        %v2920 = vadd.f32 %v2826, %v2919
        %v2921 = vpop.f32.mrf.mxu0
        %2922 = vmatprep.mubr.f32.mxu0 0.0
        %2923 = vmatmul.mubr.f32.gmra.mxu0 %v2803
        %v2924 = vpop.f32.mrf.mxu0
        %v2925 = vadd.f32 %v2826, %v2924
        %v2926 = vpop.f32.mrf.mxu0
        %2927 = vmatprep.mubr.f32.mxu0 0.0
        %2928 = vmatmul.mubr.f32.gmra.mxu0 %v2804
        %v2929 = vpop.f32.mrf.mxu0
        %v2930 = vadd.f32 %v2826, %v2929
        %v2931 = vpop.f32.mrf.mxu0
        %2932 = vdwg.mxu0
        %v2933 = vld [vmem:[#allocation18] sm:$0xff]
        %v2934 = vld [vmem:[#allocation18 + $0x8] sm:$0xff]
        %v2935 = vld [vmem:[#allocation18 + $0x10] sm:$0xff]
        %v2936 = vld [vmem:[#allocation18 + $0x18] sm:$0xff]
        %v2937 = vld [vmem:[#allocation18 + $0x20] sm:$0xff]
        %v2938 = vld [vmem:[#allocation18 + $0x28] sm:$0xff]
        %v2939 = vld [vmem:[#allocation18 + $0x30] sm:$0xff]
        %v2940 = vld [vmem:[#allocation18 + $0x38] sm:$0xff]
        %v2941 = vld [vmem:[%s15] sm:$0x1]
        %v2942 = vld [vmem:[%s16] sm:$0x1]
        %v2943 = vld [vmem:[%s17] sm:$0x1]
        %v2944 = vmul.f32 %v2895, %v2933
        %v2945 = vmul.f32 %v2900, %v2934
        %v2946 = vmul.f32 %v2905, %v2935
        %v2947 = vmul.f32 %v2910, %v2936
        %v2948 = vmul.f32 %v2915, %v2937
        %v2949 = vmul.f32 %v2920, %v2938
        %v2950 = vmul.f32 %v2925, %v2939
        %v2951 = vmul.f32 %v2930, %v2940
        %v2953 = vlaneseq
        %v2954 = vshrl.u32 %v2953, 7
        %v2955 = vsub.s32 0, %v2954
        %v2956 = vrot.slane %v2941, %v2955
        %2958 = vmatprep.subr.mxu0 0.0
        %2959 = vmatpush1.msra.mxu0 0.0
        %2960 = vmatprep.subr.mxu0 0.0
        %2961 = vmatpush1.msra.mxu0 0.0
        %2962 = vmatprep.subr.mxu0 0.0
        %2963 = vmatpush1.msra.mxu0 0.0
        %2964 = vmatprep.subr.mxu0 0.0
        %2965 = vmatpush1.msra.mxu0 0.0
        %2966 = vmatprep.subr.mxu0 0.0
        %2967 = vmatpush1.msra.mxu0 0.0
        %2968 = vmatprep.subr.mxu0 0.0
        %2969 = vmatpush1.msra.mxu0 0.0
        %2970 = vmatprep.subr.mxu0 0.0
        %2971 = vmatpush1.msra.mxu0 0.0
        %2972 = vmatprep.subr.mxu0 0.0
        %2973 = vmatpush1.msra.mxu0 0.0
        %2974 = vmatprep.subr.mxu0 0.0
        %2975 = vmatpush1.msra.mxu0 %v2951
        %2976 = vmatprep.subr.mxu0 0.0
        %2977 = vmatpush1.msra.mxu0 %v2950
        %2978 = vmatprep.subr.mxu0 0.0
        %2979 = vmatpush1.msra.mxu0 %v2949
        %2980 = vmatprep.subr.mxu0 0.0
        %2981 = vmatpush1.msra.mxu0 %v2948
        %2982 = vmatprep.subr.mxu0 0.0
        %2983 = vmatpush1.msra.mxu0 %v2947
        %2984 = vmatprep.subr.mxu0 0.0
        %2985 = vmatpush1.msra.mxu0 %v2946
        %2986 = vmatprep.subr.mxu0 0.0
        %2987 = vmatpush1.msra.mxu0 %v2945
        %2988 = vmatprep.subr.mxu0 0.0
        %2989 = vmatpush1.msra.mxu0 %v2944
        %2990 = vmatprep.subr.mxu0 0.0
        %2991 = vmatpush2.msra.mxu0 0.0
        %2992 = vmatprep.subr.mxu0 0.0
        %2993 = vmatpush2.msra.mxu0 0.0
        %2994 = vmatprep.subr.mxu0 0.0
        %2995 = vmatpush2.msra.mxu0 0.0
        %2996 = vmatprep.subr.mxu0 0.0
        %2997 = vmatpush2.msra.mxu0 0.0
        %2998 = vmatprep.subr.mxu0 0.0
        %2999 = vmatpush2.msra.mxu0 0.0
        %3000 = vmatprep.subr.mxu0 0.0
        %3001 = vmatpush2.msra.mxu0 0.0
        %3002 = vmatprep.subr.mxu0 0.0
        %3003 = vmatpush2.msra.mxu0 0.0
        %3004 = vmatprep.subr.mxu0 0.0
        %3005 = vmatpush2.msra.mxu0 0.0
        %3006 = vmatprep.subr.mxu0 0.0
        %3007 = vmatpush2.msra.mxu0 0.0
        %3008 = vmatprep.subr.mxu0 0.0
        %3009 = vmatpush2.msra.mxu0 0.0
        %3010 = vmatprep.subr.mxu0 0.0
        %3011 = vmatpush2.msra.mxu0 0.0
        %3012 = vmatprep.subr.mxu0 0.0
        %3013 = vmatpush2.msra.mxu0 0.0
        %3014 = vmatprep.subr.mxu0 0.0
        %3015 = vmatpush2.msra.mxu0 0.0
        %3016 = vmatprep.subr.mxu0 0.0
        %3017 = vmatpush2.msra.mxu0 0.0
        %3018 = vmatprep.subr.mxu0 0.0
        %3019 = vmatpush2.msra.mxu0 0.0
        %3020 = vmatprep.subr.mxu0 0.0
        %3021 = vmatpush2.msra.mxu0 0.0
        %3022 = vmatprep.mubr.f32.mxu0 0.0
        %3023 = vmatmul.mubr.f32.gmra.mxu0 %v764
        %v3024 = vpop.f32.mrf.mxu0
        %v3025 = vadd.f32 %v2956, %v3024
        %v3026 = vpop.f32.mrf.mxu0
        %3027 = vmatprep.mubr.f32.mxu0 0.0
        %3028 = vmatmul.mubr.f32.gmra.mxu0 %v767
        %v3029 = vpop.f32.mrf.mxu0
        %v3030 = vadd.f32 %v2956, %v3029
        %v3031 = vpop.f32.mrf.mxu0
        %3032 = vdwg.mxu0
        %3033 = vadd.xlane.f32.xlu0 %v3025
        %v3034 = vpop.xlane.xlu0 %3033
        %3035 = vadd.xlane.f32.xlu0 %v3030
        %v3036 = vpop.xlane.xlu0 %3035
        %v3037 = vmul.f32 %v3034, 0.03125
        %v3038 = vmul.f32 %v3036, 0.03125
        %v3039 = vmul.f32 %v3025, %v3025
        %v3040 = vmul.f32 %v3030, %v3030
        %3041 = vadd.xlane.f32.xlu0 %v3039
        %v3042 = vpop.xlane.xlu0 %3041
        %3043 = vadd.xlane.f32.xlu0 %v3040
        %v3044 = vpop.xlane.xlu0 %3043
        %v3045 = vmul.f32 %v3042, 0.03125
        %v3046 = vmul.f32 %v3044, 0.03125
        %v3047 = vmul.f32 %v3037, %v3037
        %v3048 = vmul.f32 %v3038, %v3038
        %v3049 = vsub.f32 %v3045, %v3047
        %v3050 = vsub.f32 %v3046, %v3048
        %v3051 = vsub.f32 %v3025, %v3037
        %v3052 = vsub.f32 %v3030, %v3038
        %v3053 = vadd.f32 %v3049, 1e-05
        %v3054 = vadd.f32 %v3050, 1e-05
        %v3055 = vrsqrt.pop %v3053
        %v3056 = vrsqrt.pop %v3054
        %v3057 = vmul.f32 %v3051, %v3055
        %v3058 = vmul.f32 %v3052, %v3056
        %v3060 = vlaneseq
        %v3061 = vshrl.u32 %v3060, 7
        %v3062 = vsub.s32 0, %v3061
        %v3063 = vrot.slane %v2942, %v3062
        %v3065 = vmul.f32 %v3057, %v3063
        %v3066 = vmul.f32 %v3058, %v3063
        %v3068 = vlaneseq
        %v3069 = vshrl.u32 %v3068, 7
        %v3070 = vsub.s32 0, %v3069
        %v3071 = vrot.slane %v2943, %v3070
        %v3073 = vadd.f32 %v3065, %v3071
        %v3074 = vadd.f32 %v3066, %v3071
        %v3075 = vmul.f32 %v3073, 0.5
        %v3076 = vmul.f32 %v3074, 0.5
        %v3077 = vmul.f32 %v3073, 0.70710677
        %v3078 = vmul.f32 %v3074, 0.70710677
        %v3079 = verf.f32.pop %v3077
        %v3080 = verf.f32.pop %v3078
        %v3081 = vadd.f32 %v3079, 1.0
        %v3082 = vadd.f32 %v3080, 1.0
        %v3083 = vmul.f32 %v3075, %v3081
        %v3084 = vmul.f32 %v3076, %v3082
        %v3085 = vld [vmem:[#allocation14] sm:$0xff]
        %v3086 = vld [vmem:[#allocation14 + $0x8] sm:$0xff]
        %v3087 = vld [vmem:[#allocation14 + $0x10] sm:$0xff]
        %v3088 = vld [vmem:[#allocation14 + $0x18] sm:$0xff]
        %v3089 = vld [vmem:[#allocation14 + $0x20] sm:$0xff]
        %v3090 = vld [vmem:[#allocation14 + $0x28] sm:$0xff]
        %v3091 = vld [vmem:[#allocation14 + $0x30] sm:$0xff]
        %v3092 = vld [vmem:[#allocation14 + $0x38] sm:$0xff]
        %v3093 = vld [vmem:[#allocation14 + $0x40] sm:$0xff]
        %v3094 = vld [vmem:[#allocation14 + $0x48] sm:$0xff]
        %v3095 = vld [vmem:[#allocation14 + $0x50] sm:$0xff]
        %v3096 = vld [vmem:[#allocation14 + $0x58] sm:$0xff]
        %v3097 = vld [vmem:[#allocation14 + $0x60] sm:$0xff]
        %v3098 = vld [vmem:[#allocation14 + $0x68] sm:$0xff]
        %v3099 = vld [vmem:[#allocation14 + $0x70] sm:$0xff]
        %v3100 = vld [vmem:[#allocation14 + $0x78] sm:$0xff]
        %v3101 = vld [vmem:[#allocation15] sm:$0xff]
        %v3102 = vld [vmem:[#allocation15 + $0x8] sm:$0xff]
        %v3103 = vld [vmem:[#allocation15 + $0x10] sm:$0xff]
        %v3104 = vld [vmem:[#allocation15 + $0x18] sm:$0xff]
        %v3105 = vld [vmem:[#allocation15 + $0x20] sm:$0xff]
        %v3106 = vld [vmem:[#allocation15 + $0x28] sm:$0xff]
        %v3107 = vld [vmem:[#allocation15 + $0x30] sm:$0xff]
        %v3108 = vld [vmem:[#allocation15 + $0x38] sm:$0xff]
        %v3109 = vld [vmem:[#allocation15 + $0x40] sm:$0xff]
        %v3110 = vld [vmem:[#allocation15 + $0x48] sm:$0xff]
        %v3111 = vld [vmem:[#allocation15 + $0x50] sm:$0xff]
        %v3112 = vld [vmem:[#allocation15 + $0x58] sm:$0xff]
        %v3113 = vld [vmem:[#allocation15 + $0x60] sm:$0xff]
        %v3114 = vld [vmem:[#allocation15 + $0x68] sm:$0xff]
        %v3115 = vld [vmem:[#allocation15 + $0x70] sm:$0xff]
        %v3116 = vld [vmem:[#allocation15 + $0x78] sm:$0xff]
        %v3117 = vld [vmem:[#allocation15 + $0x80] sm:$0xff]
        %v3118 = vld [vmem:[#allocation15 + $0x88] sm:$0xff]
        %v3119 = vld [vmem:[#allocation15 + $0x90] sm:$0xff]
        %v3120 = vld [vmem:[#allocation15 + $0x98] sm:$0xff]
        %v3121 = vld [vmem:[#allocation15 + $0xa0] sm:$0xff]
        %v3122 = vld [vmem:[#allocation15 + $0xa8] sm:$0xff]
        %v3123 = vld [vmem:[#allocation15 + $0xb0] sm:$0xff]
        %v3124 = vld [vmem:[#allocation15 + $0xb8] sm:$0xff]
        %v3125 = vld [vmem:[#allocation15 + $0xc0] sm:$0xff]
        %v3126 = vld [vmem:[#allocation15 + $0xc8] sm:$0xff]
        %v3127 = vld [vmem:[#allocation15 + $0xd0] sm:$0xff]
        %v3128 = vld [vmem:[#allocation15 + $0xd8] sm:$0xff]
        %v3129 = vld [vmem:[#allocation15 + $0xe0] sm:$0xff]
        %v3130 = vld [vmem:[#allocation15 + $0xe8] sm:$0xff]
        %v3131 = vld [vmem:[#allocation15 + $0xf0] sm:$0xff]
        %v3132 = vld [vmem:[#allocation15 + $0xf8] sm:$0xff]
        %3133 = vmatprep.subr.mxu0 0.0
        %3134 = vmatpush1.msra.mxu0 %v3100
        %3135 = vmatprep.subr.mxu0 0.0
        %3136 = vmatpush1.msra.mxu0 %v3099
        %3137 = vmatprep.subr.mxu0 0.0
        %3138 = vmatpush1.msra.mxu0 %v3098
        %3139 = vmatprep.subr.mxu0 0.0
        %3140 = vmatpush1.msra.mxu0 %v3097
        %3141 = vmatprep.subr.mxu0 0.0
        %3142 = vmatpush1.msra.mxu0 %v3096
        %3143 = vmatprep.subr.mxu0 0.0
        %3144 = vmatpush1.msra.mxu0 %v3095
        %3145 = vmatprep.subr.mxu0 0.0
        %3146 = vmatpush1.msra.mxu0 %v3094
        %3147 = vmatprep.subr.mxu0 0.0
        %3148 = vmatpush1.msra.mxu0 %v3093
        %3149 = vmatprep.subr.mxu0 0.0
        %3150 = vmatpush1.msra.mxu0 %v3092
        %3151 = vmatprep.subr.mxu0 0.0
        %3152 = vmatpush1.msra.mxu0 %v3091
        %3153 = vmatprep.subr.mxu0 0.0
        %3154 = vmatpush1.msra.mxu0 %v3090
        %3155 = vmatprep.subr.mxu0 0.0
        %3156 = vmatpush1.msra.mxu0 %v3089
        %3157 = vmatprep.subr.mxu0 0.0
        %3158 = vmatpush1.msra.mxu0 %v3088
        %3159 = vmatprep.subr.mxu0 0.0
        %3160 = vmatpush1.msra.mxu0 %v3087
        %3161 = vmatprep.subr.mxu0 0.0
        %3162 = vmatpush1.msra.mxu0 %v3086
        %3163 = vmatprep.subr.mxu0 0.0
        %3164 = vmatpush1.msra.mxu0 %v3085
        %3165 = vmatprep.subr.mxu0 0.0
        %3166 = vmatpush2.msra.mxu0 0.0
        %3167 = vmatprep.subr.mxu0 0.0
        %3168 = vmatpush2.msra.mxu0 0.0
        %3169 = vmatprep.subr.mxu0 0.0
        %3170 = vmatpush2.msra.mxu0 0.0
        %3171 = vmatprep.subr.mxu0 0.0
        %3172 = vmatpush2.msra.mxu0 0.0
        %3173 = vmatprep.subr.mxu0 0.0
        %3174 = vmatpush2.msra.mxu0 0.0
        %3175 = vmatprep.subr.mxu0 0.0
        %3176 = vmatpush2.msra.mxu0 0.0
        %3177 = vmatprep.subr.mxu0 0.0
        %3178 = vmatpush2.msra.mxu0 0.0
        %3179 = vmatprep.subr.mxu0 0.0
        %3180 = vmatpush2.msra.mxu0 0.0
        %3181 = vmatprep.subr.mxu0 0.0
        %3182 = vmatpush2.msra.mxu0 0.0
        %3183 = vmatprep.subr.mxu0 0.0
        %3184 = vmatpush2.msra.mxu0 0.0
        %3185 = vmatprep.subr.mxu0 0.0
        %3186 = vmatpush2.msra.mxu0 0.0
        %3187 = vmatprep.subr.mxu0 0.0
        %3188 = vmatpush2.msra.mxu0 0.0
        %3189 = vmatprep.subr.mxu0 0.0
        %3190 = vmatpush2.msra.mxu0 0.0
        %3191 = vmatprep.subr.mxu0 0.0
        %3192 = vmatpush2.msra.mxu0 0.0
        %3193 = vmatprep.subr.mxu0 0.0
        %3194 = vmatpush2.msra.mxu0 0.0
        %3195 = vmatprep.subr.mxu0 0.0
        %3196 = vmatpush2.msra.mxu0 0.0
        %3197 = vmatprep.mubr.f32.mxu0 0.0
        %3198 = vmatmul.mubr.f32.gmra.mxu0 %v2895
        %v3199 = vpop.f32.mrf.mxu0
        %v3200 = vadd.f32 0.0, %v3199
        %v3201 = vpop.f32.mrf.mxu0
        %3202 = vmatprep.mubr.f32.mxu0 0.0
        %3203 = vmatmul.mubr.f32.gmra.mxu0 %v2900
        %v3204 = vpop.f32.mrf.mxu0
        %v3205 = vadd.f32 0.0, %v3204
        %v3206 = vpop.f32.mrf.mxu0
        %3207 = vmatprep.mubr.f32.mxu0 0.0
        %3208 = vmatmul.mubr.f32.gmra.mxu0 %v2905
        %v3209 = vpop.f32.mrf.mxu0
        %v3210 = vadd.f32 0.0, %v3209
        %v3211 = vpop.f32.mrf.mxu0
        %3212 = vmatprep.mubr.f32.mxu0 0.0
        %3213 = vmatmul.mubr.f32.gmra.mxu0 %v2910
        %v3214 = vpop.f32.mrf.mxu0
        %v3215 = vadd.f32 0.0, %v3214
        %v3216 = vpop.f32.mrf.mxu0
        %3217 = vmatprep.mubr.f32.mxu0 0.0
        %3218 = vmatmul.mubr.f32.gmra.mxu0 %v2915
        %v3219 = vpop.f32.mrf.mxu0
        %v3220 = vadd.f32 0.0, %v3219
        %v3221 = vpop.f32.mrf.mxu0
        %3222 = vmatprep.mubr.f32.mxu0 0.0
        %3223 = vmatmul.mubr.f32.gmra.mxu0 %v2920
        %v3224 = vpop.f32.mrf.mxu0
        %v3225 = vadd.f32 0.0, %v3224
        %v3226 = vpop.f32.mrf.mxu0
        %3227 = vmatprep.mubr.f32.mxu0 0.0
        %3228 = vmatmul.mubr.f32.gmra.mxu0 %v2925
        %v3229 = vpop.f32.mrf.mxu0
        %v3230 = vadd.f32 0.0, %v3229
        %v3231 = vpop.f32.mrf.mxu0
        %3232 = vmatprep.mubr.f32.mxu0 0.0
        %3233 = vmatmul.mubr.f32.gmra.mxu0 %v2930
        %v3234 = vpop.f32.mrf.mxu0
        %v3235 = vadd.f32 0.0, %v3234
        %v3236 = vpop.f32.mrf.mxu0
        %3237 = vdwg.mxu0
        %v3238 = vmul.f32 %v3200, 0.35355338
        %v3239 = vmul.f32 %v3205, 0.35355338
        %v3240 = vmul.f32 %v3210, 0.35355338
        %v3241 = vmul.f32 %v3215, 0.35355338
        %v3242 = vmul.f32 %v3220, 0.35355338
        %v3243 = vmul.f32 %v3225, 0.35355338
        %v3244 = vmul.f32 %v3230, 0.35355338
        %v3245 = vmul.f32 %v3235, 0.35355338
        %3246 = vmatprep.subr.mxu0 %v3132
        %3247 = vmatpush1.msra.mxu0 %v3131
        %3248 = vmatprep.subr.mxu0 %v3130
        %3249 = vmatpush1.msra.mxu0 %v3129
        %3250 = vmatprep.subr.mxu0 %v3128
        %3251 = vmatpush1.msra.mxu0 %v3127
        %3252 = vmatprep.subr.mxu0 %v3126
        %3253 = vmatpush1.msra.mxu0 %v3125
        %3254 = vmatprep.subr.mxu0 %v3124
        %3255 = vmatpush1.msra.mxu0 %v3123
        %3256 = vmatprep.subr.mxu0 %v3122
        %3257 = vmatpush1.msra.mxu0 %v3121
        %3258 = vmatprep.subr.mxu0 %v3120
        %3259 = vmatpush1.msra.mxu0 %v3119
        %3260 = vmatprep.subr.mxu0 %v3118
        %3261 = vmatpush1.msra.mxu0 %v3117
        %3262 = vmatprep.subr.mxu0 %v3116
        %3263 = vmatpush1.msra.mxu0 %v3115
        %3264 = vmatprep.subr.mxu0 %v3114
        %3265 = vmatpush1.msra.mxu0 %v3113
        %3266 = vmatprep.subr.mxu0 %v3112
        %3267 = vmatpush1.msra.mxu0 %v3111
        %3268 = vmatprep.subr.mxu0 %v3110
        %3269 = vmatpush1.msra.mxu0 %v3109
        %3270 = vmatprep.subr.mxu0 %v3108
        %3271 = vmatpush1.msra.mxu0 %v3107
        %3272 = vmatprep.subr.mxu0 %v3106
        %3273 = vmatpush1.msra.mxu0 %v3105
        %3274 = vmatprep.subr.mxu0 %v3104
        %3275 = vmatpush1.msra.mxu0 %v3103
        %3276 = vmatprep.subr.mxu0 %v3102
        %3277 = vmatpush1.msra.mxu0 %v3101
        %3278 = vmatprep.subr.mxu0 0.0
        %3279 = vmatpush2.msra.mxu0 0.0
        %3280 = vmatprep.subr.mxu0 0.0
        %3281 = vmatpush2.msra.mxu0 0.0
        %3282 = vmatprep.subr.mxu0 0.0
        %3283 = vmatpush2.msra.mxu0 0.0
        %3284 = vmatprep.subr.mxu0 0.0
        %3285 = vmatpush2.msra.mxu0 0.0
        %3286 = vmatprep.subr.mxu0 0.0
        %3287 = vmatpush2.msra.mxu0 0.0
        %3288 = vmatprep.subr.mxu0 0.0
        %3289 = vmatpush2.msra.mxu0 0.0
        %3290 = vmatprep.subr.mxu0 0.0
        %3291 = vmatpush2.msra.mxu0 0.0
        %3292 = vmatprep.subr.mxu0 0.0
        %3293 = vmatpush2.msra.mxu0 0.0
        %3294 = vmatprep.subr.mxu0 0.0
        %3295 = vmatpush2.msra.mxu0 0.0
        %3296 = vmatprep.subr.mxu0 0.0
        %3297 = vmatpush2.msra.mxu0 0.0
        %3298 = vmatprep.subr.mxu0 0.0
        %3299 = vmatpush2.msra.mxu0 0.0
        %3300 = vmatprep.subr.mxu0 0.0
        %3301 = vmatpush2.msra.mxu0 0.0
        %3302 = vmatprep.subr.mxu0 0.0
        %3303 = vmatpush2.msra.mxu0 0.0
        %3304 = vmatprep.subr.mxu0 0.0
        %3305 = vmatpush2.msra.mxu0 0.0
        %3306 = vmatprep.subr.mxu0 0.0
        %3307 = vmatpush2.msra.mxu0 0.0
        %3308 = vmatprep.subr.mxu0 0.0
        %3309 = vmatpush2.msra.mxu0 0.0
        %3310 = vmatprep.mubr.f32.mxu0 0.0
        %3311 = vmatmul.mubr.f32.gmra.mxu0 %v3083
        %v3312 = vpop.f32.mrf.mxu0
        %v3313 = vadd.f32 0.0, %v3312
        %v3314 = vpop.f32.mrf.mxu0
        %v3315 = vadd.f32 0.0, %v3314
        %3316 = vmatprep.mubr.f32.mxu0 0.0
        %3317 = vmatmul.mubr.f32.gmra.mxu0 %v3084
        %v3318 = vpop.f32.mrf.mxu0
        %v3319 = vadd.f32 0.0, %v3318
        %v3320 = vpop.f32.mrf.mxu0
        %v3321 = vadd.f32 0.0, %v3320
        %3322 = vdwg.mxu0
        %3323 = vst [vmem:[#allocation2] sm:$0xff] %v2895
        %3324 = vst [vmem:[#allocation2 + $0x8] sm:$0xff] %v2900
        %3325 = vst [vmem:[#allocation2 + $0x10] sm:$0xff] %v2905
        %3326 = vst [vmem:[#allocation2 + $0x18] sm:$0xff] %v2910
        %3327 = vst [vmem:[#allocation2 + $0x20] sm:$0xff] %v2915
        %3328 = vst [vmem:[#allocation2 + $0x28] sm:$0xff] %v2920
        %3329 = vst [vmem:[#allocation2 + $0x30] sm:$0xff] %v2925
        %3330 = vst [vmem:[#allocation2 + $0x38] sm:$0xff] %v2930
        %v3332 = vsel %vm1142, %v3238, 0
        %v3335 = vsel %vm1142, %v3239, 0
        %v3338 = vsel %vm1142, %v3240, 0
        %v3341 = vsel %vm1142, %v3241, 0
        %v3344 = vsel %vm1142, %v3242, 0
        %v3347 = vsel %vm1142, %v3243, 0
        %v3350 = vsel %vm1142, %v3244, 0
        %v3353 = vsel %vm1142, %v3245, 0
        %v3356 = vsel %vm1142, %v3313, 0
        %v3359 = vsel %vm1142, %v3319, 0
        %3361 = vmatprep.subr.mxu0 0.0
        %3362 = vmatpush1.xpose.msra.mxu0 0.0
        %3363 = vmatprep.subr.mxu0 0.0
        %3364 = vmatpush1.xpose.msra.mxu0 0.0
        %3365 = vmatprep.subr.mxu0 0.0
        %3366 = vmatpush1.xpose.msra.mxu0 0.0
        %3367 = vmatprep.subr.mxu0 0.0
        %3368 = vmatpush1.xpose.msra.mxu0 0.0
        %3369 = vmatprep.subr.mxu0 0.0
        %3370 = vmatpush1.xpose.msra.mxu0 0.0
        %3371 = vmatprep.subr.mxu0 0.0
        %3372 = vmatpush1.xpose.msra.mxu0 0.0
        %3373 = vmatprep.subr.mxu0 0.0
        %3374 = vmatpush1.xpose.msra.mxu0 0.0
        %3375 = vmatprep.subr.mxu0 0.0
        %3376 = vmatpush1.xpose.msra.mxu0 0.0
        %3377 = vmatprep.subr.mxu0 0.0
        %3378 = vmatpush1.xpose.msra.mxu0 0.0
        %3379 = vmatprep.subr.mxu0 0.0
        %3380 = vmatpush1.xpose.msra.mxu0 0.0
        %3381 = vmatprep.subr.mxu0 0.0
        %3382 = vmatpush1.xpose.msra.mxu0 0.0
        %3383 = vmatprep.subr.mxu0 0.0
        %3384 = vmatpush1.xpose.msra.mxu0 0.0
        %3385 = vmatprep.subr.mxu0 0.0
        %3386 = vmatpush1.xpose.msra.mxu0 0.0
        %3387 = vmatprep.subr.mxu0 0.0
        %3388 = vmatpush1.xpose.msra.mxu0 0.0
        %3389 = vmatprep.subr.mxu0 0.0
        %3390 = vmatpush1.xpose.msra.mxu0 %v3359
        %3391 = vmatprep.subr.mxu0 0.0
        %3392 = vmatpush1.xpose.msra.mxu0 %v3356
        %3393 = vmatprep.subr.mxu0 0.0
        %3394 = vmatpush2.xpose.msra.mxu0 0.0
        %3395 = vmatprep.subr.mxu0 0.0
        %3396 = vmatpush2.xpose.msra.mxu0 0.0
        %3397 = vmatprep.subr.mxu0 0.0
        %3398 = vmatpush2.xpose.msra.mxu0 0.0
        %3399 = vmatprep.subr.mxu0 0.0
        %3400 = vmatpush2.xpose.msra.mxu0 0.0
        %3401 = vmatprep.subr.mxu0 0.0
        %3402 = vmatpush2.xpose.msra.mxu0 0.0
        %3403 = vmatprep.subr.mxu0 0.0
        %3404 = vmatpush2.xpose.msra.mxu0 0.0
        %3405 = vmatprep.subr.mxu0 0.0
        %3406 = vmatpush2.xpose.msra.mxu0 0.0
        %3407 = vmatprep.subr.mxu0 0.0
        %3408 = vmatpush2.xpose.msra.mxu0 0.0
        %3409 = vmatprep.subr.mxu0 0.0
        %3410 = vmatpush2.xpose.msra.mxu0 0.0
        %3411 = vmatprep.subr.mxu0 0.0
        %3412 = vmatpush2.xpose.msra.mxu0 0.0
        %3413 = vmatprep.subr.mxu0 0.0
        %3414 = vmatpush2.xpose.msra.mxu0 0.0
        %3415 = vmatprep.subr.mxu0 0.0
        %3416 = vmatpush2.xpose.msra.mxu0 0.0
        %3417 = vmatprep.subr.mxu0 0.0
        %3418 = vmatpush2.xpose.msra.mxu0 0.0
        %3419 = vmatprep.subr.mxu0 0.0
        %3420 = vmatpush2.xpose.msra.mxu0 0.0
        %3421 = vmatprep.subr.mxu0 0.0
        %3422 = vmatpush2.xpose.msra.mxu0 0.0
        %3423 = vmatprep.subr.mxu0 0.0
        %3424 = vmatpush2.xpose.msra.mxu0 0.0
        %3425 = vmatprep.mubr.f32.mxu0 0.0
        %3426 = vmatmul.mubr.f32.gmra.mxu0 %v3332
        %v3427 = vpop.f32.mrf.mxu0
        %v3428 = vadd.f32 0.0, %v3427
        %v3429 = vpop.f32.mrf.mxu0
        %3430 = vmatprep.mubr.f32.mxu0 0.0
        %3431 = vmatmul.mubr.f32.gmra.mxu0 %v3335
        %v3432 = vpop.f32.mrf.mxu0
        %v3433 = vadd.f32 0.0, %v3432
        %v3434 = vpop.f32.mrf.mxu0
        %3435 = vmatprep.mubr.f32.mxu0 0.0
        %3436 = vmatmul.mubr.f32.gmra.mxu0 %v3338
        %v3437 = vpop.f32.mrf.mxu0
        %v3438 = vadd.f32 0.0, %v3437
        %v3439 = vpop.f32.mrf.mxu0
        %3440 = vmatprep.mubr.f32.mxu0 0.0
        %3441 = vmatmul.mubr.f32.gmra.mxu0 %v3341
        %v3442 = vpop.f32.mrf.mxu0
        %v3443 = vadd.f32 0.0, %v3442
        %v3444 = vpop.f32.mrf.mxu0
        %3445 = vmatprep.mubr.f32.mxu0 0.0
        %3446 = vmatmul.mubr.f32.gmra.mxu0 %v3344
        %v3447 = vpop.f32.mrf.mxu0
        %v3448 = vadd.f32 0.0, %v3447
        %v3449 = vpop.f32.mrf.mxu0
        %3450 = vmatprep.mubr.f32.mxu0 0.0
        %3451 = vmatmul.mubr.f32.gmra.mxu0 %v3347
        %v3452 = vpop.f32.mrf.mxu0
        %v3453 = vadd.f32 0.0, %v3452
        %v3454 = vpop.f32.mrf.mxu0
        %3455 = vmatprep.mubr.f32.mxu0 0.0
        %3456 = vmatmul.mubr.f32.gmra.mxu0 %v3350
        %v3457 = vpop.f32.mrf.mxu0
        %v3458 = vadd.f32 0.0, %v3457
        %v3459 = vpop.f32.mrf.mxu0
        %3460 = vmatprep.mubr.f32.mxu0 0.0
        %3461 = vmatmul.mubr.f32.gmra.mxu0 %v3353
        %v3462 = vpop.f32.mrf.mxu0
        %v3463 = vadd.f32 0.0, %v3462
        %v3464 = vpop.f32.mrf.mxu0
        %3465 = vdwg.mxu0
        %v3466 = vsel %vm1278, %v3428, -inf
        %3467 = vmax.xlane.f32.xlu0 %v3466
        %v3468 = vpop.xlane.xlu0 %3467
        %v3469 = vsel %vm1278, %v3433, -inf
        %3470 = vmax.xlane.f32.xlu0 %v3469
        %v3471 = vpop.xlane.xlu0 %3470
        %v3472 = vsel %vm1278, %v3438, -inf
        %3473 = vmax.xlane.f32.xlu0 %v3472
        %v3474 = vpop.xlane.xlu0 %3473
        %v3475 = vsel %vm1278, %v3443, -inf
        %3476 = vmax.xlane.f32.xlu0 %v3475
        %v3477 = vpop.xlane.xlu0 %3476
        %v3478 = vsel %vm1278, %v3448, -inf
        %3479 = vmax.xlane.f32.xlu0 %v3478
        %v3480 = vpop.xlane.xlu0 %3479
        %v3481 = vsel %vm1278, %v3453, -inf
        %3482 = vmax.xlane.f32.xlu0 %v3481
        %v3483 = vpop.xlane.xlu0 %3482
        %v3484 = vsel %vm1278, %v3458, -inf
        %3485 = vmax.xlane.f32.xlu0 %v3484
        %v3486 = vpop.xlane.xlu0 %3485
        %v3487 = vsel %vm1278, %v3463, -inf
        %3488 = vmax.xlane.f32.xlu0 %v3487
        %v3489 = vpop.xlane.xlu0 %3488
        %v3490 = vsub.f32 %v3428, %v3468
        %v3491 = vsub.f32 %v3433, %v3471
        %v3492 = vsub.f32 %v3438, %v3474
        %v3493 = vsub.f32 %v3443, %v3477
        %v3494 = vsub.f32 %v3448, %v3480
        %v3495 = vsub.f32 %v3453, %v3483
        %v3496 = vsub.f32 %v3458, %v3486
        %v3497 = vsub.f32 %v3463, %v3489
        %v3498 = vmul.f32 %v3490, 1.442695
        %v3499 = vpow.pop %v3498
        %v3500 = vmul.f32 %v3491, 1.442695
        %v3501 = vpow.pop %v3500
        %v3502 = vmul.f32 %v3492, 1.442695
        %v3503 = vpow.pop %v3502
        %v3504 = vmul.f32 %v3493, 1.442695
        %v3505 = vpow.pop %v3504
        %v3506 = vmul.f32 %v3494, 1.442695
        %v3507 = vpow.pop %v3506
        %v3508 = vmul.f32 %v3495, 1.442695
        %v3509 = vpow.pop %v3508
        %v3510 = vmul.f32 %v3496, 1.442695
        %v3511 = vpow.pop %v3510
        %v3512 = vmul.f32 %v3497, 1.442695
        %v3513 = vpow.pop %v3512
        %v3514 = vsel %vm1278, %v3499, 0.0
        %3515 = vadd.xlane.f32.xlu0 %v3514
        %v3516 = vpop.xlane.xlu0 %3515
        %v3517 = vsel %vm1278, %v3501, 0.0
        %3518 = vadd.xlane.f32.xlu0 %v3517
        %v3519 = vpop.xlane.xlu0 %3518
        %v3520 = vsel %vm1278, %v3503, 0.0
        %3521 = vadd.xlane.f32.xlu0 %v3520
        %v3522 = vpop.xlane.xlu0 %3521
        %v3523 = vsel %vm1278, %v3505, 0.0
        %3524 = vadd.xlane.f32.xlu0 %v3523
        %v3525 = vpop.xlane.xlu0 %3524
        %v3526 = vsel %vm1278, %v3507, 0.0
        %3527 = vadd.xlane.f32.xlu0 %v3526
        %v3528 = vpop.xlane.xlu0 %3527
        %v3529 = vsel %vm1278, %v3509, 0.0
        %3530 = vadd.xlane.f32.xlu0 %v3529
        %v3531 = vpop.xlane.xlu0 %3530
        %v3532 = vsel %vm1278, %v3511, 0.0
        %3533 = vadd.xlane.f32.xlu0 %v3532
        %v3534 = vpop.xlane.xlu0 %3533
        %v3535 = vsel %vm1278, %v3513, 0.0
        %3536 = vadd.xlane.f32.xlu0 %v3535
        %v3537 = vpop.xlane.xlu0 %3536
        %v3538 = vrcp.pop %v3516
        %v3539 = vmul.f32 %v3499, %v3538
        %v3540 = vrcp.pop %v3519
        %v3541 = vmul.f32 %v3501, %v3540
        %v3542 = vrcp.pop %v3522
        %v3543 = vmul.f32 %v3503, %v3542
        %v3544 = vrcp.pop %v3525
        %v3545 = vmul.f32 %v3505, %v3544
        %v3546 = vrcp.pop %v3528
        %v3547 = vmul.f32 %v3507, %v3546
        %v3548 = vrcp.pop %v3531
        %v3549 = vmul.f32 %v3509, %v3548
        %v3550 = vrcp.pop %v3534
        %v3551 = vmul.f32 %v3511, %v3550
        %v3552 = vrcp.pop %v3537
        %v3553 = vmul.f32 %v3513, %v3552
        %v3555 = vsel %vm1278, %v3539, 0
        %v3558 = vsel %vm1278, %v3541, 0
        %v3561 = vsel %vm1278, %v3543, 0
        %v3564 = vsel %vm1278, %v3545, 0
        %v3567 = vsel %vm1278, %v3547, 0
        %v3570 = vsel %vm1278, %v3549, 0
        %v3573 = vsel %vm1278, %v3551, 0
        %v3576 = vsel %vm1278, %v3553, 0
        %3578 = vmatprep.subr.mxu0 0.0
        %3579 = vmatpush1.msra.mxu0 0.0
        %3580 = vmatprep.subr.mxu0 0.0
        %3581 = vmatpush1.msra.mxu0 0.0
        %3582 = vmatprep.subr.mxu0 0.0
        %3583 = vmatpush1.msra.mxu0 0.0
        %3584 = vmatprep.subr.mxu0 0.0
        %3585 = vmatpush1.msra.mxu0 0.0
        %3586 = vmatprep.subr.mxu0 0.0
        %3587 = vmatpush1.msra.mxu0 0.0
        %3588 = vmatprep.subr.mxu0 0.0
        %3589 = vmatpush1.msra.mxu0 0.0
        %3590 = vmatprep.subr.mxu0 0.0
        %3591 = vmatpush1.msra.mxu0 0.0
        %3592 = vmatprep.subr.mxu0 0.0
        %3593 = vmatpush1.msra.mxu0 0.0
        %3594 = vmatprep.subr.mxu0 0.0
        %3595 = vmatpush1.msra.mxu0 0.0
        %3596 = vmatprep.subr.mxu0 0.0
        %3597 = vmatpush1.msra.mxu0 0.0
        %3598 = vmatprep.subr.mxu0 0.0
        %3599 = vmatpush1.msra.mxu0 0.0
        %3600 = vmatprep.subr.mxu0 0.0
        %3601 = vmatpush1.msra.mxu0 0.0
        %3602 = vmatprep.subr.mxu0 0.0
        %3603 = vmatpush1.msra.mxu0 0.0
        %3604 = vmatprep.subr.mxu0 0.0
        %3605 = vmatpush1.msra.mxu0 0.0
        %3606 = vmatprep.subr.mxu0 0.0
        %3607 = vmatpush1.msra.mxu0 %v3321
        %3608 = vmatprep.subr.mxu0 0.0
        %3609 = vmatpush1.msra.mxu0 %v3315
        %3610 = vmatprep.subr.mxu0 0.0
        %3611 = vmatpush2.msra.mxu0 0.0
        %3612 = vmatprep.subr.mxu0 0.0
        %3613 = vmatpush2.msra.mxu0 0.0
        %3614 = vmatprep.subr.mxu0 0.0
        %3615 = vmatpush2.msra.mxu0 0.0
        %3616 = vmatprep.subr.mxu0 0.0
        %3617 = vmatpush2.msra.mxu0 0.0
        %3618 = vmatprep.subr.mxu0 0.0
        %3619 = vmatpush2.msra.mxu0 0.0
        %3620 = vmatprep.subr.mxu0 0.0
        %3621 = vmatpush2.msra.mxu0 0.0
        %3622 = vmatprep.subr.mxu0 0.0
        %3623 = vmatpush2.msra.mxu0 0.0
        %3624 = vmatprep.subr.mxu0 0.0
        %3625 = vmatpush2.msra.mxu0 0.0
        %3626 = vmatprep.subr.mxu0 0.0
        %3627 = vmatpush2.msra.mxu0 0.0
        %3628 = vmatprep.subr.mxu0 0.0
        %3629 = vmatpush2.msra.mxu0 0.0
        %3630 = vmatprep.subr.mxu0 0.0
        %3631 = vmatpush2.msra.mxu0 0.0
        %3632 = vmatprep.subr.mxu0 0.0
        %3633 = vmatpush2.msra.mxu0 0.0
        %3634 = vmatprep.subr.mxu0 0.0
        %3635 = vmatpush2.msra.mxu0 0.0
        %3636 = vmatprep.subr.mxu0 0.0
        %3637 = vmatpush2.msra.mxu0 0.0
        %3638 = vmatprep.subr.mxu0 0.0
        %3639 = vmatpush2.msra.mxu0 0.0
        %3640 = vmatprep.subr.mxu0 0.0
        %3641 = vmatpush2.msra.mxu0 0.0
        %3642 = vmatprep.mubr.f32.mxu0 0.0
        %3643 = vmatmul.mubr.f32.gmra.mxu0 %v3555
        %v3644 = vpop.f32.mrf.mxu0
        %v3645 = vadd.f32 0.0, %v3644
        %v3646 = vpop.f32.mrf.mxu0
        %3647 = vmatprep.mubr.f32.mxu0 0.0
        %3648 = vmatmul.mubr.f32.gmra.mxu0 %v3558
        %v3649 = vpop.f32.mrf.mxu0
        %v3650 = vadd.f32 0.0, %v3649
        %v3651 = vpop.f32.mrf.mxu0
        %3652 = vmatprep.mubr.f32.mxu0 0.0
        %3653 = vmatmul.mubr.f32.gmra.mxu0 %v3561
        %v3654 = vpop.f32.mrf.mxu0
        %v3655 = vadd.f32 0.0, %v3654
        %v3656 = vpop.f32.mrf.mxu0
        %3657 = vmatprep.mubr.f32.mxu0 0.0
        %3658 = vmatmul.mubr.f32.gmra.mxu0 %v3564
        %v3659 = vpop.f32.mrf.mxu0
        %v3660 = vadd.f32 0.0, %v3659
        %v3661 = vpop.f32.mrf.mxu0
        %3662 = vmatprep.mubr.f32.mxu0 0.0
        %3663 = vmatmul.mubr.f32.gmra.mxu0 %v3567
        %v3664 = vpop.f32.mrf.mxu0
        %v3665 = vadd.f32 0.0, %v3664
        %v3666 = vpop.f32.mrf.mxu0
        %3667 = vmatprep.mubr.f32.mxu0 0.0
        %3668 = vmatmul.mubr.f32.gmra.mxu0 %v3570
        %v3669 = vpop.f32.mrf.mxu0
        %v3670 = vadd.f32 0.0, %v3669
        %v3671 = vpop.f32.mrf.mxu0
        %3672 = vmatprep.mubr.f32.mxu0 0.0
        %3673 = vmatmul.mubr.f32.gmra.mxu0 %v3573
        %v3674 = vpop.f32.mrf.mxu0
        %v3675 = vadd.f32 0.0, %v3674
        %v3676 = vpop.f32.mrf.mxu0
        %3677 = vmatprep.mubr.f32.mxu0 0.0
        %3678 = vmatmul.mubr.f32.gmra.mxu0 %v3576
        %v3679 = vpop.f32.mrf.mxu0
        %v3680 = vadd.f32 0.0, %v3679
        %v3681 = vpop.f32.mrf.mxu0
        %3682 = vdwg.mxu0
        %v3683 = vld [vmem:[#allocation2] sm:$0xff]
        %v3684 = vld [vmem:[#allocation2 + $0x8] sm:$0xff]
        %v3685 = vld [vmem:[#allocation2 + $0x10] sm:$0xff]
        %v3686 = vld [vmem:[#allocation2 + $0x18] sm:$0xff]
        %v3687 = vld [vmem:[#allocation2 + $0x20] sm:$0xff]
        %v3688 = vld [vmem:[#allocation2 + $0x28] sm:$0xff]
        %v3689 = vld [vmem:[#allocation2 + $0x30] sm:$0xff]
        %v3690 = vld [vmem:[#allocation2 + $0x38] sm:$0xff]
        %v3691 = vadd.f32 %v3683, %v3645
        %v3692 = vadd.f32 %v3684, %v3650
        %v3693 = vadd.f32 %v3685, %v3655
        %v3694 = vadd.f32 %v3686, %v3660
        %v3695 = vadd.f32 %v3687, %v3665
        %v3696 = vadd.f32 %v3688, %v3670
        %v3697 = vadd.f32 %v3689, %v3675
        %v3698 = vadd.f32 %v3690, %v3680
        %3699 = vst.msk [vmem:[#allocation2] sm:$0xff] %vm1142, %v3691
        %3700 = vst.msk [vmem:[#allocation2 + $0x8] sm:$0xff] %vm1142, %v3692
        %3701 = vst.msk [vmem:[#allocation2 + $0x10] sm:$0xff] %vm1142, %v3693
        %3702 = vst.msk [vmem:[#allocation2 + $0x18] sm:$0xff] %vm1142, %v3694
        %3703 = vst.msk [vmem:[#allocation2 + $0x20] sm:$0xff] %vm1142, %v3695
        %3704 = vst.msk [vmem:[#allocation2 + $0x28] sm:$0xff] %vm1142, %v3696
        %3705 = vst.msk [vmem:[#allocation2 + $0x30] sm:$0xff] %vm1142, %v3697
        %3706 = vst.msk [vmem:[#allocation2 + $0x38] sm:$0xff] %vm1142, %v3698
        %3707 = vrot.lane.b32.xlu0 %v3238, 120
        %v3708 = vpop.permute.xlu0 %3707
        %3709 = vrot.lane.b32.xlu0 %v3239, 120
        %v3710 = vpop.permute.xlu0 %3709
        %3711 = vrot.lane.b32.xlu0 %v3240, 120
        %v3712 = vpop.permute.xlu0 %3711
        %3713 = vrot.lane.b32.xlu0 %v3241, 120
        %v3714 = vpop.permute.xlu0 %3713
        %3715 = vrot.lane.b32.xlu0 %v3242, 120
        %v3716 = vpop.permute.xlu0 %3715
        %3717 = vrot.lane.b32.xlu0 %v3243, 120
        %v3718 = vpop.permute.xlu0 %3717
        %3719 = vrot.lane.b32.xlu0 %v3244, 120
        %v3720 = vpop.permute.xlu0 %3719
        %3721 = vrot.lane.b32.xlu0 %v3245, 120
        %v3722 = vpop.permute.xlu0 %3721
        %3723 = vrot.lane.b32.xlu0 %v3313, 120
        %v3724 = vpop.permute.xlu0 %3723
        %3725 = vrot.lane.b32.xlu0 %v3319, 120
        %v3726 = vpop.permute.xlu0 %3725
        %v3727 = vsel %vm1142, %v3708, 0
        %v3729 = vsel %vm1142, %v3710, 0
        %v3731 = vsel %vm1142, %v3712, 0
        %v3733 = vsel %vm1142, %v3714, 0
        %v3735 = vsel %vm1142, %v3716, 0
        %v3737 = vsel %vm1142, %v3718, 0
        %v3739 = vsel %vm1142, %v3720, 0
        %v3741 = vsel %vm1142, %v3722, 0
        %v3743 = vsel %vm1142, %v3724, 0
        %v3745 = vsel %vm1142, %v3726, 0
        %3747 = vmatprep.subr.mxu0 0.0
        %3748 = vmatpush1.xpose.msra.mxu0 0.0
        %3749 = vmatprep.subr.mxu0 0.0
        %3750 = vmatpush1.xpose.msra.mxu0 0.0
        %3751 = vmatprep.subr.mxu0 0.0
        %3752 = vmatpush1.xpose.msra.mxu0 0.0
        %3753 = vmatprep.subr.mxu0 0.0
        %3754 = vmatpush1.xpose.msra.mxu0 0.0
        %3755 = vmatprep.subr.mxu0 0.0
        %3756 = vmatpush1.xpose.msra.mxu0 0.0
        %3757 = vmatprep.subr.mxu0 0.0
        %3758 = vmatpush1.xpose.msra.mxu0 0.0
        %3759 = vmatprep.subr.mxu0 0.0
        %3760 = vmatpush1.xpose.msra.mxu0 0.0
        %3761 = vmatprep.subr.mxu0 0.0
        %3762 = vmatpush1.xpose.msra.mxu0 0.0
        %3763 = vmatprep.subr.mxu0 0.0
        %3764 = vmatpush1.xpose.msra.mxu0 0.0
        %3765 = vmatprep.subr.mxu0 0.0
        %3766 = vmatpush1.xpose.msra.mxu0 0.0
        %3767 = vmatprep.subr.mxu0 0.0
        %3768 = vmatpush1.xpose.msra.mxu0 0.0
        %3769 = vmatprep.subr.mxu0 0.0
        %3770 = vmatpush1.xpose.msra.mxu0 0.0
        %3771 = vmatprep.subr.mxu0 0.0
        %3772 = vmatpush1.xpose.msra.mxu0 0.0
        %3773 = vmatprep.subr.mxu0 0.0
        %3774 = vmatpush1.xpose.msra.mxu0 0.0
        %3775 = vmatprep.subr.mxu0 0.0
        %3776 = vmatpush1.xpose.msra.mxu0 %v3745
        %3777 = vmatprep.subr.mxu0 0.0
        %3778 = vmatpush1.xpose.msra.mxu0 %v3743
        %3779 = vmatprep.subr.mxu0 0.0
        %3780 = vmatpush2.xpose.msra.mxu0 0.0
        %3781 = vmatprep.subr.mxu0 0.0
        %3782 = vmatpush2.xpose.msra.mxu0 0.0
        %3783 = vmatprep.subr.mxu0 0.0
        %3784 = vmatpush2.xpose.msra.mxu0 0.0
        %3785 = vmatprep.subr.mxu0 0.0
        %3786 = vmatpush2.xpose.msra.mxu0 0.0
        %3787 = vmatprep.subr.mxu0 0.0
        %3788 = vmatpush2.xpose.msra.mxu0 0.0
        %3789 = vmatprep.subr.mxu0 0.0
        %3790 = vmatpush2.xpose.msra.mxu0 0.0
        %3791 = vmatprep.subr.mxu0 0.0
        %3792 = vmatpush2.xpose.msra.mxu0 0.0
        %3793 = vmatprep.subr.mxu0 0.0
        %3794 = vmatpush2.xpose.msra.mxu0 0.0
        %3795 = vmatprep.subr.mxu0 0.0
        %3796 = vmatpush2.xpose.msra.mxu0 0.0
        %3797 = vmatprep.subr.mxu0 0.0
        %3798 = vmatpush2.xpose.msra.mxu0 0.0
        %3799 = vmatprep.subr.mxu0 0.0
        %3800 = vmatpush2.xpose.msra.mxu0 0.0
        %3801 = vmatprep.subr.mxu0 0.0
        %3802 = vmatpush2.xpose.msra.mxu0 0.0
        %3803 = vmatprep.subr.mxu0 0.0
        %3804 = vmatpush2.xpose.msra.mxu0 0.0
        %3805 = vmatprep.subr.mxu0 0.0
        %3806 = vmatpush2.xpose.msra.mxu0 0.0
        %3807 = vmatprep.subr.mxu0 0.0
        %3808 = vmatpush2.xpose.msra.mxu0 0.0
        %3809 = vmatprep.subr.mxu0 0.0
        %3810 = vmatpush2.xpose.msra.mxu0 0.0
        %3811 = vmatprep.mubr.f32.mxu0 0.0
        %3812 = vmatmul.mubr.f32.gmra.mxu0 %v3727
        %v3813 = vpop.f32.mrf.mxu0
        %v3814 = vadd.f32 0.0, %v3813
        %v3815 = vpop.f32.mrf.mxu0
        %3816 = vmatprep.mubr.f32.mxu0 0.0
        %3817 = vmatmul.mubr.f32.gmra.mxu0 %v3729
        %v3818 = vpop.f32.mrf.mxu0
        %v3819 = vadd.f32 0.0, %v3818
        %v3820 = vpop.f32.mrf.mxu0
        %3821 = vmatprep.mubr.f32.mxu0 0.0
        %3822 = vmatmul.mubr.f32.gmra.mxu0 %v3731
        %v3823 = vpop.f32.mrf.mxu0
        %v3824 = vadd.f32 0.0, %v3823
        %v3825 = vpop.f32.mrf.mxu0
        %3826 = vmatprep.mubr.f32.mxu0 0.0
        %3827 = vmatmul.mubr.f32.gmra.mxu0 %v3733
        %v3828 = vpop.f32.mrf.mxu0
        %v3829 = vadd.f32 0.0, %v3828
        %v3830 = vpop.f32.mrf.mxu0
        %3831 = vmatprep.mubr.f32.mxu0 0.0
        %3832 = vmatmul.mubr.f32.gmra.mxu0 %v3735
        %v3833 = vpop.f32.mrf.mxu0
        %v3834 = vadd.f32 0.0, %v3833
        %v3835 = vpop.f32.mrf.mxu0
        %3836 = vmatprep.mubr.f32.mxu0 0.0
        %3837 = vmatmul.mubr.f32.gmra.mxu0 %v3737
        %v3838 = vpop.f32.mrf.mxu0
        %v3839 = vadd.f32 0.0, %v3838
        %v3840 = vpop.f32.mrf.mxu0
        %3841 = vmatprep.mubr.f32.mxu0 0.0
        %3842 = vmatmul.mubr.f32.gmra.mxu0 %v3739
        %v3843 = vpop.f32.mrf.mxu0
        %v3844 = vadd.f32 0.0, %v3843
        %v3845 = vpop.f32.mrf.mxu0
        %3846 = vmatprep.mubr.f32.mxu0 0.0
        %3847 = vmatmul.mubr.f32.gmra.mxu0 %v3741
        %v3848 = vpop.f32.mrf.mxu0
        %v3849 = vadd.f32 0.0, %v3848
        %v3850 = vpop.f32.mrf.mxu0
        %3851 = vdwg.mxu0
        %v3852 = vsel %vm1278, %v3814, -inf
        %3853 = vmax.xlane.f32.xlu0 %v3852
        %v3854 = vpop.xlane.xlu0 %3853
        %v3855 = vsel %vm1278, %v3819, -inf
        %3856 = vmax.xlane.f32.xlu0 %v3855
        %v3857 = vpop.xlane.xlu0 %3856
        %v3858 = vsel %vm1278, %v3824, -inf
        %3859 = vmax.xlane.f32.xlu0 %v3858
        %v3860 = vpop.xlane.xlu0 %3859
        %v3861 = vsel %vm1278, %v3829, -inf
        %3862 = vmax.xlane.f32.xlu0 %v3861
        %v3863 = vpop.xlane.xlu0 %3862
        %v3864 = vsel %vm1278, %v3834, -inf
        %3865 = vmax.xlane.f32.xlu0 %v3864
        %v3866 = vpop.xlane.xlu0 %3865
        %v3867 = vsel %vm1278, %v3839, -inf
        %3868 = vmax.xlane.f32.xlu0 %v3867
        %v3869 = vpop.xlane.xlu0 %3868
        %v3870 = vsel %vm1278, %v3844, -inf
        %3871 = vmax.xlane.f32.xlu0 %v3870
        %v3872 = vpop.xlane.xlu0 %3871
        %v3873 = vsel %vm1278, %v3849, -inf
        %3874 = vmax.xlane.f32.xlu0 %v3873
        %v3875 = vpop.xlane.xlu0 %3874
        %v3876 = vsub.f32 %v3814, %v3854
        %v3877 = vsub.f32 %v3819, %v3857
        %v3878 = vsub.f32 %v3824, %v3860
        %v3879 = vsub.f32 %v3829, %v3863
        %v3880 = vsub.f32 %v3834, %v3866
        %v3881 = vsub.f32 %v3839, %v3869
        %v3882 = vsub.f32 %v3844, %v3872
        %v3883 = vsub.f32 %v3849, %v3875
        %v3884 = vmul.f32 %v3876, 1.442695
        %v3885 = vpow.pop %v3884
        %v3886 = vmul.f32 %v3877, 1.442695
        %v3887 = vpow.pop %v3886
        %v3888 = vmul.f32 %v3878, 1.442695
        %v3889 = vpow.pop %v3888
        %v3890 = vmul.f32 %v3879, 1.442695
        %v3891 = vpow.pop %v3890
        %v3892 = vmul.f32 %v3880, 1.442695
        %v3893 = vpow.pop %v3892
        %v3894 = vmul.f32 %v3881, 1.442695
        %v3895 = vpow.pop %v3894
        %v3896 = vmul.f32 %v3882, 1.442695
        %v3897 = vpow.pop %v3896
        %v3898 = vmul.f32 %v3883, 1.442695
        %v3899 = vpow.pop %v3898
        %v3900 = vsel %vm1278, %v3885, 0.0
        %3901 = vadd.xlane.f32.xlu0 %v3900
        %v3902 = vpop.xlane.xlu0 %3901
        %v3903 = vsel %vm1278, %v3887, 0.0
        %3904 = vadd.xlane.f32.xlu0 %v3903
        %v3905 = vpop.xlane.xlu0 %3904
        %v3906 = vsel %vm1278, %v3889, 0.0
        %3907 = vadd.xlane.f32.xlu0 %v3906
        %v3908 = vpop.xlane.xlu0 %3907
        %v3909 = vsel %vm1278, %v3891, 0.0
        %3910 = vadd.xlane.f32.xlu0 %v3909
        %v3911 = vpop.xlane.xlu0 %3910
        %v3912 = vsel %vm1278, %v3893, 0.0
        %3913 = vadd.xlane.f32.xlu0 %v3912
        %v3914 = vpop.xlane.xlu0 %3913
        %v3915 = vsel %vm1278, %v3895, 0.0
        %3916 = vadd.xlane.f32.xlu0 %v3915
        %v3917 = vpop.xlane.xlu0 %3916
        %v3918 = vsel %vm1278, %v3897, 0.0
        %3919 = vadd.xlane.f32.xlu0 %v3918
        %v3920 = vpop.xlane.xlu0 %3919
        %v3921 = vsel %vm1278, %v3899, 0.0
        %3922 = vadd.xlane.f32.xlu0 %v3921
        %v3923 = vpop.xlane.xlu0 %3922
        %v3924 = vrcp.pop %v3902
        %v3925 = vmul.f32 %v3885, %v3924
        %v3926 = vrcp.pop %v3905
        %v3927 = vmul.f32 %v3887, %v3926
        %v3928 = vrcp.pop %v3908
        %v3929 = vmul.f32 %v3889, %v3928
        %v3930 = vrcp.pop %v3911
        %v3931 = vmul.f32 %v3891, %v3930
        %v3932 = vrcp.pop %v3914
        %v3933 = vmul.f32 %v3893, %v3932
        %v3934 = vrcp.pop %v3917
        %v3935 = vmul.f32 %v3895, %v3934
        %v3936 = vrcp.pop %v3920
        %v3937 = vmul.f32 %v3897, %v3936
        %v3938 = vrcp.pop %v3923
        %v3939 = vmul.f32 %v3899, %v3938
        %3942 = vrot.lane.b32.xlu0 %v3315, 120
        %v3943 = vpop.permute.xlu0 %3942
        %3944 = vrot.lane.b32.xlu0 %v3321, 120
        %v3945 = vpop.permute.xlu0 %3944
        %v3949 = vsel %vm1278, %v3925, 0
        %v3952 = vsel %vm1278, %v3927, 0
        %v3955 = vsel %vm1278, %v3929, 0
        %v3958 = vsel %vm1278, %v3931, 0
        %v3961 = vsel %vm1278, %v3933, 0
        %v3964 = vsel %vm1278, %v3935, 0
        %v3967 = vsel %vm1278, %v3937, 0
        %v3970 = vsel %vm1278, %v3939, 0
        %3972 = vmatprep.subr.mxu0 0.0
        %3973 = vmatpush1.msra.mxu0 0.0
        %3974 = vmatprep.subr.mxu0 0.0
        %3975 = vmatpush1.msra.mxu0 0.0
        %3976 = vmatprep.subr.mxu0 0.0
        %3977 = vmatpush1.msra.mxu0 0.0
        %3978 = vmatprep.subr.mxu0 0.0
        %3979 = vmatpush1.msra.mxu0 0.0
        %3980 = vmatprep.subr.mxu0 0.0
        %3981 = vmatpush1.msra.mxu0 0.0
        %3982 = vmatprep.subr.mxu0 0.0
        %3983 = vmatpush1.msra.mxu0 0.0
        %3984 = vmatprep.subr.mxu0 0.0
        %3985 = vmatpush1.msra.mxu0 0.0
        %3986 = vmatprep.subr.mxu0 0.0
        %3987 = vmatpush1.msra.mxu0 0.0
        %3988 = vmatprep.subr.mxu0 0.0
        %3989 = vmatpush1.msra.mxu0 0.0
        %3990 = vmatprep.subr.mxu0 0.0
        %3991 = vmatpush1.msra.mxu0 0.0
        %3992 = vmatprep.subr.mxu0 0.0
        %3993 = vmatpush1.msra.mxu0 0.0
        %3994 = vmatprep.subr.mxu0 0.0
        %3995 = vmatpush1.msra.mxu0 0.0
        %3996 = vmatprep.subr.mxu0 0.0
        %3997 = vmatpush1.msra.mxu0 0.0
        %3998 = vmatprep.subr.mxu0 0.0
        %3999 = vmatpush1.msra.mxu0 0.0
        %4000 = vmatprep.subr.mxu0 0.0
        %4001 = vmatpush1.msra.mxu0 %v3945
        %4002 = vmatprep.subr.mxu0 0.0
        %4003 = vmatpush1.msra.mxu0 %v3943
        %4004 = vmatprep.subr.mxu0 0.0
        %4005 = vmatpush2.msra.mxu0 0.0
        %4006 = vmatprep.subr.mxu0 0.0
        %4007 = vmatpush2.msra.mxu0 0.0
        %4008 = vmatprep.subr.mxu0 0.0
        %4009 = vmatpush2.msra.mxu0 0.0
        %4010 = vmatprep.subr.mxu0 0.0
        %4011 = vmatpush2.msra.mxu0 0.0
        %4012 = vmatprep.subr.mxu0 0.0
        %4013 = vmatpush2.msra.mxu0 0.0
        %4014 = vmatprep.subr.mxu0 0.0
        %4015 = vmatpush2.msra.mxu0 0.0
        %4016 = vmatprep.subr.mxu0 0.0
        %4017 = vmatpush2.msra.mxu0 0.0
        %4018 = vmatprep.subr.mxu0 0.0
        %4019 = vmatpush2.msra.mxu0 0.0
        %4020 = vmatprep.subr.mxu0 0.0
        %4021 = vmatpush2.msra.mxu0 0.0
        %4022 = vmatprep.subr.mxu0 0.0
        %4023 = vmatpush2.msra.mxu0 0.0
        %4024 = vmatprep.subr.mxu0 0.0
        %4025 = vmatpush2.msra.mxu0 0.0
        %4026 = vmatprep.subr.mxu0 0.0
        %4027 = vmatpush2.msra.mxu0 0.0
        %4028 = vmatprep.subr.mxu0 0.0
        %4029 = vmatpush2.msra.mxu0 0.0
        %4030 = vmatprep.subr.mxu0 0.0
        %4031 = vmatpush2.msra.mxu0 0.0
        %4032 = vmatprep.subr.mxu0 0.0
        %4033 = vmatpush2.msra.mxu0 0.0
        %4034 = vmatprep.subr.mxu0 0.0
        %4035 = vmatpush2.msra.mxu0 0.0
        %4036 = vmatprep.mubr.f32.mxu0 0.0
        %4037 = vmatmul.mubr.f32.gmra.mxu0 %v3949
        %v4038 = vpop.f32.mrf.mxu0
        %v4039 = vadd.f32 0.0, %v4038
        %v4040 = vpop.f32.mrf.mxu0
        %4041 = vmatprep.mubr.f32.mxu0 0.0
        %4042 = vmatmul.mubr.f32.gmra.mxu0 %v3952
        %v4043 = vpop.f32.mrf.mxu0
        %v4044 = vadd.f32 0.0, %v4043
        %v4045 = vpop.f32.mrf.mxu0
        %4046 = vmatprep.mubr.f32.mxu0 0.0
        %4047 = vmatmul.mubr.f32.gmra.mxu0 %v3955
        %v4048 = vpop.f32.mrf.mxu0
        %v4049 = vadd.f32 0.0, %v4048
        %v4050 = vpop.f32.mrf.mxu0
        %4051 = vmatprep.mubr.f32.mxu0 0.0
        %4052 = vmatmul.mubr.f32.gmra.mxu0 %v3958
        %v4053 = vpop.f32.mrf.mxu0
        %v4054 = vadd.f32 0.0, %v4053
        %v4055 = vpop.f32.mrf.mxu0
        %4056 = vmatprep.mubr.f32.mxu0 0.0
        %4057 = vmatmul.mubr.f32.gmra.mxu0 %v3961
        %v4058 = vpop.f32.mrf.mxu0
        %v4059 = vadd.f32 0.0, %v4058
        %v4060 = vpop.f32.mrf.mxu0
        %4061 = vmatprep.mubr.f32.mxu0 0.0
        %4062 = vmatmul.mubr.f32.gmra.mxu0 %v3964
        %v4063 = vpop.f32.mrf.mxu0
        %v4064 = vadd.f32 0.0, %v4063
        %v4065 = vpop.f32.mrf.mxu0
        %4066 = vmatprep.mubr.f32.mxu0 0.0
        %4067 = vmatmul.mubr.f32.gmra.mxu0 %v3967
        %v4068 = vpop.f32.mrf.mxu0
        %v4069 = vadd.f32 0.0, %v4068
        %v4070 = vpop.f32.mrf.mxu0
        %4071 = vmatprep.mubr.f32.mxu0 0.0
        %4072 = vmatmul.mubr.f32.gmra.mxu0 %v3970
        %v4073 = vpop.f32.mrf.mxu0
        %v4074 = vadd.f32 0.0, %v4073
        %v4075 = vpop.f32.mrf.mxu0
        %4076 = vdwg.mxu0
        %v4077 = vld [vmem:[#allocation2] sm:$0xff]
        %v4078 = vld [vmem:[#allocation2 + $0x8] sm:$0xff]
        %v4079 = vld [vmem:[#allocation2 + $0x10] sm:$0xff]
        %v4080 = vld [vmem:[#allocation2 + $0x18] sm:$0xff]
        %v4081 = vld [vmem:[#allocation2 + $0x20] sm:$0xff]
        %v4082 = vld [vmem:[#allocation2 + $0x28] sm:$0xff]
        %v4083 = vld [vmem:[#allocation2 + $0x30] sm:$0xff]
        %v4084 = vld [vmem:[#allocation2 + $0x38] sm:$0xff]
        %4093 = vrot.lane.b32.xlu0 %v4039, 8
        %v4094 = vpop.permute.xlu0 %4093
        %4095 = vrot.lane.b32.xlu0 %v4044, 8
        %v4096 = vpop.permute.xlu0 %4095
        %4097 = vrot.lane.b32.xlu0 %v4049, 8
        %v4098 = vpop.permute.xlu0 %4097
        %4099 = vrot.lane.b32.xlu0 %v4054, 8
        %v4100 = vpop.permute.xlu0 %4099
        %4101 = vrot.lane.b32.xlu0 %v4059, 8
        %v4102 = vpop.permute.xlu0 %4101
        %4103 = vrot.lane.b32.xlu0 %v4064, 8
        %v4104 = vpop.permute.xlu0 %4103
        %4105 = vrot.lane.b32.xlu0 %v4069, 8
        %v4106 = vpop.permute.xlu0 %4105
        %4107 = vrot.lane.b32.xlu0 %v4074, 8
        %v4108 = vpop.permute.xlu0 %4107
        %v4117 = vadd.f32 %v4077, %v4094
        %v4118 = vadd.f32 %v4078, %v4096
        %v4119 = vadd.f32 %v4079, %v4098
        %v4120 = vadd.f32 %v4080, %v4100
        %v4121 = vadd.f32 %v4081, %v4102
        %v4122 = vadd.f32 %v4082, %v4104
        %v4123 = vadd.f32 %v4083, %v4106
        %v4124 = vadd.f32 %v4084, %v4108
        %4125 = vst.msk [vmem:[#allocation2] sm:$0xff] %vm1938, %v4117
        %4126 = vst.msk [vmem:[#allocation2 + $0x8] sm:$0xff] %vm1938, %v4118
        %4127 = vst.msk [vmem:[#allocation2 + $0x10] sm:$0xff] %vm1938, %v4119
        %4128 = vst.msk [vmem:[#allocation2 + $0x18] sm:$0xff] %vm1938, %v4120
        %4129 = vst.msk [vmem:[#allocation2 + $0x20] sm:$0xff] %vm1938, %v4121
        %4130 = vst.msk [vmem:[#allocation2 + $0x28] sm:$0xff] %vm1938, %v4122
        %4131 = vst.msk [vmem:[#allocation2 + $0x30] sm:$0xff] %vm1938, %v4123
        %4132 = vst.msk [vmem:[#allocation2 + $0x38] sm:$0xff] %vm1938, %v4124
        %4133 = vrot.lane.b32.xlu0 %v3238, 112
        %v4134 = vpop.permute.xlu0 %4133
        %4135 = vrot.lane.b32.xlu0 %v3239, 112
        %v4136 = vpop.permute.xlu0 %4135
        %4137 = vrot.lane.b32.xlu0 %v3240, 112
        %v4138 = vpop.permute.xlu0 %4137
        %4139 = vrot.lane.b32.xlu0 %v3241, 112
        %v4140 = vpop.permute.xlu0 %4139
        %4141 = vrot.lane.b32.xlu0 %v3242, 112
        %v4142 = vpop.permute.xlu0 %4141
        %4143 = vrot.lane.b32.xlu0 %v3243, 112
        %v4144 = vpop.permute.xlu0 %4143
        %4145 = vrot.lane.b32.xlu0 %v3244, 112
        %v4146 = vpop.permute.xlu0 %4145
        %4147 = vrot.lane.b32.xlu0 %v3245, 112
        %v4148 = vpop.permute.xlu0 %4147
        %4149 = vrot.lane.b32.xlu0 %v3313, 112
        %v4150 = vpop.permute.xlu0 %4149
        %4151 = vrot.lane.b32.xlu0 %v3319, 112
        %v4152 = vpop.permute.xlu0 %4151
        %v4153 = vsel %vm1142, %v4134, 0
        %v4155 = vsel %vm1142, %v4136, 0
        %v4157 = vsel %vm1142, %v4138, 0
        %v4159 = vsel %vm1142, %v4140, 0
        %v4161 = vsel %vm1142, %v4142, 0
        %v4163 = vsel %vm1142, %v4144, 0
        %v4165 = vsel %vm1142, %v4146, 0
        %v4167 = vsel %vm1142, %v4148, 0
        %v4169 = vsel %vm1142, %v4150, 0
        %v4171 = vsel %vm1142, %v4152, 0
        %4173 = vmatprep.subr.mxu0 0.0
        %4174 = vmatpush1.xpose.msra.mxu0 0.0
        %4175 = vmatprep.subr.mxu0 0.0
        %4176 = vmatpush1.xpose.msra.mxu0 0.0
        %4177 = vmatprep.subr.mxu0 0.0
        %4178 = vmatpush1.xpose.msra.mxu0 0.0
        %4179 = vmatprep.subr.mxu0 0.0
        %4180 = vmatpush1.xpose.msra.mxu0 0.0
        %4181 = vmatprep.subr.mxu0 0.0
        %4182 = vmatpush1.xpose.msra.mxu0 0.0
        %4183 = vmatprep.subr.mxu0 0.0
        %4184 = vmatpush1.xpose.msra.mxu0 0.0
        %4185 = vmatprep.subr.mxu0 0.0
        %4186 = vmatpush1.xpose.msra.mxu0 0.0
        %4187 = vmatprep.subr.mxu0 0.0
        %4188 = vmatpush1.xpose.msra.mxu0 0.0
        %4189 = vmatprep.subr.mxu0 0.0
        %4190 = vmatpush1.xpose.msra.mxu0 0.0
        %4191 = vmatprep.subr.mxu0 0.0
        %4192 = vmatpush1.xpose.msra.mxu0 0.0
        %4193 = vmatprep.subr.mxu0 0.0
        %4194 = vmatpush1.xpose.msra.mxu0 0.0
        %4195 = vmatprep.subr.mxu0 0.0
        %4196 = vmatpush1.xpose.msra.mxu0 0.0
        %4197 = vmatprep.subr.mxu0 0.0
        %4198 = vmatpush1.xpose.msra.mxu0 0.0
        %4199 = vmatprep.subr.mxu0 0.0
        %4200 = vmatpush1.xpose.msra.mxu0 0.0
        %4201 = vmatprep.subr.mxu0 0.0
        %4202 = vmatpush1.xpose.msra.mxu0 %v4171
        %4203 = vmatprep.subr.mxu0 0.0
        %4204 = vmatpush1.xpose.msra.mxu0 %v4169
        %4205 = vmatprep.subr.mxu0 0.0
        %4206 = vmatpush2.xpose.msra.mxu0 0.0
        %4207 = vmatprep.subr.mxu0 0.0
        %4208 = vmatpush2.xpose.msra.mxu0 0.0
        %4209 = vmatprep.subr.mxu0 0.0
        %4210 = vmatpush2.xpose.msra.mxu0 0.0
        %4211 = vmatprep.subr.mxu0 0.0
        %4212 = vmatpush2.xpose.msra.mxu0 0.0
        %4213 = vmatprep.subr.mxu0 0.0
        %4214 = vmatpush2.xpose.msra.mxu0 0.0
        %4215 = vmatprep.subr.mxu0 0.0
        %4216 = vmatpush2.xpose.msra.mxu0 0.0
        %4217 = vmatprep.subr.mxu0 0.0
        %4218 = vmatpush2.xpose.msra.mxu0 0.0
        %4219 = vmatprep.subr.mxu0 0.0
        %4220 = vmatpush2.xpose.msra.mxu0 0.0
        %4221 = vmatprep.subr.mxu0 0.0
        %4222 = vmatpush2.xpose.msra.mxu0 0.0
        %4223 = vmatprep.subr.mxu0 0.0
        %4224 = vmatpush2.xpose.msra.mxu0 0.0
        %4225 = vmatprep.subr.mxu0 0.0
        %4226 = vmatpush2.xpose.msra.mxu0 0.0
        %4227 = vmatprep.subr.mxu0 0.0
        %4228 = vmatpush2.xpose.msra.mxu0 0.0
        %4229 = vmatprep.subr.mxu0 0.0
        %4230 = vmatpush2.xpose.msra.mxu0 0.0
        %4231 = vmatprep.subr.mxu0 0.0
        %4232 = vmatpush2.xpose.msra.mxu0 0.0
        %4233 = vmatprep.subr.mxu0 0.0
        %4234 = vmatpush2.xpose.msra.mxu0 0.0
        %4235 = vmatprep.subr.mxu0 0.0
        %4236 = vmatpush2.xpose.msra.mxu0 0.0
        %4237 = vmatprep.mubr.f32.mxu0 0.0
        %4238 = vmatmul.mubr.f32.gmra.mxu0 %v4153
        %v4239 = vpop.f32.mrf.mxu0
        %v4240 = vadd.f32 0.0, %v4239
        %v4241 = vpop.f32.mrf.mxu0
        %4242 = vmatprep.mubr.f32.mxu0 0.0
        %4243 = vmatmul.mubr.f32.gmra.mxu0 %v4155
        %v4244 = vpop.f32.mrf.mxu0
        %v4245 = vadd.f32 0.0, %v4244
        %v4246 = vpop.f32.mrf.mxu0
        %4247 = vmatprep.mubr.f32.mxu0 0.0
        %4248 = vmatmul.mubr.f32.gmra.mxu0 %v4157
        %v4249 = vpop.f32.mrf.mxu0
        %v4250 = vadd.f32 0.0, %v4249
        %v4251 = vpop.f32.mrf.mxu0
        %4252 = vmatprep.mubr.f32.mxu0 0.0
        %4253 = vmatmul.mubr.f32.gmra.mxu0 %v4159
        %v4254 = vpop.f32.mrf.mxu0
        %v4255 = vadd.f32 0.0, %v4254
        %v4256 = vpop.f32.mrf.mxu0
        %4257 = vmatprep.mubr.f32.mxu0 0.0
        %4258 = vmatmul.mubr.f32.gmra.mxu0 %v4161
        %v4259 = vpop.f32.mrf.mxu0
        %v4260 = vadd.f32 0.0, %v4259
        %v4261 = vpop.f32.mrf.mxu0
        %4262 = vmatprep.mubr.f32.mxu0 0.0
        %4263 = vmatmul.mubr.f32.gmra.mxu0 %v4163
        %v4264 = vpop.f32.mrf.mxu0
        %v4265 = vadd.f32 0.0, %v4264
        %v4266 = vpop.f32.mrf.mxu0
        %4267 = vmatprep.mubr.f32.mxu0 0.0
        %4268 = vmatmul.mubr.f32.gmra.mxu0 %v4165
        %v4269 = vpop.f32.mrf.mxu0
        %v4270 = vadd.f32 0.0, %v4269
        %v4271 = vpop.f32.mrf.mxu0
        %4272 = vmatprep.mubr.f32.mxu0 0.0
        %4273 = vmatmul.mubr.f32.gmra.mxu0 %v4167
        %v4274 = vpop.f32.mrf.mxu0
        %v4275 = vadd.f32 0.0, %v4274
        %v4276 = vpop.f32.mrf.mxu0
        %4277 = vdwg.mxu0
        %v4278 = vsel %vm1278, %v4240, -inf
        %4279 = vmax.xlane.f32.xlu0 %v4278
        %v4280 = vpop.xlane.xlu0 %4279
        %v4281 = vsel %vm1278, %v4245, -inf
        %4282 = vmax.xlane.f32.xlu0 %v4281
        %v4283 = vpop.xlane.xlu0 %4282
        %v4284 = vsel %vm1278, %v4250, -inf
        %4285 = vmax.xlane.f32.xlu0 %v4284
        %v4286 = vpop.xlane.xlu0 %4285
        %v4287 = vsel %vm1278, %v4255, -inf
        %4288 = vmax.xlane.f32.xlu0 %v4287
        %v4289 = vpop.xlane.xlu0 %4288
        %v4290 = vsel %vm1278, %v4260, -inf
        %4291 = vmax.xlane.f32.xlu0 %v4290
        %v4292 = vpop.xlane.xlu0 %4291
        %v4293 = vsel %vm1278, %v4265, -inf
        %4294 = vmax.xlane.f32.xlu0 %v4293
        %v4295 = vpop.xlane.xlu0 %4294
        %v4296 = vsel %vm1278, %v4270, -inf
        %4297 = vmax.xlane.f32.xlu0 %v4296
        %v4298 = vpop.xlane.xlu0 %4297
        %v4299 = vsel %vm1278, %v4275, -inf
        %4300 = vmax.xlane.f32.xlu0 %v4299
        %v4301 = vpop.xlane.xlu0 %4300
        %v4302 = vsub.f32 %v4240, %v4280
        %v4303 = vsub.f32 %v4245, %v4283
        %v4304 = vsub.f32 %v4250, %v4286
        %v4305 = vsub.f32 %v4255, %v4289
        %v4306 = vsub.f32 %v4260, %v4292
        %v4307 = vsub.f32 %v4265, %v4295
        %v4308 = vsub.f32 %v4270, %v4298
        %v4309 = vsub.f32 %v4275, %v4301
        %v4310 = vmul.f32 %v4302, 1.442695
        %v4311 = vpow.pop %v4310
        %v4312 = vmul.f32 %v4303, 1.442695
        %v4313 = vpow.pop %v4312
        %v4314 = vmul.f32 %v4304, 1.442695
        %v4315 = vpow.pop %v4314
        %v4316 = vmul.f32 %v4305, 1.442695
        %v4317 = vpow.pop %v4316
        %v4318 = vmul.f32 %v4306, 1.442695
        %v4319 = vpow.pop %v4318
        %v4320 = vmul.f32 %v4307, 1.442695
        %v4321 = vpow.pop %v4320
        %v4322 = vmul.f32 %v4308, 1.442695
        %v4323 = vpow.pop %v4322
        %v4324 = vmul.f32 %v4309, 1.442695
        %v4325 = vpow.pop %v4324
        %v4326 = vsel %vm1278, %v4311, 0.0
        %4327 = vadd.xlane.f32.xlu0 %v4326
        %v4328 = vpop.xlane.xlu0 %4327
        %v4329 = vsel %vm1278, %v4313, 0.0
        %4330 = vadd.xlane.f32.xlu0 %v4329
        %v4331 = vpop.xlane.xlu0 %4330
        %v4332 = vsel %vm1278, %v4315, 0.0
        %4333 = vadd.xlane.f32.xlu0 %v4332
        %v4334 = vpop.xlane.xlu0 %4333
        %v4335 = vsel %vm1278, %v4317, 0.0
        %4336 = vadd.xlane.f32.xlu0 %v4335
        %v4337 = vpop.xlane.xlu0 %4336
        %v4338 = vsel %vm1278, %v4319, 0.0
        %4339 = vadd.xlane.f32.xlu0 %v4338
        %v4340 = vpop.xlane.xlu0 %4339
        %v4341 = vsel %vm1278, %v4321, 0.0
        %4342 = vadd.xlane.f32.xlu0 %v4341
        %v4343 = vpop.xlane.xlu0 %4342
        %v4344 = vsel %vm1278, %v4323, 0.0
        %4345 = vadd.xlane.f32.xlu0 %v4344
        %v4346 = vpop.xlane.xlu0 %4345
        %v4347 = vsel %vm1278, %v4325, 0.0
        %4348 = vadd.xlane.f32.xlu0 %v4347
        %v4349 = vpop.xlane.xlu0 %4348
        %v4350 = vrcp.pop %v4328
        %v4351 = vmul.f32 %v4311, %v4350
        %v4352 = vrcp.pop %v4331
        %v4353 = vmul.f32 %v4313, %v4352
        %v4354 = vrcp.pop %v4334
        %v4355 = vmul.f32 %v4315, %v4354
        %v4356 = vrcp.pop %v4337
        %v4357 = vmul.f32 %v4317, %v4356
        %v4358 = vrcp.pop %v4340
        %v4359 = vmul.f32 %v4319, %v4358
        %v4360 = vrcp.pop %v4343
        %v4361 = vmul.f32 %v4321, %v4360
        %v4362 = vrcp.pop %v4346
        %v4363 = vmul.f32 %v4323, %v4362
        %v4364 = vrcp.pop %v4349
        %v4365 = vmul.f32 %v4325, %v4364
        %4366 = vrot.lane.b32.xlu0 %v3315, 112
        %v4367 = vpop.permute.xlu0 %4366
        %4368 = vrot.lane.b32.xlu0 %v3321, 112
        %v4369 = vpop.permute.xlu0 %4368
        %v4373 = vsel %vm1278, %v4351, 0
        %v4376 = vsel %vm1278, %v4353, 0
        %v4379 = vsel %vm1278, %v4355, 0
        %v4382 = vsel %vm1278, %v4357, 0
        %v4385 = vsel %vm1278, %v4359, 0
        %v4388 = vsel %vm1278, %v4361, 0
        %v4391 = vsel %vm1278, %v4363, 0
        %v4394 = vsel %vm1278, %v4365, 0
        %4396 = vmatprep.subr.mxu0 0.0
        %4397 = vmatpush1.msra.mxu0 0.0
        %4398 = vmatprep.subr.mxu0 0.0
        %4399 = vmatpush1.msra.mxu0 0.0
        %4400 = vmatprep.subr.mxu0 0.0
        %4401 = vmatpush1.msra.mxu0 0.0
        %4402 = vmatprep.subr.mxu0 0.0
        %4403 = vmatpush1.msra.mxu0 0.0
        %4404 = vmatprep.subr.mxu0 0.0
        %4405 = vmatpush1.msra.mxu0 0.0
        %4406 = vmatprep.subr.mxu0 0.0
        %4407 = vmatpush1.msra.mxu0 0.0
        %4408 = vmatprep.subr.mxu0 0.0
        %4409 = vmatpush1.msra.mxu0 0.0
        %4410 = vmatprep.subr.mxu0 0.0
        %4411 = vmatpush1.msra.mxu0 0.0
        %4412 = vmatprep.subr.mxu0 0.0
        %4413 = vmatpush1.msra.mxu0 0.0
        %4414 = vmatprep.subr.mxu0 0.0
        %4415 = vmatpush1.msra.mxu0 0.0
        %4416 = vmatprep.subr.mxu0 0.0
        %4417 = vmatpush1.msra.mxu0 0.0
        %4418 = vmatprep.subr.mxu0 0.0
        %4419 = vmatpush1.msra.mxu0 0.0
        %4420 = vmatprep.subr.mxu0 0.0
        %4421 = vmatpush1.msra.mxu0 0.0
        %4422 = vmatprep.subr.mxu0 0.0
        %4423 = vmatpush1.msra.mxu0 0.0
        %4424 = vmatprep.subr.mxu0 0.0
        %4425 = vmatpush1.msra.mxu0 %v4369
        %4426 = vmatprep.subr.mxu0 0.0
        %4427 = vmatpush1.msra.mxu0 %v4367
        %4428 = vmatprep.subr.mxu0 0.0
        %4429 = vmatpush2.msra.mxu0 0.0
        %4430 = vmatprep.subr.mxu0 0.0
        %4431 = vmatpush2.msra.mxu0 0.0
        %4432 = vmatprep.subr.mxu0 0.0
        %4433 = vmatpush2.msra.mxu0 0.0
        %4434 = vmatprep.subr.mxu0 0.0
        %4435 = vmatpush2.msra.mxu0 0.0
        %4436 = vmatprep.subr.mxu0 0.0
        %4437 = vmatpush2.msra.mxu0 0.0
        %4438 = vmatprep.subr.mxu0 0.0
        %4439 = vmatpush2.msra.mxu0 0.0
        %4440 = vmatprep.subr.mxu0 0.0
        %4441 = vmatpush2.msra.mxu0 0.0
        %4442 = vmatprep.subr.mxu0 0.0
        %4443 = vmatpush2.msra.mxu0 0.0
        %4444 = vmatprep.subr.mxu0 0.0
        %4445 = vmatpush2.msra.mxu0 0.0
        %4446 = vmatprep.subr.mxu0 0.0
        %4447 = vmatpush2.msra.mxu0 0.0
        %4448 = vmatprep.subr.mxu0 0.0
        %4449 = vmatpush2.msra.mxu0 0.0
        %4450 = vmatprep.subr.mxu0 0.0
        %4451 = vmatpush2.msra.mxu0 0.0
        %4452 = vmatprep.subr.mxu0 0.0
        %4453 = vmatpush2.msra.mxu0 0.0
        %4454 = vmatprep.subr.mxu0 0.0
        %4455 = vmatpush2.msra.mxu0 0.0
        %4456 = vmatprep.subr.mxu0 0.0
        %4457 = vmatpush2.msra.mxu0 0.0
        %4458 = vmatprep.subr.mxu0 0.0
        %4459 = vmatpush2.msra.mxu0 0.0
        %4460 = vmatprep.mubr.f32.mxu0 0.0
        %4461 = vmatmul.mubr.f32.gmra.mxu0 %v4373
        %v4462 = vpop.f32.mrf.mxu0
        %v4463 = vadd.f32 0.0, %v4462
        %v4464 = vpop.f32.mrf.mxu0
        %4465 = vmatprep.mubr.f32.mxu0 0.0
        %4466 = vmatmul.mubr.f32.gmra.mxu0 %v4376
        %v4467 = vpop.f32.mrf.mxu0
        %v4468 = vadd.f32 0.0, %v4467
        %v4469 = vpop.f32.mrf.mxu0
        %4470 = vmatprep.mubr.f32.mxu0 0.0
        %4471 = vmatmul.mubr.f32.gmra.mxu0 %v4379
        %v4472 = vpop.f32.mrf.mxu0
        %v4473 = vadd.f32 0.0, %v4472
        %v4474 = vpop.f32.mrf.mxu0
        %4475 = vmatprep.mubr.f32.mxu0 0.0
        %4476 = vmatmul.mubr.f32.gmra.mxu0 %v4382
        %v4477 = vpop.f32.mrf.mxu0
        %v4478 = vadd.f32 0.0, %v4477
        %v4479 = vpop.f32.mrf.mxu0
        %4480 = vmatprep.mubr.f32.mxu0 0.0
        %4481 = vmatmul.mubr.f32.gmra.mxu0 %v4385
        %v4482 = vpop.f32.mrf.mxu0
        %v4483 = vadd.f32 0.0, %v4482
        %v4484 = vpop.f32.mrf.mxu0
        %4485 = vmatprep.mubr.f32.mxu0 0.0
        %4486 = vmatmul.mubr.f32.gmra.mxu0 %v4388
        %v4487 = vpop.f32.mrf.mxu0
        %v4488 = vadd.f32 0.0, %v4487
        %v4489 = vpop.f32.mrf.mxu0
        %4490 = vmatprep.mubr.f32.mxu0 0.0
        %4491 = vmatmul.mubr.f32.gmra.mxu0 %v4391
        %v4492 = vpop.f32.mrf.mxu0
        %v4493 = vadd.f32 0.0, %v4492
        %v4494 = vpop.f32.mrf.mxu0
        %4495 = vmatprep.mubr.f32.mxu0 0.0
        %4496 = vmatmul.mubr.f32.gmra.mxu0 %v4394
        %v4497 = vpop.f32.mrf.mxu0
        %v4498 = vadd.f32 0.0, %v4497
        %v4499 = vpop.f32.mrf.mxu0
        %4500 = vdwg.mxu0
        %v4501 = vld [vmem:[#allocation2] sm:$0xff]
        %v4502 = vld [vmem:[#allocation2 + $0x8] sm:$0xff]
        %v4503 = vld [vmem:[#allocation2 + $0x10] sm:$0xff]
        %v4504 = vld [vmem:[#allocation2 + $0x18] sm:$0xff]
        %v4505 = vld [vmem:[#allocation2 + $0x20] sm:$0xff]
        %v4506 = vld [vmem:[#allocation2 + $0x28] sm:$0xff]
        %v4507 = vld [vmem:[#allocation2 + $0x30] sm:$0xff]
        %v4508 = vld [vmem:[#allocation2 + $0x38] sm:$0xff]
        %4517 = vrot.lane.b32.xlu0 %v4463, 16
        %v4518 = vpop.permute.xlu0 %4517
        %4519 = vrot.lane.b32.xlu0 %v4468, 16
        %v4520 = vpop.permute.xlu0 %4519
        %4521 = vrot.lane.b32.xlu0 %v4473, 16
        %v4522 = vpop.permute.xlu0 %4521
        %4523 = vrot.lane.b32.xlu0 %v4478, 16
        %v4524 = vpop.permute.xlu0 %4523
        %4525 = vrot.lane.b32.xlu0 %v4483, 16
        %v4526 = vpop.permute.xlu0 %4525
        %4527 = vrot.lane.b32.xlu0 %v4488, 16
        %v4528 = vpop.permute.xlu0 %4527
        %4529 = vrot.lane.b32.xlu0 %v4493, 16
        %v4530 = vpop.permute.xlu0 %4529
        %4531 = vrot.lane.b32.xlu0 %v4498, 16
        %v4532 = vpop.permute.xlu0 %4531
        %v4541 = vadd.f32 %v4501, %v4518
        %v4542 = vadd.f32 %v4502, %v4520
        %v4543 = vadd.f32 %v4503, %v4522
        %v4544 = vadd.f32 %v4504, %v4524
        %v4545 = vadd.f32 %v4505, %v4526
        %v4546 = vadd.f32 %v4506, %v4528
        %v4547 = vadd.f32 %v4507, %v4530
        %v4548 = vadd.f32 %v4508, %v4532
        %4549 = vst.msk [vmem:[#allocation2] sm:$0xff] %vm2363, %v4541
        %4550 = vst.msk [vmem:[#allocation2 + $0x8] sm:$0xff] %vm2363, %v4542
        %4551 = vst.msk [vmem:[#allocation2 + $0x10] sm:$0xff] %vm2363, %v4543
        %4552 = vst.msk [vmem:[#allocation2 + $0x18] sm:$0xff] %vm2363, %v4544
        %4553 = vst.msk [vmem:[#allocation2 + $0x20] sm:$0xff] %vm2363, %v4545
        %4554 = vst.msk [vmem:[#allocation2 + $0x28] sm:$0xff] %vm2363, %v4546
        %4555 = vst.msk [vmem:[#allocation2 + $0x30] sm:$0xff] %vm2363, %v4547
        %4556 = vst.msk [vmem:[#allocation2 + $0x38] sm:$0xff] %vm2363, %v4548
        %4557 = vrot.lane.b32.xlu0 %v3238, 104
        %v4558 = vpop.permute.xlu0 %4557
        %4559 = vrot.lane.b32.xlu0 %v3239, 104
        %v4560 = vpop.permute.xlu0 %4559
        %4561 = vrot.lane.b32.xlu0 %v3240, 104
        %v4562 = vpop.permute.xlu0 %4561
        %4563 = vrot.lane.b32.xlu0 %v3241, 104
        %v4564 = vpop.permute.xlu0 %4563
        %4565 = vrot.lane.b32.xlu0 %v3242, 104
        %v4566 = vpop.permute.xlu0 %4565
        %4567 = vrot.lane.b32.xlu0 %v3243, 104
        %v4568 = vpop.permute.xlu0 %4567
        %4569 = vrot.lane.b32.xlu0 %v3244, 104
        %v4570 = vpop.permute.xlu0 %4569
        %4571 = vrot.lane.b32.xlu0 %v3245, 104
        %v4572 = vpop.permute.xlu0 %4571
        %4573 = vrot.lane.b32.xlu0 %v3313, 104
        %v4574 = vpop.permute.xlu0 %4573
        %4575 = vrot.lane.b32.xlu0 %v3319, 104
        %v4576 = vpop.permute.xlu0 %4575
        %v4577 = vsel %vm1142, %v4558, 0
        %v4579 = vsel %vm1142, %v4560, 0
        %v4581 = vsel %vm1142, %v4562, 0
        %v4583 = vsel %vm1142, %v4564, 0
        %v4585 = vsel %vm1142, %v4566, 0
        %v4587 = vsel %vm1142, %v4568, 0
        %v4589 = vsel %vm1142, %v4570, 0
        %v4591 = vsel %vm1142, %v4572, 0
        %v4593 = vsel %vm1142, %v4574, 0
        %v4595 = vsel %vm1142, %v4576, 0
        %4597 = vmatprep.subr.mxu0 0.0
        %4598 = vmatpush1.xpose.msra.mxu0 0.0
        %4599 = vmatprep.subr.mxu0 0.0
        %4600 = vmatpush1.xpose.msra.mxu0 0.0
        %4601 = vmatprep.subr.mxu0 0.0
        %4602 = vmatpush1.xpose.msra.mxu0 0.0
        %4603 = vmatprep.subr.mxu0 0.0
        %4604 = vmatpush1.xpose.msra.mxu0 0.0
        %4605 = vmatprep.subr.mxu0 0.0
        %4606 = vmatpush1.xpose.msra.mxu0 0.0
        %4607 = vmatprep.subr.mxu0 0.0
        %4608 = vmatpush1.xpose.msra.mxu0 0.0
        %4609 = vmatprep.subr.mxu0 0.0
        %4610 = vmatpush1.xpose.msra.mxu0 0.0
        %4611 = vmatprep.subr.mxu0 0.0
        %4612 = vmatpush1.xpose.msra.mxu0 0.0
        %4613 = vmatprep.subr.mxu0 0.0
        %4614 = vmatpush1.xpose.msra.mxu0 0.0
        %4615 = vmatprep.subr.mxu0 0.0
        %4616 = vmatpush1.xpose.msra.mxu0 0.0
        %4617 = vmatprep.subr.mxu0 0.0
        %4618 = vmatpush1.xpose.msra.mxu0 0.0
        %4619 = vmatprep.subr.mxu0 0.0
        %4620 = vmatpush1.xpose.msra.mxu0 0.0
        %4621 = vmatprep.subr.mxu0 0.0
        %4622 = vmatpush1.xpose.msra.mxu0 0.0
        %4623 = vmatprep.subr.mxu0 0.0
        %4624 = vmatpush1.xpose.msra.mxu0 0.0
        %4625 = vmatprep.subr.mxu0 0.0
        %4626 = vmatpush1.xpose.msra.mxu0 %v4595
        %4627 = vmatprep.subr.mxu0 0.0
        %4628 = vmatpush1.xpose.msra.mxu0 %v4593
        %4629 = vmatprep.subr.mxu0 0.0
        %4630 = vmatpush2.xpose.msra.mxu0 0.0
        %4631 = vmatprep.subr.mxu0 0.0
        %4632 = vmatpush2.xpose.msra.mxu0 0.0
        %4633 = vmatprep.subr.mxu0 0.0
        %4634 = vmatpush2.xpose.msra.mxu0 0.0
        %4635 = vmatprep.subr.mxu0 0.0
        %4636 = vmatpush2.xpose.msra.mxu0 0.0
        %4637 = vmatprep.subr.mxu0 0.0
        %4638 = vmatpush2.xpose.msra.mxu0 0.0
        %4639 = vmatprep.subr.mxu0 0.0
        %4640 = vmatpush2.xpose.msra.mxu0 0.0
        %4641 = vmatprep.subr.mxu0 0.0
        %4642 = vmatpush2.xpose.msra.mxu0 0.0
        %4643 = vmatprep.subr.mxu0 0.0
        %4644 = vmatpush2.xpose.msra.mxu0 0.0
        %4645 = vmatprep.subr.mxu0 0.0
        %4646 = vmatpush2.xpose.msra.mxu0 0.0
        %4647 = vmatprep.subr.mxu0 0.0
        %4648 = vmatpush2.xpose.msra.mxu0 0.0
        %4649 = vmatprep.subr.mxu0 0.0
        %4650 = vmatpush2.xpose.msra.mxu0 0.0
        %4651 = vmatprep.subr.mxu0 0.0
        %4652 = vmatpush2.xpose.msra.mxu0 0.0
        %4653 = vmatprep.subr.mxu0 0.0
        %4654 = vmatpush2.xpose.msra.mxu0 0.0
        %4655 = vmatprep.subr.mxu0 0.0
        %4656 = vmatpush2.xpose.msra.mxu0 0.0
        %4657 = vmatprep.subr.mxu0 0.0
        %4658 = vmatpush2.xpose.msra.mxu0 0.0
        %4659 = vmatprep.subr.mxu0 0.0
        %4660 = vmatpush2.xpose.msra.mxu0 0.0
        %4661 = vmatprep.mubr.f32.mxu0 0.0
        %4662 = vmatmul.mubr.f32.gmra.mxu0 %v4577
        %v4663 = vpop.f32.mrf.mxu0
        %v4664 = vadd.f32 0.0, %v4663
        %v4665 = vpop.f32.mrf.mxu0
        %4666 = vmatprep.mubr.f32.mxu0 0.0
        %4667 = vmatmul.mubr.f32.gmra.mxu0 %v4579
        %v4668 = vpop.f32.mrf.mxu0
        %v4669 = vadd.f32 0.0, %v4668
        %v4670 = vpop.f32.mrf.mxu0
        %4671 = vmatprep.mubr.f32.mxu0 0.0
        %4672 = vmatmul.mubr.f32.gmra.mxu0 %v4581
        %v4673 = vpop.f32.mrf.mxu0
        %v4674 = vadd.f32 0.0, %v4673
        %v4675 = vpop.f32.mrf.mxu0
        %4676 = vmatprep.mubr.f32.mxu0 0.0
        %4677 = vmatmul.mubr.f32.gmra.mxu0 %v4583
        %v4678 = vpop.f32.mrf.mxu0
        %v4679 = vadd.f32 0.0, %v4678
        %v4680 = vpop.f32.mrf.mxu0
        %4681 = vmatprep.mubr.f32.mxu0 0.0
        %4682 = vmatmul.mubr.f32.gmra.mxu0 %v4585
        %v4683 = vpop.f32.mrf.mxu0
        %v4684 = vadd.f32 0.0, %v4683
        %v4685 = vpop.f32.mrf.mxu0
        %4686 = vmatprep.mubr.f32.mxu0 0.0
        %4687 = vmatmul.mubr.f32.gmra.mxu0 %v4587
        %v4688 = vpop.f32.mrf.mxu0
        %v4689 = vadd.f32 0.0, %v4688
        %v4690 = vpop.f32.mrf.mxu0
        %4691 = vmatprep.mubr.f32.mxu0 0.0
        %4692 = vmatmul.mubr.f32.gmra.mxu0 %v4589
        %v4693 = vpop.f32.mrf.mxu0
        %v4694 = vadd.f32 0.0, %v4693
        %v4695 = vpop.f32.mrf.mxu0
        %4696 = vmatprep.mubr.f32.mxu0 0.0
        %4697 = vmatmul.mubr.f32.gmra.mxu0 %v4591
        %v4698 = vpop.f32.mrf.mxu0
        %v4699 = vadd.f32 0.0, %v4698
        %v4700 = vpop.f32.mrf.mxu0
        %4701 = vdwg.mxu0
        %v4702 = vsel %vm1278, %v4664, -inf
        %4703 = vmax.xlane.f32.xlu0 %v4702
        %v4704 = vpop.xlane.xlu0 %4703
        %v4705 = vsel %vm1278, %v4669, -inf
        %4706 = vmax.xlane.f32.xlu0 %v4705
        %v4707 = vpop.xlane.xlu0 %4706
        %v4708 = vsel %vm1278, %v4674, -inf
        %4709 = vmax.xlane.f32.xlu0 %v4708
        %v4710 = vpop.xlane.xlu0 %4709
        %v4711 = vsel %vm1278, %v4679, -inf
        %4712 = vmax.xlane.f32.xlu0 %v4711
        %v4713 = vpop.xlane.xlu0 %4712
        %v4714 = vsel %vm1278, %v4684, -inf
        %4715 = vmax.xlane.f32.xlu0 %v4714
        %v4716 = vpop.xlane.xlu0 %4715
        %v4717 = vsel %vm1278, %v4689, -inf
        %4718 = vmax.xlane.f32.xlu0 %v4717
        %v4719 = vpop.xlane.xlu0 %4718
        %v4720 = vsel %vm1278, %v4694, -inf
        %4721 = vmax.xlane.f32.xlu0 %v4720
        %v4722 = vpop.xlane.xlu0 %4721
        %v4723 = vsel %vm1278, %v4699, -inf
        %4724 = vmax.xlane.f32.xlu0 %v4723
        %v4725 = vpop.xlane.xlu0 %4724
        %v4726 = vsub.f32 %v4664, %v4704
        %v4727 = vsub.f32 %v4669, %v4707
        %v4728 = vsub.f32 %v4674, %v4710
        %v4729 = vsub.f32 %v4679, %v4713
        %v4730 = vsub.f32 %v4684, %v4716
        %v4731 = vsub.f32 %v4689, %v4719
        %v4732 = vsub.f32 %v4694, %v4722
        %v4733 = vsub.f32 %v4699, %v4725
        %v4734 = vmul.f32 %v4726, 1.442695
        %v4735 = vpow.pop %v4734
        %v4736 = vmul.f32 %v4727, 1.442695
        %v4737 = vpow.pop %v4736
        %v4738 = vmul.f32 %v4728, 1.442695
        %v4739 = vpow.pop %v4738
        %v4740 = vmul.f32 %v4729, 1.442695
        %v4741 = vpow.pop %v4740
        %v4742 = vmul.f32 %v4730, 1.442695
        %v4743 = vpow.pop %v4742
        %v4744 = vmul.f32 %v4731, 1.442695
        %v4745 = vpow.pop %v4744
        %v4746 = vmul.f32 %v4732, 1.442695
        %v4747 = vpow.pop %v4746
        %v4748 = vmul.f32 %v4733, 1.442695
        %v4749 = vpow.pop %v4748
        %v4750 = vsel %vm1278, %v4735, 0.0
        %4751 = vadd.xlane.f32.xlu0 %v4750
        %v4752 = vpop.xlane.xlu0 %4751
        %v4753 = vsel %vm1278, %v4737, 0.0
        %4754 = vadd.xlane.f32.xlu0 %v4753
        %v4755 = vpop.xlane.xlu0 %4754
        %v4756 = vsel %vm1278, %v4739, 0.0
        %4757 = vadd.xlane.f32.xlu0 %v4756
        %v4758 = vpop.xlane.xlu0 %4757
        %v4759 = vsel %vm1278, %v4741, 0.0
        %4760 = vadd.xlane.f32.xlu0 %v4759
        %v4761 = vpop.xlane.xlu0 %4760
        %v4762 = vsel %vm1278, %v4743, 0.0
        %4763 = vadd.xlane.f32.xlu0 %v4762
        %v4764 = vpop.xlane.xlu0 %4763
        %v4765 = vsel %vm1278, %v4745, 0.0
        %4766 = vadd.xlane.f32.xlu0 %v4765
        %v4767 = vpop.xlane.xlu0 %4766
        %v4768 = vsel %vm1278, %v4747, 0.0
        %4769 = vadd.xlane.f32.xlu0 %v4768
        %v4770 = vpop.xlane.xlu0 %4769
        %v4771 = vsel %vm1278, %v4749, 0.0
        %4772 = vadd.xlane.f32.xlu0 %v4771
        %v4773 = vpop.xlane.xlu0 %4772
        %v4774 = vrcp.pop %v4752
        %v4775 = vmul.f32 %v4735, %v4774
        %v4776 = vrcp.pop %v4755
        %v4777 = vmul.f32 %v4737, %v4776
        %v4778 = vrcp.pop %v4758
        %v4779 = vmul.f32 %v4739, %v4778
        %v4780 = vrcp.pop %v4761
        %v4781 = vmul.f32 %v4741, %v4780
        %v4782 = vrcp.pop %v4764
        %v4783 = vmul.f32 %v4743, %v4782
        %v4784 = vrcp.pop %v4767
        %v4785 = vmul.f32 %v4745, %v4784
        %v4786 = vrcp.pop %v4770
        %v4787 = vmul.f32 %v4747, %v4786
        %v4788 = vrcp.pop %v4773
        %v4789 = vmul.f32 %v4749, %v4788
        %4790 = vrot.lane.b32.xlu0 %v3315, 104
        %v4791 = vpop.permute.xlu0 %4790
        %4792 = vrot.lane.b32.xlu0 %v3321, 104
        %v4793 = vpop.permute.xlu0 %4792
        %v4797 = vsel %vm1278, %v4775, 0
        %v4800 = vsel %vm1278, %v4777, 0
        %v4803 = vsel %vm1278, %v4779, 0
        %v4806 = vsel %vm1278, %v4781, 0
        %v4809 = vsel %vm1278, %v4783, 0
        %v4812 = vsel %vm1278, %v4785, 0
        %v4815 = vsel %vm1278, %v4787, 0
        %v4818 = vsel %vm1278, %v4789, 0
        %4820 = vmatprep.subr.mxu0 0.0
        %4821 = vmatpush1.msra.mxu0 0.0
        %4822 = vmatprep.subr.mxu0 0.0
        %4823 = vmatpush1.msra.mxu0 0.0
        %4824 = vmatprep.subr.mxu0 0.0
        %4825 = vmatpush1.msra.mxu0 0.0
        %4826 = vmatprep.subr.mxu0 0.0
        %4827 = vmatpush1.msra.mxu0 0.0
        %4828 = vmatprep.subr.mxu0 0.0
        %4829 = vmatpush1.msra.mxu0 0.0
        %4830 = vmatprep.subr.mxu0 0.0
        %4831 = vmatpush1.msra.mxu0 0.0
        %4832 = vmatprep.subr.mxu0 0.0
        %4833 = vmatpush1.msra.mxu0 0.0
        %4834 = vmatprep.subr.mxu0 0.0
        %4835 = vmatpush1.msra.mxu0 0.0
        %4836 = vmatprep.subr.mxu0 0.0
        %4837 = vmatpush1.msra.mxu0 0.0
        %4838 = vmatprep.subr.mxu0 0.0
        %4839 = vmatpush1.msra.mxu0 0.0
        %4840 = vmatprep.subr.mxu0 0.0
        %4841 = vmatpush1.msra.mxu0 0.0
        %4842 = vmatprep.subr.mxu0 0.0
        %4843 = vmatpush1.msra.mxu0 0.0
        %4844 = vmatprep.subr.mxu0 0.0
        %4845 = vmatpush1.msra.mxu0 0.0
        %4846 = vmatprep.subr.mxu0 0.0
        %4847 = vmatpush1.msra.mxu0 0.0
        %4848 = vmatprep.subr.mxu0 0.0
        %4849 = vmatpush1.msra.mxu0 %v4793
        %4850 = vmatprep.subr.mxu0 0.0
        %4851 = vmatpush1.msra.mxu0 %v4791
        %4852 = vmatprep.subr.mxu0 0.0
        %4853 = vmatpush2.msra.mxu0 0.0
        %4854 = vmatprep.subr.mxu0 0.0
        %4855 = vmatpush2.msra.mxu0 0.0
        %4856 = vmatprep.subr.mxu0 0.0
        %4857 = vmatpush2.msra.mxu0 0.0
        %4858 = vmatprep.subr.mxu0 0.0
        %4859 = vmatpush2.msra.mxu0 0.0
        %4860 = vmatprep.subr.mxu0 0.0
        %4861 = vmatpush2.msra.mxu0 0.0
        %4862 = vmatprep.subr.mxu0 0.0
        %4863 = vmatpush2.msra.mxu0 0.0
        %4864 = vmatprep.subr.mxu0 0.0
        %4865 = vmatpush2.msra.mxu0 0.0
        %4866 = vmatprep.subr.mxu0 0.0
        %4867 = vmatpush2.msra.mxu0 0.0
        %4868 = vmatprep.subr.mxu0 0.0
        %4869 = vmatpush2.msra.mxu0 0.0
        %4870 = vmatprep.subr.mxu0 0.0
        %4871 = vmatpush2.msra.mxu0 0.0
        %4872 = vmatprep.subr.mxu0 0.0
        %4873 = vmatpush2.msra.mxu0 0.0
        %4874 = vmatprep.subr.mxu0 0.0
        %4875 = vmatpush2.msra.mxu0 0.0
        %4876 = vmatprep.subr.mxu0 0.0
        %4877 = vmatpush2.msra.mxu0 0.0
        %4878 = vmatprep.subr.mxu0 0.0
        %4879 = vmatpush2.msra.mxu0 0.0
        %4880 = vmatprep.subr.mxu0 0.0
        %4881 = vmatpush2.msra.mxu0 0.0
        %4882 = vmatprep.subr.mxu0 0.0
        %4883 = vmatpush2.msra.mxu0 0.0
        %4884 = vmatprep.mubr.f32.mxu0 0.0
        %4885 = vmatmul.mubr.f32.gmra.mxu0 %v4797
        %v4886 = vpop.f32.mrf.mxu0
        %v4887 = vadd.f32 0.0, %v4886
        %v4888 = vpop.f32.mrf.mxu0
        %4889 = vmatprep.mubr.f32.mxu0 0.0
        %4890 = vmatmul.mubr.f32.gmra.mxu0 %v4800
        %v4891 = vpop.f32.mrf.mxu0
        %v4892 = vadd.f32 0.0, %v4891
        %v4893 = vpop.f32.mrf.mxu0
        %4894 = vmatprep.mubr.f32.mxu0 0.0
        %4895 = vmatmul.mubr.f32.gmra.mxu0 %v4803
        %v4896 = vpop.f32.mrf.mxu0
        %v4897 = vadd.f32 0.0, %v4896
        %v4898 = vpop.f32.mrf.mxu0
        %4899 = vmatprep.mubr.f32.mxu0 0.0
        %4900 = vmatmul.mubr.f32.gmra.mxu0 %v4806
        %v4901 = vpop.f32.mrf.mxu0
        %v4902 = vadd.f32 0.0, %v4901
        %v4903 = vpop.f32.mrf.mxu0
        %4904 = vmatprep.mubr.f32.mxu0 0.0
        %4905 = vmatmul.mubr.f32.gmra.mxu0 %v4809
        %v4906 = vpop.f32.mrf.mxu0
        %v4907 = vadd.f32 0.0, %v4906
        %v4908 = vpop.f32.mrf.mxu0
        %4909 = vmatprep.mubr.f32.mxu0 0.0
        %4910 = vmatmul.mubr.f32.gmra.mxu0 %v4812
        %v4911 = vpop.f32.mrf.mxu0
        %v4912 = vadd.f32 0.0, %v4911
        %v4913 = vpop.f32.mrf.mxu0
        %4914 = vmatprep.mubr.f32.mxu0 0.0
        %4915 = vmatmul.mubr.f32.gmra.mxu0 %v4815
        %v4916 = vpop.f32.mrf.mxu0
        %v4917 = vadd.f32 0.0, %v4916
        %v4918 = vpop.f32.mrf.mxu0
        %4919 = vmatprep.mubr.f32.mxu0 0.0
        %4920 = vmatmul.mubr.f32.gmra.mxu0 %v4818
        %v4921 = vpop.f32.mrf.mxu0
        %v4922 = vadd.f32 0.0, %v4921
        %v4923 = vpop.f32.mrf.mxu0
        %4924 = vdwg.mxu0
        %v4925 = vld [vmem:[#allocation2] sm:$0xff]
        %v4926 = vld [vmem:[#allocation2 + $0x8] sm:$0xff]
        %v4927 = vld [vmem:[#allocation2 + $0x10] sm:$0xff]
        %v4928 = vld [vmem:[#allocation2 + $0x18] sm:$0xff]
        %v4929 = vld [vmem:[#allocation2 + $0x20] sm:$0xff]
        %v4930 = vld [vmem:[#allocation2 + $0x28] sm:$0xff]
        %v4931 = vld [vmem:[#allocation2 + $0x30] sm:$0xff]
        %v4932 = vld [vmem:[#allocation2 + $0x38] sm:$0xff]
        %4941 = vrot.lane.b32.xlu0 %v4887, 24
        %v4942 = vpop.permute.xlu0 %4941
        %4943 = vrot.lane.b32.xlu0 %v4892, 24
        %v4944 = vpop.permute.xlu0 %4943
        %4945 = vrot.lane.b32.xlu0 %v4897, 24
        %v4946 = vpop.permute.xlu0 %4945
        %4947 = vrot.lane.b32.xlu0 %v4902, 24
        %v4948 = vpop.permute.xlu0 %4947
        %4949 = vrot.lane.b32.xlu0 %v4907, 24
        %v4950 = vpop.permute.xlu0 %4949
        %4951 = vrot.lane.b32.xlu0 %v4912, 24
        %v4952 = vpop.permute.xlu0 %4951
        %4953 = vrot.lane.b32.xlu0 %v4917, 24
        %v4954 = vpop.permute.xlu0 %4953
        %4955 = vrot.lane.b32.xlu0 %v4922, 24
        %v4956 = vpop.permute.xlu0 %4955
        %v4965 = vadd.f32 %v4925, %v4942
        %v4966 = vadd.f32 %v4926, %v4944
        %v4967 = vadd.f32 %v4927, %v4946
        %v4968 = vadd.f32 %v4928, %v4948
        %v4969 = vadd.f32 %v4929, %v4950
        %v4970 = vadd.f32 %v4930, %v4952
        %v4971 = vadd.f32 %v4931, %v4954
        %v4972 = vadd.f32 %v4932, %v4956
        %4973 = vst.msk [vmem:[#allocation2] sm:$0xff] %vm2788, %v4965
        %4974 = vst.msk [vmem:[#allocation2 + $0x8] sm:$0xff] %vm2788, %v4966
        %4975 = vst.msk [vmem:[#allocation2 + $0x10] sm:$0xff] %vm2788, %v4967
        %4976 = vst.msk [vmem:[#allocation2 + $0x18] sm:$0xff] %vm2788, %v4968
        %4977 = vst.msk [vmem:[#allocation2 + $0x20] sm:$0xff] %vm2788, %v4969
        %4978 = vst.msk [vmem:[#allocation2 + $0x28] sm:$0xff] %vm2788, %v4970
        %4979 = vst.msk [vmem:[#allocation2 + $0x30] sm:$0xff] %vm2788, %v4971
        %4980 = vst.msk [vmem:[#allocation2 + $0x38] sm:$0xff] %vm2788, %v4972
        %v4981 = vld [vmem:[#allocation2] sm:$0xff]
        %v4982 = vld [vmem:[#allocation2 + $0x8] sm:$0xff]
        %v4983 = vld [vmem:[#allocation2 + $0x10] sm:$0xff]
        %v4984 = vld [vmem:[#allocation2 + $0x18] sm:$0xff]
        %v4985 = vld [vmem:[#allocation2 + $0x20] sm:$0xff]
        %v4986 = vld [vmem:[#allocation2 + $0x28] sm:$0xff]
        %v4987 = vld [vmem:[#allocation2 + $0x30] sm:$0xff]
        %v4988 = vld [vmem:[#allocation2 + $0x38] sm:$0xff]
        %v4989 = vld [vmem:[#allocation17] sm:$0xff]
        %v4990 = vld [vmem:[#allocation17 + $0x8] sm:$0xff]
        %v4991 = vld [vmem:[#allocation17 + $0x10] sm:$0xff]
        %v4992 = vld [vmem:[#allocation17 + $0x18] sm:$0xff]
        %v4993 = vld [vmem:[#allocation17 + $0x20] sm:$0xff]
        %v4994 = vld [vmem:[#allocation17 + $0x28] sm:$0xff]
        %v4995 = vld [vmem:[#allocation17 + $0x30] sm:$0xff]
        %v4996 = vld [vmem:[#allocation17 + $0x38] sm:$0xff]
        %v4997 = vld [vmem:[#allocation17 + $0x40] sm:$0xff]
        %v4998 = vld [vmem:[#allocation17 + $0x48] sm:$0xff]
        %v4999 = vld [vmem:[#allocation17 + $0x50] sm:$0xff]
        %v5000 = vld [vmem:[#allocation17 + $0x58] sm:$0xff]
        %v5001 = vld [vmem:[#allocation17 + $0x60] sm:$0xff]
        %v5002 = vld [vmem:[#allocation17 + $0x68] sm:$0xff]
        %v5003 = vld [vmem:[#allocation17 + $0x70] sm:$0xff]
        %v5004 = vld [vmem:[#allocation17 + $0x78] sm:$0xff]
        %v5005 = vld [vmem:[%s13] sm:$0x1]
        %v5007 = vlaneseq
        %v5008 = vshrl.u32 %v5007, 7
        %v5009 = vsub.s32 0, %v5008
        %v5010 = vrot.slane %v5005, %v5009
        %5012 = vmatprep.subr.mxu0 0.0
        %5013 = vmatpush1.msra.mxu0 %v5004
        %5014 = vmatprep.subr.mxu0 0.0
        %5015 = vmatpush1.msra.mxu0 %v5003
        %5016 = vmatprep.subr.mxu0 0.0
        %5017 = vmatpush1.msra.mxu0 %v5002
        %5018 = vmatprep.subr.mxu0 0.0
        %5019 = vmatpush1.msra.mxu0 %v5001
        %5020 = vmatprep.subr.mxu0 0.0
        %5021 = vmatpush1.msra.mxu0 %v5000
        %5022 = vmatprep.subr.mxu0 0.0
        %5023 = vmatpush1.msra.mxu0 %v4999
        %5024 = vmatprep.subr.mxu0 0.0
        %5025 = vmatpush1.msra.mxu0 %v4998
        %5026 = vmatprep.subr.mxu0 0.0
        %5027 = vmatpush1.msra.mxu0 %v4997
        %5028 = vmatprep.subr.mxu0 0.0
        %5029 = vmatpush1.msra.mxu0 %v4996
        %5030 = vmatprep.subr.mxu0 0.0
        %5031 = vmatpush1.msra.mxu0 %v4995
        %5032 = vmatprep.subr.mxu0 0.0
        %5033 = vmatpush1.msra.mxu0 %v4994
        %5034 = vmatprep.subr.mxu0 0.0
        %5035 = vmatpush1.msra.mxu0 %v4993
        %5036 = vmatprep.subr.mxu0 0.0
        %5037 = vmatpush1.msra.mxu0 %v4992
        %5038 = vmatprep.subr.mxu0 0.0
        %5039 = vmatpush1.msra.mxu0 %v4991
        %5040 = vmatprep.subr.mxu0 0.0
        %5041 = vmatpush1.msra.mxu0 %v4990
        %5042 = vmatprep.subr.mxu0 0.0
        %5043 = vmatpush1.msra.mxu0 %v4989
        %5044 = vmatprep.subr.mxu0 0.0
        %5045 = vmatpush2.msra.mxu0 0.0
        %5046 = vmatprep.subr.mxu0 0.0
        %5047 = vmatpush2.msra.mxu0 0.0
        %5048 = vmatprep.subr.mxu0 0.0
        %5049 = vmatpush2.msra.mxu0 0.0
        %5050 = vmatprep.subr.mxu0 0.0
        %5051 = vmatpush2.msra.mxu0 0.0
        %5052 = vmatprep.subr.mxu0 0.0
        %5053 = vmatpush2.msra.mxu0 0.0
        %5054 = vmatprep.subr.mxu0 0.0
        %5055 = vmatpush2.msra.mxu0 0.0
        %5056 = vmatprep.subr.mxu0 0.0
        %5057 = vmatpush2.msra.mxu0 0.0
        %5058 = vmatprep.subr.mxu0 0.0
        %5059 = vmatpush2.msra.mxu0 0.0
        %5060 = vmatprep.subr.mxu0 0.0
        %5061 = vmatpush2.msra.mxu0 0.0
        %5062 = vmatprep.subr.mxu0 0.0
        %5063 = vmatpush2.msra.mxu0 0.0
        %5064 = vmatprep.subr.mxu0 0.0
        %5065 = vmatpush2.msra.mxu0 0.0
        %5066 = vmatprep.subr.mxu0 0.0
        %5067 = vmatpush2.msra.mxu0 0.0
        %5068 = vmatprep.subr.mxu0 0.0
        %5069 = vmatpush2.msra.mxu0 0.0
        %5070 = vmatprep.subr.mxu0 0.0
        %5071 = vmatpush2.msra.mxu0 0.0
        %5072 = vmatprep.subr.mxu0 0.0
        %5073 = vmatpush2.msra.mxu0 0.0
        %5074 = vmatprep.subr.mxu0 0.0
        %5075 = vmatpush2.msra.mxu0 0.0
        %5076 = vmatprep.mubr.f32.mxu0 0.0
        %5077 = vmatmul.mubr.f32.gmra.mxu0 %v4981
        %v5078 = vpop.f32.mrf.mxu0
        %v5079 = vadd.f32 %v5010, %v5078
        %v5080 = vpop.f32.mrf.mxu0
        %5081 = vmatprep.mubr.f32.mxu0 0.0
        %5082 = vmatmul.mubr.f32.gmra.mxu0 %v4982
        %v5083 = vpop.f32.mrf.mxu0
        %v5084 = vadd.f32 %v5010, %v5083
        %v5085 = vpop.f32.mrf.mxu0
        %5086 = vmatprep.mubr.f32.mxu0 0.0
        %5087 = vmatmul.mubr.f32.gmra.mxu0 %v4983
        %v5088 = vpop.f32.mrf.mxu0
        %v5089 = vadd.f32 %v5010, %v5088
        %v5090 = vpop.f32.mrf.mxu0
        %5091 = vmatprep.mubr.f32.mxu0 0.0
        %5092 = vmatmul.mubr.f32.gmra.mxu0 %v4984
        %v5093 = vpop.f32.mrf.mxu0
        %v5094 = vadd.f32 %v5010, %v5093
        %v5095 = vpop.f32.mrf.mxu0
        %5096 = vmatprep.mubr.f32.mxu0 0.0
        %5097 = vmatmul.mubr.f32.gmra.mxu0 %v4985
        %v5098 = vpop.f32.mrf.mxu0
        %v5099 = vadd.f32 %v5010, %v5098
        %v5100 = vpop.f32.mrf.mxu0
        %5101 = vmatprep.mubr.f32.mxu0 0.0
        %5102 = vmatmul.mubr.f32.gmra.mxu0 %v4986
        %v5103 = vpop.f32.mrf.mxu0
        %v5104 = vadd.f32 %v5010, %v5103
        %v5105 = vpop.f32.mrf.mxu0
        %5106 = vmatprep.mubr.f32.mxu0 0.0
        %5107 = vmatmul.mubr.f32.gmra.mxu0 %v4987
        %v5108 = vpop.f32.mrf.mxu0
        %v5109 = vadd.f32 %v5010, %v5108
        %v5110 = vpop.f32.mrf.mxu0
        %5111 = vmatprep.mubr.f32.mxu0 0.0
        %5112 = vmatmul.mubr.f32.gmra.mxu0 %v4988
        %v5113 = vpop.f32.mrf.mxu0
        %v5114 = vadd.f32 %v5010, %v5113
        %v5115 = vpop.f32.mrf.mxu0
        %5116 = vdwg.mxu0
        %5117 = vst [vmem:[%s724] sm:$0xff] %v5079
        %5118 = vst [vmem:[%s724 + $0x8] sm:$0xff] %v5084
        %5119 = vst [vmem:[%s724 + $0x10] sm:$0xff] %v5089
        %5120 = vst [vmem:[%s724 + $0x18] sm:$0xff] %v5094
        %5121 = vst [vmem:[%s724 + $0x20] sm:$0xff] %v5099
        %5122 = vst [vmem:[%s724 + $0x28] sm:$0xff] %v5104
        %5123 = vst [vmem:[%s724 + $0x30] sm:$0xff] %v5109
        %5124 = vst [vmem:[%s724 + $0x38] sm:$0xff] %v5114
        %s5125 = sand.u32 %s431, 1
        %s5126 = scalar_lea.sflag [#allocation5], %s5125
        %s5127 = sand.u32 %s431, 1
        %s5128 = smul.addr %s5127, 64
        %s5129 = scalar_lea.vmem [#allocation20], %s5128
        // Predicated region
        $region133: #{tpu_custom_call.1} parent=91 // pred_check
          %p5130 = pneg %p441
        $region134: #{tpu_custom_call.1} parent=91 // pred_check_branch
          %5132 = sbr.rel (%p5130) target = $region136
        $region135: #{tpu_custom_call.1} parent=91 // pred_region
          %s5133 = smul.u32 8, %s40
          %s5135 = ssub.s32 1024, 1024
          %5136 = vsyncadd %s5126, %s5135
          %s5137 = smul.addr %s5133, 128
          %s5138 = scalar_lea.hbm %s18, %s5137
          %s5139 = sshll.u32 %s5129, 4
          %s5140 = int_to_ptr.vmem [resolvable:$true] %s5139
          %5145 = dma.vmem_to_hbm [thread:$0]  %s5140, 1024, %s5138, %s5126, 128, 128, 8
        $region136: #{tpu_custom_call.1} parent=91 // pred_fallthru
          _
      $region92: #{tpu_custom_call.1} parent=5 // pred_fallthru
        _
      %p5146 = scmp.le.s32.totalorder 2, %s35
      // Predicated region
      $region137: #{tpu_custom_call.1} parent=5 // pred_check
        %p5147 = pneg %p5146
      $region138: #{tpu_custom_call.1} parent=5 // pred_check_branch
        %5149 = sbr.rel (%p5147) target = $region140
      $region139: #{tpu_custom_call.1} parent=5 // pred_region
        %s5150 = ssub.s32 %s35, 2
        // Predicated region
        $region141: #{tpu_custom_call.1} parent=139 // pred_check
          %p5151 = pneg %p447
        $region142: #{tpu_custom_call.1} parent=139 // pred_check_branch
          %5153 = sbr.rel (%p5151) target = $region144
        $region143: #{tpu_custom_call.1} parent=139 // pred_region
          %s5154 = sand.u32 %s432, 1
          %s5155 = scalar_lea.sflag [#allocation5], %s5154
          %s5156 = sand.u32 %s432, 1
          %s5157 = smul.addr %s5156, 64
          %s5158 = scalar_lea.vmem [#allocation20], %s5157
          %5159 = dma.done %s5155, 1024
        $region144: #{tpu_custom_call.1} parent=139 // pred_fallthru
          _
      $region140: #{tpu_custom_call.1} parent=5 // pred_fallthru
        _
    $region6: #{tpu_custom_call.1} parent=1 // loop_footer
      %s39 = sadd.s32 1, %s35
    $region7: #{tpu_custom_call.1} parent=1 // loop_footer_branch
      %34 = sbr.rel target = $region3
    $region8: #{tpu_custom_call.1} parent=1 // loop_exit
      _
    %5160 = vsyncpa [#allocation4], 1
    %s5161 = scalar_lea.sflag [#allocation4], 1
    %5162 = vsyncpa %s5161, 1
    %5163 = vsyncpa [#allocation7], 1
    %5164 = vsyncpa [#allocation10], 1
    %5165 = vsyncpa [#allocation13], 1
    %5166 = vsyncpa [#allocation16], 1
    %5167 = vsyncpa [#allocation19], 1
    %5168 = vsyncpa [#allocation5], 1
    %s5169 = scalar_lea.sflag [#allocation5], 1
    %5170 = vsyncpa %s5169, 1

</llo_original>
